<compile_context>
chip_gen: v5e
topology: v5e:2x2
jax: 0.10.0
libtpu: 0.0.40
codegen_flags: <defaults>
</compile_context>

<pallas_src>
import functools

import jax
import jax.numpy as jnp
from jax import lax
from jax.experimental import pallas as pl
from jax.experimental.pallas import tpu as pltpu

# Fixed module hyper-parameters (from the PyTorch spec).
K1, S1, P1 = 11, 4, 2            # conv1 kernel / stride / padding
K2, P2 = 5, 2                    # conv2 kernel / padding (stride 1)
C_IN, C1_OUT, C2_OUT = 3, 48, 128
C1_PAD = 128                     # conv1 Cout padded 48 -> 128 (lane dense)
LRN_SIZE, LRN_ALPHA, LRN_BETA, LRN_K = 5, 1e-4, 0.75, 2.0


def _fused_kernel(xcol_ref, w1_ref, b1_ref, wb_ref, b2_ref, o_ref, *,
                  nb_blk, hw_pad, n_hw, wo, po):
    """conv1 -> ReLU -> LRN -> maxpool -> conv2 -> ReLU, all in VMEM.

    xcol_ref: (NB, hw_pad, k_pad)  lane-dense im2col of the conv1 input,
              xcol[b, p*wo+q, i*K1*C_IN + j*C_IN + c] = x_pad[b, 4p+i, 4q+j, c]
              (rows >= n_hw and cols >= 363 are zero padding)
    w1_ref  : (k_pad, 128)         conv1 weights, Cout zero-padded 48->128
    b1_ref  : (1, 128)
    wb_ref  : (9*128, 9*128)       dense conv2 weight matrix
    b2_ref  : (1, 9*128)
    o_ref   : (NB, 9*128)          output, lane-flattened (p, q, co)
    """
    k_pad = w1_ref.shape[0]

    # ---------- conv1 (11x11 / stride 4) as one MXU matmul -------------------
    lhs = xcol_ref[...].reshape(nb_blk * hw_pad, k_pad)      # free collapse
    x1 = jnp.dot(lhs, w1_ref[...], preferred_element_type=jnp.float32)
    x1 = jnp.maximum(x1 + b1_ref[...], 0.0)                  # (NB*hw_pad, 128)
    # Invariant: channels 48..127 are exactly zero here (zero weights + zero
    # bias + ReLU), which makes the circular LRN roll below exact.

    # ---------- LRN(5, k=2) across channels (lane axis), whole tensor --------
    sq = x1 * x1
    s = sq
    for shift in (1, 2, C1_PAD - 2, C1_PAD - 1):             # +-1, +-2 neighbours
        s = s + pltpu.roll(sq, shift=shift, axis=1)
    base = LRN_K + (LRN_ALPHA / LRN_SIZE) * s
    lrn = x1 * jnp.exp(-LRN_BETA * jnp.log(base))            # (NB*hw_pad, 128)

    # ---------- 3x3 / stride-2 max pool, vectorized over batch * rows --------
    x3 = lrn.reshape(nb_blk, hw_pad, C1_PAD)                 # (NB, 56, 128)
    # column max over q..q+2 (only q <= wo-3 is consumed, so no row wrap)
    cm = jnp.maximum(jnp.maximum(x3[:, 0:n_hw - 2, :], x3[:, 1:n_hw - 1, :]),
                     x3[:, 2:n_hw, :])
    # row max over p..p+2
    rm = jnp.maximum(jnp.maximum(cm[:, 0:n_hw - 2 - 2 * wo, :],
                                 cm[:, wo:n_hw - 2 - wo, :]),
                     cm[:, 2 * wo:n_hw - 2, :])
    # gather the 9 pooled positions -> lane-flattened (NB, 9*128) conv2 LHS
    parts = [rm[:, (2 * u) * wo + 2 * v, :] for u in range(po) for v in range(po)]
    pool_flat = jnp.concatenate(parts, axis=-1)              # (NB, 1152)

    # ---------- conv2: one dense MXU matmul + bias + ReLU ---------------------
    out = jnp.dot(pool_flat, wb_ref[...], preferred_element_type=jnp.float32)
    o_ref[...] = jnp.maximum(out + b2_ref[...], 0.0)


def init_params(key):
    k1, k2, k3, k4 = jax.random.split(key, 4)
    return {
        "conv1_w": jax.random.normal(k1, (C1_OUT, C_IN, K1, K1), jnp.float32) * 0.02,
        "conv1_b": jax.random.normal(k2, (C1_OUT,), jnp.float32) * 0.02,
        "conv2_w": jax.random.normal(k3, (C2_OUT, C1_OUT, K2, K2), jnp.float32) * 0.02,
        "conv2_b": jax.random.normal(k4, (C2_OUT,), jnp.float32) * 0.02,
    }


def prepare_params(params, pooled_hw=3):
    """One-time host-side weight prep (pad / transpose / collapse conv2)."""
    po = pooled_hw
    k_raw = K1 * K1 * C_IN                                  # 363
    k_pad = -(-k_raw // 128) * 128                          # 384
    # conv1: (Cout, Cin, kh, kw) -> (kh*kw*Cin, 128), rows ordered (i, j, c).
    w1 = jnp.transpose(params["conv1_w"], (2, 3, 1, 0)).reshape(k_raw, C1_OUT)
    w1 = jnp.pad(w1, ((0, k_pad - k_raw), (0, C1_PAD - C1_OUT)))
    b1 = jnp.pad(params["conv1_b"], (0, C1_PAD - C1_OUT)).reshape(1, C1_PAD)

    # conv2: with a 3x3 pooled map and 5x5/pad-2 taps, every output position
    # sees the whole map, so conv2 == pool_flat @ WB with
    #   WB[(u*3+v)*128 + ci, (p*3+q)*128 + co] = w2[co, ci, u-p+2, v-q+2].
    w2 = jnp.pad(params["conv2_w"], ((0, 0), (0, C1_PAD - C1_OUT), (0, 0), (0, 0)))
    wt = jnp.transpose(w2, (1, 2, 3, 0))                    # (ci, i, j, co)
    idx = jnp.arange(po)[:, None] - jnp.arange(po)[None, :] + P2   # (u, p) -> i
    wsel = wt[:, idx, :, :]                                 # (ci, u, p, j, co)
    wsel = wsel[:, :, :, idx, :]                            # (ci, u, p, v, q, co)
    wb = jnp.transpose(wsel, (1, 3, 0, 2, 4, 5)).reshape(po * po * C1_PAD,
                                                         po * po * C2_OUT)
    b2 = jnp.tile(params["conv2_b"], po * po).reshape(1, po * po * C2_OUT)
    return {"w1": w1, "b1": b1, "wb": wb, "b2": b2}


def _pick_batch_block(nb):
    for cand in (32, 16, 8):
        if nb % cand == 0:
            return cand
    return nb   # small batch: single grid step (block == full array)


def alexnet1_forward(prep, x):
    """x: (N, 3, H, W) float32 NCHW -> (N, 128, 3, 3) NCHW (PyTorch layout)."""
    nb, cin, h, w = x.shape
    assert cin == C_IN
    ho = (h + 2 * P1 - K1) // S1 + 1
    wo = (w + 2 * P1 - K1) // S1 + 1
    po_h = (ho - 3) // 2 + 1
    po_w = (wo - 3) // 2 + 1
    # Specialised to the 3x3 pooled map this module produces for 31x31 inputs
    # (then conv2's 5x5/pad-2 window covers the whole map -> one matmul).
    assert po_h == 3 and po_w == 3, "demo kernel specialised to 31x31 inputs"
    po = po_h

    # Lane-dense im2col for conv1: (nb, ho*wo, 363) padded to (nb, 56, 384).
    xh = jnp.transpose(x, (0, 2, 3, 1))
    xh = jnp.pad(xh, ((0, 0), (P1, P1), (P1, P1), (0, 0)))
    cols = []
    for i in range(K1):
        for j in range(K1):
            cols.append(lax.slice(
                xh, (0, i, j, 0),
                (nb, i + S1 * (ho - 1) + 1, j + S1 * (wo - 1) + 1, C_IN),
                (1, S1, S1, 1)))                     # (nb, ho, wo, 3)
    xcol = jnp.concatenate(cols, axis=-1)            # (nb, ho, wo, 363)
    n_hw = ho * wo
    hw_pad = -(-n_hw // 8) * 8                       # 49 -> 56
    k_raw = K1 * K1 * C_IN
    k_pad = prep["w1"].shape[0]                      # 384
    xcol = xcol.reshape(nb, n_hw, k_raw)
    xcol = jnp.pad(xcol, ((0, 0), (0, hw_pad - n_hw), (0, k_pad - k_raw)))

    nb_blk = _pick_batch_block(nb)
    n_out = po * po * C2_OUT
    kernel = functools.partial(_fused_kernel, nb_blk=nb_blk, hw_pad=hw_pad,
                               n_hw=n_hw, wo=wo, po=po)
    out_flat = pl.pallas_call(
        kernel,
        out_shape=jax.ShapeDtypeStruct((nb, n_out), jnp.float32),
        grid_spec=pltpu.PrefetchScalarGridSpec(
            num_scalar_prefetch=0,
            grid=(nb // nb_blk,),
            in_specs=[
                pl.BlockSpec((nb_blk, hw_pad, k_pad), lambda b: (b, 0, 0)),
                pl.BlockSpec((k_pad, C1_PAD), lambda b: (0, 0)),
                pl.BlockSpec((1, C1_PAD), lambda b: (0, 0)),
                pl.BlockSpec((po * po * C1_PAD, n_out), lambda b: (0, 0)),
                pl.BlockSpec((1, n_out), lambda b: (0, 0)),
            ],
            out_specs=pl.BlockSpec((nb_blk, n_out), lambda b: (b, 0)),
        ),
        compiler_params=pltpu.CompilerParams(
            dimension_semantics=("parallel",),
            vmem_limit_bytes=32 * 1024 * 1024,
        ),
    )(xcol, prep["w1"], prep["b1"], prep["wb"], prep["b2"])

    out = out_flat.reshape(nb, po, po, C2_OUT)
    return jnp.transpose(out, (0, 3, 1, 2))


def reference_forward(params, x):
    """Pure-XLA reference of the PyTorch module (numerical self-check)."""
    y = lax.conv_general_dilated(
        x, params["conv1_w"], (S1, S1), ((P1, P1), (P1, P1)),
        dimension_numbers=("NCHW", "OIHW", "NCHW"),
        precision=lax.Precision.HIGHEST)
    y = jnp.maximum(y + params["conv1_b"][None, :, None, None], 0.0)
    c = y.shape[1]
    sq = jnp.pad(y * y, ((0, 0), (LRN_SIZE // 2, LRN_SIZE // 2), (0, 0), (0, 0)))
    s = sum(sq[:, d:d + c] for d in range(LRN_SIZE))
    y = y / (LRN_K + (LRN_ALPHA / LRN_SIZE) * s) ** LRN_BETA
    y = lax.reduce_window(y, -jnp.inf, lax.max,
                          (1, 1, 3, 3), (1, 1, 2, 2), "VALID")
    y = lax.conv_general_dilated(
        y, params["conv2_w"], (1, 1), ((P2, P2), (P2, P2)),
        dimension_numbers=("NCHW", "OIHW", "NCHW"),
        precision=lax.Precision.HIGHEST)
    return jnp.maximum(y + params["conv2_b"][None, :, None, None], 0.0)


if __name__ == "__main__":
    key = jax.random.PRNGKey(0)
    pkey, xkey = jax.random.split(key)
    params = init_params(pkey)
    prep = prepare_params(params)          # one-time weight prep (outside jit)

    # 31x31 input: conv1 -> 7x7, pool -> 3x3, conv2 -> 3x3
    x = jax.random.normal(xkey, (2, C_IN, 31, 31), jnp.float32)

    fwd = jax.jit(alexnet1_forward)
    out = jax.block_until_ready(fwd(prep, x))
    assert out.shape == (2, C2_OUT, 3, 3), out.shape
    assert out.dtype == jnp.float32

    ref = jax.block_until_ready(reference_forward(params, x))
    max_err = float(jnp.max(jnp.abs(out - ref)))
    # f32 MXU matmuls (multi-pass emulation) keep this ~1e-5; small slack for
    # hardware paths that lower f32 dots at reduced precision.
    assert max_err < 5e-3, f"mismatch vs reference: {max_err}"

    print("KERNEL_OK")
</pallas_src>

<mosaic_0001>
module attributes {stable_mosaic.version = 11 : i64} {
  func.func @_fused_kernel(%arg0: i32, %arg1: memref<2x56x384xf32, #tpu.memory_space<vmem>>, %arg2: memref<384x128xf32, #tpu.memory_space<vmem>>, %arg3: memref<1x128xf32, #tpu.memory_space<vmem>>, %arg4: memref<1152x1152xf32, #tpu.memory_space<vmem>>, %arg5: memref<1x1152xf32, #tpu.memory_space<vmem>>, %arg6: memref<2x1152xf32, #tpu.memory_space<vmem>>) attributes {dimension_semantics = [#tpu.dimension_semantics<parallel>], iteration_bounds = array<i64: 1>, scalar_prefetch = 0 : i64, scratch_operands = 0 : i64, tpu.core_type = #tpu.core_type<tc>, window_params = [{transform_indices = @transform_0, window_bounds = array<i64: 2, 56, 384>}, {pipeline_mode = #tpu.pipeline_mode<synchronous>, transform_indices = @transform_1, window_bounds = array<i64: 384, 128>}, {pipeline_mode = #tpu.pipeline_mode<synchronous>, transform_indices = @transform_2, window_bounds = array<i64: 1, 128>}, {pipeline_mode = #tpu.pipeline_mode<synchronous>, transform_indices = @transform_3, window_bounds = array<i64: 1152, 1152>}, {pipeline_mode = #tpu.pipeline_mode<synchronous>, transform_indices = @transform_4, window_bounds = array<i64: 1, 1152>}, {transform_indices = @transform_5, window_bounds = array<i64: 2, 1152>}]} {
    %c0 = arith.constant 0 : index
    %c0_0 = arith.constant 0 : index
    %c0_1 = arith.constant 0 : index
    %0 = vector.load %arg1[%c0, %c0_0, %c0_1] : memref<2x56x384xf32, #tpu.memory_space<vmem>>, vector<2x56x384xf32>
    %1 = vector.shape_cast %0 : vector<2x56x384xf32> to vector<112x384xf32>
    %c0_2 = arith.constant 0 : index
    %c0_3 = arith.constant 0 : index
    %2 = vector.load %arg2[%c0_2, %c0_3] : memref<384x128xf32, #tpu.memory_space<vmem>>, vector<384x128xf32>
    %cst = arith.constant dense<0.000000e+00> : vector<112x128xf32>
    %3 = tpu.matmul %1, %2, %cst {dimension_numbers = #tpu.dot_dimension_numbers<[1], [0], [0], [1], [0, 0, 1, 1], [], []>} : vector<112x384xf32>, vector<384x128xf32>, vector<112x128xf32> -> vector<112x128xf32>
    %c0_4 = arith.constant 0 : index
    %c0_5 = arith.constant 0 : index
    %4 = vector.load %arg3[%c0_4, %c0_5] : memref<1x128xf32, #tpu.memory_space<vmem>>, vector<1x128xf32>
    %5 = vector.broadcast %4 : vector<1x128xf32> to vector<112x128xf32>
    %6 = arith.addf %3, %5 : vector<112x128xf32>
    %cst_6 = arith.constant 0.000000e+00 : f32
    %7 = vector.broadcast %cst_6 : f32 to vector<112x128xf32>
    %8 = arith.maximumf %6, %7 : vector<112x128xf32>
    %9 = arith.mulf %8, %8 : vector<112x128xf32>
    %c1_i32 = arith.constant 1 : i32
    %10 = tpu.dynamic_rotate %9 by %c1_i32 dim 1 : vector<112x128xf32>, i32 -> vector<112x128xf32>
    %11 = arith.addf %9, %10 : vector<112x128xf32>
    %c2_i32 = arith.constant 2 : i32
    %12 = tpu.dynamic_rotate %9 by %c2_i32 dim 1 : vector<112x128xf32>, i32 -> vector<112x128xf32>
    %13 = arith.addf %11, %12 : vector<112x128xf32>
    %c126_i32 = arith.constant 126 : i32
    %14 = tpu.dynamic_rotate %9 by %c126_i32 dim 1 : vector<112x128xf32>, i32 -> vector<112x128xf32>
    %15 = arith.addf %13, %14 : vector<112x128xf32>
    %c127_i32 = arith.constant 127 : i32
    %16 = tpu.dynamic_rotate %9 by %c127_i32 dim 1 : vector<112x128xf32>, i32 -> vector<112x128xf32>
    %17 = arith.addf %15, %16 : vector<112x128xf32>
    %cst_7 = arith.constant 2.000000e-05 : f32
    %18 = vector.broadcast %cst_7 : f32 to vector<112x128xf32>
    %19 = arith.mulf %18, %17 : vector<112x128xf32>
    %cst_8 = arith.constant 2.000000e+00 : f32
    %20 = vector.broadcast %cst_8 : f32 to vector<112x128xf32>
    %21 = arith.addf %20, %19 : vector<112x128xf32>
    %22 = math.log %21 : vector<112x128xf32>
    %cst_9 = arith.constant -7.500000e-01 : f32
    %23 = vector.broadcast %cst_9 : f32 to vector<112x128xf32>
    %24 = arith.mulf %23, %22 : vector<112x128xf32>
    %25 = math.exp %24 : vector<112x128xf32>
    %26 = arith.mulf %8, %25 : vector<112x128xf32>
    %27 = vector.shape_cast %26 : vector<112x128xf32> to vector<2x56x128xf32>
    %28 = vector.extract_strided_slice %27 {offsets = [0, 0, 0], sizes = [2, 47, 128], strides = [1, 1, 1]} : vector<2x56x128xf32> to vector<2x47x128xf32>
    %29 = vector.extract_strided_slice %27 {offsets = [0, 1, 0], sizes = [2, 47, 128], strides = [1, 1, 1]} : vector<2x56x128xf32> to vector<2x47x128xf32>
    %30 = arith.maximumf %28, %29 : vector<2x47x128xf32>
    %31 = vector.extract_strided_slice %27 {offsets = [0, 2, 0], sizes = [2, 47, 128], strides = [1, 1, 1]} : vector<2x56x128xf32> to vector<2x47x128xf32>
    %32 = arith.maximumf %30, %31 : vector<2x47x128xf32>
    %33 = vector.extract_strided_slice %32 {offsets = [0, 0, 0], sizes = [2, 33, 128], strides = [1, 1, 1]} : vector<2x47x128xf32> to vector<2x33x128xf32>
    %34 = vector.extract_strided_slice %32 {offsets = [0, 7, 0], sizes = [2, 33, 128], strides = [1, 1, 1]} : vector<2x47x128xf32> to vector<2x33x128xf32>
    %35 = arith.maximumf %33, %34 : vector<2x33x128xf32>
    %36 = vector.extract_strided_slice %32 {offsets = [0, 14, 0], sizes = [2, 33, 128], strides = [1, 1, 1]} : vector<2x47x128xf32> to vector<2x33x128xf32>
    %37 = arith.maximumf %35, %36 : vector<2x33x128xf32>
    %38 = vector.extract_strided_slice %37 {offsets = [0, 0, 0], sizes = [2, 1, 128], strides = [1, 1, 1]} : vector<2x33x128xf32> to vector<2x1x128xf32>
    %39 = vector.shape_cast %38 : vector<2x1x128xf32> to vector<2x128xf32>
    %40 = vector.extract_strided_slice %37 {offsets = [0, 2, 0], sizes = [2, 1, 128], strides = [1, 1, 1]} : vector<2x33x128xf32> to vector<2x1x128xf32>
    %41 = vector.shape_cast %40 : vector<2x1x128xf32> to vector<2x128xf32>
    %42 = vector.extract_strided_slice %37 {offsets = [0, 4, 0], sizes = [2, 1, 128], strides = [1, 1, 1]} : vector<2x33x128xf32> to vector<2x1x128xf32>
    %43 = vector.shape_cast %42 : vector<2x1x128xf32> to vector<2x128xf32>
    %44 = vector.extract_strided_slice %37 {offsets = [0, 14, 0], sizes = [2, 1, 128], strides = [1, 1, 1]} : vector<2x33x128xf32> to vector<2x1x128xf32>
    %45 = vector.shape_cast %44 : vector<2x1x128xf32> to vector<2x128xf32>
    %46 = vector.extract_strided_slice %37 {offsets = [0, 16, 0], sizes = [2, 1, 128], strides = [1, 1, 1]} : vector<2x33x128xf32> to vector<2x1x128xf32>
    %47 = vector.shape_cast %46 : vector<2x1x128xf32> to vector<2x128xf32>
    %48 = vector.extract_strided_slice %37 {offsets = [0, 18, 0], sizes = [2, 1, 128], strides = [1, 1, 1]} : vector<2x33x128xf32> to vector<2x1x128xf32>
    %49 = vector.shape_cast %48 : vector<2x1x128xf32> to vector<2x128xf32>
    %50 = vector.extract_strided_slice %37 {offsets = [0, 28, 0], sizes = [2, 1, 128], strides = [1, 1, 1]} : vector<2x33x128xf32> to vector<2x1x128xf32>
    %51 = vector.shape_cast %50 : vector<2x1x128xf32> to vector<2x128xf32>
    %52 = vector.extract_strided_slice %37 {offsets = [0, 30, 0], sizes = [2, 1, 128], strides = [1, 1, 1]} : vector<2x33x128xf32> to vector<2x1x128xf32>
    %53 = vector.shape_cast %52 : vector<2x1x128xf32> to vector<2x128xf32>
    %54 = vector.extract_strided_slice %37 {offsets = [0, 32, 0], sizes = [2, 1, 128], strides = [1, 1, 1]} : vector<2x33x128xf32> to vector<2x1x128xf32>
    %55 = vector.shape_cast %54 : vector<2x1x128xf32> to vector<2x128xf32>
    %56 = tpu.concatenate %39, %41, %43, %45, %47, %49, %51, %53, %55 in 1 : vector<2x128xf32>, vector<2x128xf32>, vector<2x128xf32>, vector<2x128xf32>, vector<2x128xf32>, vector<2x128xf32>, vector<2x128xf32>, vector<2x128xf32>, vector<2x128xf32> -> vector<2x1152xf32>
    %c0_10 = arith.constant 0 : index
    %c0_11 = arith.constant 0 : index
    %57 = vector.load %arg4[%c0_10, %c0_11] : memref<1152x1152xf32, #tpu.memory_space<vmem>>, vector<1152x1152xf32>
    %cst_12 = arith.constant dense<0.000000e+00> : vector<2x1152xf32>
    %58 = tpu.matmul %56, %57, %cst_12 {dimension_numbers = #tpu.dot_dimension_numbers<[1], [0], [0], [1], [0, 0, 1, 1], [], []>} : vector<2x1152xf32>, vector<1152x1152xf32>, vector<2x1152xf32> -> vector<2x1152xf32>
    %c0_13 = arith.constant 0 : index
    %c0_14 = arith.constant 0 : index
    %59 = vector.load %arg5[%c0_13, %c0_14] : memref<1x1152xf32, #tpu.memory_space<vmem>>, vector<1x1152xf32>
    %60 = vector.broadcast %59 : vector<1x1152xf32> to vector<2x1152xf32>
    %61 = arith.addf %58, %60 : vector<2x1152xf32>
    %cst_15 = arith.constant 0.000000e+00 : f32
    %62 = vector.broadcast %cst_15 : f32 to vector<2x1152xf32>
    %63 = arith.maximumf %61, %62 : vector<2x1152xf32>
    %c0_16 = arith.constant 0 : index
    %c0_17 = arith.constant 0 : index
    %64 = vector.load %arg6[%c0_16, %c0_17] : memref<2x1152xf32, #tpu.memory_space<vmem>>, vector<2x1152xf32>
    tpu.vector_store %arg6[%c0_16, %c0_17], %63 {strides = array<i32>} : memref<2x1152xf32, #tpu.memory_space<vmem>>, vector<2x1152xf32>,
    return
  }
  func.func @transform_0(%arg0: i32) -> (i32, i32, i32) {
    %c0_i32 = arith.constant 0 : i32
    %c0_i32_0 = arith.constant 0 : i32
    %c0_i32_1 = arith.constant 0 : i32
    return %arg0, %c0_i32, %c0_i32_0 : i32, i32, i32
  }
  func.func @transform_1(%arg0: i32) -> (i32, i32) {
    %c0_i32 = arith.constant 0 : i32
    %c0_i32_0 = arith.constant 0 : i32
    %c0_i32_1 = arith.constant 0 : i32
    return %c0_i32, %c0_i32_0 : i32, i32
  }
  func.func @transform_2(%arg0: i32) -> (i32, i32) {
    %c0_i32 = arith.constant 0 : i32
    %c0_i32_0 = arith.constant 0 : i32
    %c0_i32_1 = arith.constant 0 : i32
    return %c0_i32, %c0_i32_0 : i32, i32
  }
  func.func @transform_3(%arg0: i32) -> (i32, i32) {
    %c0_i32 = arith.constant 0 : i32
    %c0_i32_0 = arith.constant 0 : i32
    %c0_i32_1 = arith.constant 0 : i32
    return %c0_i32, %c0_i32_0 : i32, i32
  }
  func.func @transform_4(%arg0: i32) -> (i32, i32) {
    %c0_i32 = arith.constant 0 : i32
    %c0_i32_0 = arith.constant 0 : i32
    %c0_i32_1 = arith.constant 0 : i32
    return %c0_i32, %c0_i32_0 : i32, i32
  }
  func.func @transform_5(%arg0: i32) -> (i32, i32) {
    %c0_i32 = arith.constant 0 : i32
    %c0_i32_0 = arith.constant 0 : i32
    return %arg0, %c0_i32 : i32, i32
  }
}

</mosaic_0001>

<llo_original>
// kernel: alexnet1_forward.1
$region0: #{alexnet1_forward.1}
  #allocation0 [shape = 'u32[]', space=smem, size = 0x4, offset = 0x4, fixed_abs, tag = 'smem constant byte address 0x4 - core index']
  #allocation1 [shape = 'u32[72,128]{1,0:T(1,128)}', space=vmem, size = 0x9000, scoped, tag = 'internal scratch']
  %s0 = inlined_call_operand.vmem [shape: f32[2,56,384], index: 0, kind: input, shape index: {}]
  %s1 = inlined_call_operand.vmem [shape: f32[384,128], index: 1, kind: input, shape index: {}]
  %s2 = inlined_call_operand.vmem [shape: f32[1,128], index: 2, kind: input, shape index: {}]
  %s3 = inlined_call_operand.vmem [shape: f32[1152,1152], index: 3, kind: input, shape index: {}]
  %s4 = inlined_call_operand.vmem [shape: f32[1,1152], index: 4, kind: input, shape index: {}]
  %s5 = inlined_call_operand.vmem [shape: f32[2,1152], index: 5, kind: output, shape index: {}]
  %s6 = sld [smem:[#allocation0]]
  $region30: #{alexnet1_forward.1} parent=0
    _
  %s8 = ssub.s32 1, %s6
  %s9 = scalar_select 0, %s8, %s6
  // Predicated region
  $region2: #{alexnet1_forward.1} parent=0 // pred_check
    _
  $region3: #{alexnet1_forward.1} parent=0 // pred_check_branch
    %11 = sbr.rel (0) target = $region5
  $region4: #{alexnet1_forward.1} parent=0 // pred_region
    _
  $region5: #{alexnet1_forward.1} parent=0 // pred_fallthru
    _
  // Predicated region
  $region6: #{alexnet1_forward.1} parent=0 // pred_check
    _
  $region7: #{alexnet1_forward.1} parent=0 // pred_check_branch
    %13 = sbr.rel (0) target = $region9
  $region8: #{alexnet1_forward.1} parent=0 // pred_region
    _
  $region9: #{alexnet1_forward.1} parent=0 // pred_fallthru
    _
  // Predicated region
  $region10: #{alexnet1_forward.1} parent=0 // pred_check
    _
  $region11: #{alexnet1_forward.1} parent=0 // pred_check_branch
    %15 = sbr.rel (0) target = $region13
  $region12: #{alexnet1_forward.1} parent=0 // pred_region
    _
  $region13: #{alexnet1_forward.1} parent=0 // pred_fallthru
    _
  // Predicated region
  $region14: #{alexnet1_forward.1} parent=0 // pred_check
    _
  $region15: #{alexnet1_forward.1} parent=0 // pred_check_branch
    %17 = sbr.rel (0) target = $region17
  $region16: #{alexnet1_forward.1} parent=0 // pred_region
    _
  $region17: #{alexnet1_forward.1} parent=0 // pred_fallthru
    _
  // Predicated region
  $region18: #{alexnet1_forward.1} parent=0 // pred_check
    _
  $region19: #{alexnet1_forward.1} parent=0 // pred_check_branch
    %19 = sbr.rel (0) target = $region21
  $region20: #{alexnet1_forward.1} parent=0 // pred_region
    _
  $region21: #{alexnet1_forward.1} parent=0 // pred_fallthru
    _
  %v20 = vld [vmem:[%s0] sm:$0xff]
  %v21 = vld [vmem:[%s0 + $0x8] sm:$0xff]
  %v22 = vld [vmem:[%s0 + $0x10] sm:$0xff]
  %v23 = vld [vmem:[%s0 + $0x18] sm:$0xff]
  %v24 = vld [vmem:[%s0 + $0x20] sm:$0xff]
  %v25 = vld [vmem:[%s0 + $0x28] sm:$0xff]
  %v26 = vld [vmem:[%s0 + $0x30] sm:$0xff]
  %v27 = vld [vmem:[%s0 + $0x38] sm:$0xff]
  %v28 = vld [vmem:[%s0 + $0x40] sm:$0xff]
  %v29 = vld [vmem:[%s0 + $0x48] sm:$0xff]
  %v30 = vld [vmem:[%s0 + $0x50] sm:$0xff]
  %v31 = vld [vmem:[%s0 + $0x58] sm:$0xff]
  %v32 = vld [vmem:[%s0 + $0x60] sm:$0xff]
  %v33 = vld [vmem:[%s0 + $0x68] sm:$0xff]
  %v34 = vld [vmem:[%s0 + $0x70] sm:$0xff]
  %v35 = vld [vmem:[%s0 + $0x78] sm:$0xff]
  %v36 = vld [vmem:[%s0 + $0x80] sm:$0xff]
  %v37 = vld [vmem:[%s0 + $0x88] sm:$0xff]
  %v38 = vld [vmem:[%s0 + $0x90] sm:$0xff]
  %v39 = vld [vmem:[%s0 + $0x98] sm:$0xff]
  %v40 = vld [vmem:[%s0 + $0xa0] sm:$0xff]
  %v41 = vld [vmem:[%s0 + $0xa8] sm:$0xff]
  %v42 = vld [vmem:[%s0 + $0xb0] sm:$0xff]
  %v43 = vld [vmem:[%s0 + $0xb8] sm:$0xff]
  %v44 = vld [vmem:[%s0 + $0xc0] sm:$0xff]
  %v45 = vld [vmem:[%s0 + $0xc8] sm:$0xff]
  %v46 = vld [vmem:[%s0 + $0xd0] sm:$0xff]
  %v47 = vld [vmem:[%s0 + $0xd8] sm:$0xff]
  %v48 = vld [vmem:[%s0 + $0xe0] sm:$0xff]
  %v49 = vld [vmem:[%s0 + $0xe8] sm:$0xff]
  %v50 = vld [vmem:[%s0 + $0xf0] sm:$0xff]
  %v51 = vld [vmem:[%s0 + $0xf8] sm:$0xff]
  %v52 = vld [vmem:[%s0 + $0x100] sm:$0xff]
  %v53 = vld [vmem:[%s0 + $0x108] sm:$0xff]
  %v54 = vld [vmem:[%s0 + $0x110] sm:$0xff]
  %v55 = vld [vmem:[%s0 + $0x118] sm:$0xff]
  %v56 = vld [vmem:[%s0 + $0x120] sm:$0xff]
  %v57 = vld [vmem:[%s0 + $0x128] sm:$0xff]
  %v58 = vld [vmem:[%s0 + $0x130] sm:$0xff]
  %v59 = vld [vmem:[%s0 + $0x138] sm:$0xff]
  %v60 = vld [vmem:[%s0 + $0x140] sm:$0xff]
  %v61 = vld [vmem:[%s0 + $0x148] sm:$0xff]
  %v62 = vld [vmem:[%s1] sm:$0xff]
  %v63 = vld [vmem:[%s1 + $0x8] sm:$0xff]
  %v64 = vld [vmem:[%s1 + $0x10] sm:$0xff]
  %v65 = vld [vmem:[%s1 + $0x18] sm:$0xff]
  %v66 = vld [vmem:[%s1 + $0x20] sm:$0xff]
  %v67 = vld [vmem:[%s1 + $0x28] sm:$0xff]
  %v68 = vld [vmem:[%s1 + $0x30] sm:$0xff]
  %v69 = vld [vmem:[%s1 + $0x38] sm:$0xff]
  %v70 = vld [vmem:[%s1 + $0x40] sm:$0xff]
  %v71 = vld [vmem:[%s1 + $0x48] sm:$0xff]
  %v72 = vld [vmem:[%s1 + $0x50] sm:$0xff]
  %v73 = vld [vmem:[%s1 + $0x58] sm:$0xff]
  %v74 = vld [vmem:[%s1 + $0x60] sm:$0xff]
  %v75 = vld [vmem:[%s1 + $0x68] sm:$0xff]
  %v76 = vld [vmem:[%s1 + $0x70] sm:$0xff]
  %v77 = vld [vmem:[%s1 + $0x78] sm:$0xff]
  %v78 = vld [vmem:[%s1 + $0x80] sm:$0xff]
  %v79 = vld [vmem:[%s1 + $0x88] sm:$0xff]
  %v80 = vld [vmem:[%s1 + $0x90] sm:$0xff]
  %v81 = vld [vmem:[%s1 + $0x98] sm:$0xff]
  %v82 = vld [vmem:[%s1 + $0xa0] sm:$0xff]
  %v83 = vld [vmem:[%s1 + $0xa8] sm:$0xff]
  %v84 = vld [vmem:[%s1 + $0xb0] sm:$0xff]
  %v85 = vld [vmem:[%s1 + $0xb8] sm:$0xff]
  %v86 = vld [vmem:[%s1 + $0xc0] sm:$0xff]
  %v87 = vld [vmem:[%s1 + $0xc8] sm:$0xff]
  %v88 = vld [vmem:[%s1 + $0xd0] sm:$0xff]
  %v89 = vld [vmem:[%s1 + $0xd8] sm:$0xff]
  %v90 = vld [vmem:[%s1 + $0xe0] sm:$0xff]
  %v91 = vld [vmem:[%s1 + $0xe8] sm:$0xff]
  %v92 = vld [vmem:[%s1 + $0xf0] sm:$0xff]
  %v93 = vld [vmem:[%s1 + $0xf8] sm:$0xff]
  %v94 = vld [vmem:[%s1 + $0x100] sm:$0xff]
  %v95 = vld [vmem:[%s1 + $0x108] sm:$0xff]
  %v96 = vld [vmem:[%s1 + $0x110] sm:$0xff]
  %v97 = vld [vmem:[%s1 + $0x118] sm:$0xff]
  %v98 = vld [vmem:[%s1 + $0x120] sm:$0xff]
  %v99 = vld [vmem:[%s1 + $0x128] sm:$0xff]
  %v100 = vld [vmem:[%s1 + $0x130] sm:$0xff]
  %v101 = vld [vmem:[%s1 + $0x138] sm:$0xff]
  %v102 = vld [vmem:[%s1 + $0x140] sm:$0xff]
  %v103 = vld [vmem:[%s1 + $0x148] sm:$0xff]
  %v104 = vld [vmem:[%s1 + $0x150] sm:$0xff]
  %v105 = vld [vmem:[%s1 + $0x158] sm:$0xff]
  %v106 = vld [vmem:[%s1 + $0x160] sm:$0xff]
  %v107 = vld [vmem:[%s1 + $0x168] sm:$0xff]
  %v108 = vld [vmem:[%s1 + $0x170] sm:$0xff]
  %v109 = vld [vmem:[%s1 + $0x178] sm:$0xff]
  %v110 = vld [vmem:[%s2] sm:$0x1]
  %v112 = vperm.slane %v110, 0
  %114 = vmatpush.msra.mxu0 %v77
  %115 = vmatpush.msra.mxu0 %v76
  %116 = vmatpush.msra.mxu0 %v75
  %117 = vmatpush.msra.mxu0 %v74
  %118 = vmatpush.msra.mxu0 %v73
  %119 = vmatpush.msra.mxu0 %v72
  %120 = vmatpush.msra.mxu0 %v71
  %121 = vmatpush.msra.mxu0 %v70
  %122 = vmatpush.msra.mxu0 %v69
  %123 = vmatpush.msra.mxu0 %v68
  %124 = vmatpush.msra.mxu0 %v67
  %125 = vmatpush.msra.mxu0 %v66
  %126 = vmatpush.msra.mxu0 %v65
  %127 = vmatpush.msra.mxu0 %v64
  %128 = vmatpush.msra.mxu0 %v63
  %129 = vmatpush.msra.mxu0 %v62
  %130 = vmatmul.f32.gmra.mxu0 %v20
  %v131 = vpop.f32.mrf.mxu0
  %v132 = vadd.f32 %v112, %v131
  %133 = vmatmul.f32.gmra.mxu0 %v23
  %v134 = vpop.f32.mrf.mxu0
  %v135 = vadd.f32 %v112, %v134
  %136 = vmatmul.f32.gmra.mxu0 %v26
  %v137 = vpop.f32.mrf.mxu0
  %v138 = vadd.f32 %v112, %v137
  %139 = vmatmul.f32.gmra.mxu0 %v29
  %v140 = vpop.f32.mrf.mxu0
  %v141 = vadd.f32 %v112, %v140
  %142 = vmatmul.f32.gmra.mxu0 %v32
  %v143 = vpop.f32.mrf.mxu0
  %v144 = vadd.f32 %v112, %v143
  %145 = vmatmul.f32.gmra.mxu0 %v35
  %v146 = vpop.f32.mrf.mxu0
  %v147 = vadd.f32 %v112, %v146
  %148 = vmatmul.f32.gmra.mxu0 %v38
  %v149 = vpop.f32.mrf.mxu0
  %v150 = vadd.f32 %v112, %v149
  %151 = vmatmul.f32.gmra.mxu0 %v41
  %v152 = vpop.f32.mrf.mxu0
  %v153 = vadd.f32 %v112, %v152
  %154 = vmatmul.f32.gmra.mxu0 %v44
  %v155 = vpop.f32.mrf.mxu0
  %v156 = vadd.f32 %v112, %v155
  %157 = vmatmul.f32.gmra.mxu0 %v47
  %v158 = vpop.f32.mrf.mxu0
  %v159 = vadd.f32 %v112, %v158
  %160 = vmatmul.f32.gmra.mxu0 %v50
  %v161 = vpop.f32.mrf.mxu0
  %v162 = vadd.f32 %v112, %v161
  %163 = vmatmul.f32.gmra.mxu0 %v53
  %v164 = vpop.f32.mrf.mxu0
  %v165 = vadd.f32 %v112, %v164
  %166 = vmatmul.f32.gmra.mxu0 %v56
  %v167 = vpop.f32.mrf.mxu0
  %v168 = vadd.f32 %v112, %v167
  %169 = vmatmul.f32.gmra.mxu0 %v59
  %v170 = vpop.f32.mrf.mxu0
  %v171 = vadd.f32 %v112, %v170
  %172 = vdwg.mxu0
  %173 = vmatpush.msra.mxu0 %v93
  %174 = vmatpush.msra.mxu0 %v92
  %175 = vmatpush.msra.mxu0 %v91
  %176 = vmatpush.msra.mxu0 %v90
  %177 = vmatpush.msra.mxu0 %v89
  %178 = vmatpush.msra.mxu0 %v88
  %179 = vmatpush.msra.mxu0 %v87
  %180 = vmatpush.msra.mxu0 %v86
  %181 = vmatpush.msra.mxu0 %v85
  %182 = vmatpush.msra.mxu0 %v84
  %183 = vmatpush.msra.mxu0 %v83
  %184 = vmatpush.msra.mxu0 %v82
  %185 = vmatpush.msra.mxu0 %v81
  %186 = vmatpush.msra.mxu0 %v80
  %187 = vmatpush.msra.mxu0 %v79
  %188 = vmatpush.msra.mxu0 %v78
  %189 = vmatmul.f32.gmra.mxu0 %v21
  %v190 = vpop.f32.mrf.mxu0
  %v191 = vadd.f32 %v132, %v190
  %192 = vmatmul.f32.gmra.mxu0 %v24
  %v193 = vpop.f32.mrf.mxu0
  %v194 = vadd.f32 %v135, %v193
  %195 = vmatmul.f32.gmra.mxu0 %v27
  %v196 = vpop.f32.mrf.mxu0
  %v197 = vadd.f32 %v138, %v196
  %198 = vmatmul.f32.gmra.mxu0 %v30
  %v199 = vpop.f32.mrf.mxu0
  %v200 = vadd.f32 %v141, %v199
  %201 = vmatmul.f32.gmra.mxu0 %v33
  %v202 = vpop.f32.mrf.mxu0
  %v203 = vadd.f32 %v144, %v202
  %204 = vmatmul.f32.gmra.mxu0 %v36
  %v205 = vpop.f32.mrf.mxu0
  %v206 = vadd.f32 %v147, %v205
  %207 = vmatmul.f32.gmra.mxu0 %v39
  %v208 = vpop.f32.mrf.mxu0
  %v209 = vadd.f32 %v150, %v208
  %210 = vmatmul.f32.gmra.mxu0 %v42
  %v211 = vpop.f32.mrf.mxu0
  %v212 = vadd.f32 %v153, %v211
  %213 = vmatmul.f32.gmra.mxu0 %v45
  %v214 = vpop.f32.mrf.mxu0
  %v215 = vadd.f32 %v156, %v214
  %216 = vmatmul.f32.gmra.mxu0 %v48
  %v217 = vpop.f32.mrf.mxu0
  %v218 = vadd.f32 %v159, %v217
  %219 = vmatmul.f32.gmra.mxu0 %v51
  %v220 = vpop.f32.mrf.mxu0
  %v221 = vadd.f32 %v162, %v220
  %222 = vmatmul.f32.gmra.mxu0 %v54
  %v223 = vpop.f32.mrf.mxu0
  %v224 = vadd.f32 %v165, %v223
  %225 = vmatmul.f32.gmra.mxu0 %v57
  %v226 = vpop.f32.mrf.mxu0
  %v227 = vadd.f32 %v168, %v226
  %228 = vmatmul.f32.gmra.mxu0 %v60
  %v229 = vpop.f32.mrf.mxu0
  %v230 = vadd.f32 %v171, %v229
  %231 = vdwg.mxu0
  %232 = vmatpush.msra.mxu0 %v109
  %233 = vmatpush.msra.mxu0 %v108
  %234 = vmatpush.msra.mxu0 %v107
  %235 = vmatpush.msra.mxu0 %v106
  %236 = vmatpush.msra.mxu0 %v105
  %237 = vmatpush.msra.mxu0 %v104
  %238 = vmatpush.msra.mxu0 %v103
  %239 = vmatpush.msra.mxu0 %v102
  %240 = vmatpush.msra.mxu0 %v101
  %241 = vmatpush.msra.mxu0 %v100
  %242 = vmatpush.msra.mxu0 %v99
  %243 = vmatpush.msra.mxu0 %v98
  %244 = vmatpush.msra.mxu0 %v97
  %245 = vmatpush.msra.mxu0 %v96
  %246 = vmatpush.msra.mxu0 %v95
  %247 = vmatpush.msra.mxu0 %v94
  %248 = vmatmul.f32.gmra.mxu0 %v22
  %v249 = vpop.f32.mrf.mxu0
  %v250 = vadd.f32 %v191, %v249
  %251 = vmatmul.f32.gmra.mxu0 %v25
  %v252 = vpop.f32.mrf.mxu0
  %v253 = vadd.f32 %v194, %v252
  %254 = vmatmul.f32.gmra.mxu0 %v28
  %v255 = vpop.f32.mrf.mxu0
  %v256 = vadd.f32 %v197, %v255
  %257 = vmatmul.f32.gmra.mxu0 %v31
  %v258 = vpop.f32.mrf.mxu0
  %v259 = vadd.f32 %v200, %v258
  %260 = vmatmul.f32.gmra.mxu0 %v34
  %v261 = vpop.f32.mrf.mxu0
  %v262 = vadd.f32 %v203, %v261
  %263 = vmatmul.f32.gmra.mxu0 %v37
  %v264 = vpop.f32.mrf.mxu0
  %v265 = vadd.f32 %v206, %v264
  %266 = vmatmul.f32.gmra.mxu0 %v40
  %v267 = vpop.f32.mrf.mxu0
  %v268 = vadd.f32 %v209, %v267
  %269 = vmatmul.f32.gmra.mxu0 %v43
  %v270 = vpop.f32.mrf.mxu0
  %v271 = vadd.f32 %v212, %v270
  %272 = vmatmul.f32.gmra.mxu0 %v46
  %v273 = vpop.f32.mrf.mxu0
  %v274 = vadd.f32 %v215, %v273
  %275 = vmatmul.f32.gmra.mxu0 %v49
  %v276 = vpop.f32.mrf.mxu0
  %v277 = vadd.f32 %v218, %v276
  %278 = vmatmul.f32.gmra.mxu0 %v52
  %v279 = vpop.f32.mrf.mxu0
  %v280 = vadd.f32 %v221, %v279
  %281 = vmatmul.f32.gmra.mxu0 %v55
  %v282 = vpop.f32.mrf.mxu0
  %v283 = vadd.f32 %v224, %v282
  %284 = vmatmul.f32.gmra.mxu0 %v58
  %v285 = vpop.f32.mrf.mxu0
  %v286 = vadd.f32 %v227, %v285
  %287 = vmatmul.f32.gmra.mxu0 %v61
  %v288 = vpop.f32.mrf.mxu0
  %v289 = vadd.f32 %v230, %v288
  %290 = vdwg.mxu0
  %v291 = vmax.f32 %v250, 0.0
  %v292 = vmax.f32 %v253, 0.0
  %v293 = vmax.f32 %v256, 0.0
  %v294 = vmax.f32 %v259, 0.0
  %v295 = vmax.f32 %v262, 0.0
  %v296 = vmax.f32 %v265, 0.0
  %v297 = vmax.f32 %v268, 0.0
  %v298 = vmax.f32 %v271, 0.0
  %v299 = vmax.f32 %v274, 0.0
  %v300 = vmax.f32 %v277, 0.0
  %v301 = vmax.f32 %v280, 0.0
  %v302 = vmax.f32 %v283, 0.0
  %v303 = vmax.f32 %v286, 0.0
  %v304 = vmax.f32 %v289, 0.0
  %v305 = vmul.f32 %v291, %v291
  %v306 = vmul.f32 %v292, %v292
  %v307 = vmul.f32 %v293, %v293
  %v308 = vmul.f32 %v294, %v294
  %v309 = vmul.f32 %v295, %v295
  %v310 = vmul.f32 %v296, %v296
  %v311 = vmul.f32 %v297, %v297
  %v312 = vmul.f32 %v298, %v298
  %v313 = vmul.f32 %v299, %v299
  %v314 = vmul.f32 %v300, %v300
  %v315 = vmul.f32 %v301, %v301
  %v316 = vmul.f32 %v302, %v302
  %v317 = vmul.f32 %v303, %v303
  %v318 = vmul.f32 %v304, %v304
  %319 = vrot.lane.b32.xlu0 %v305, 1
  %v320 = vpop.permute.xlu0 %319
  %321 = vrot.lane.b32.xlu0 %v306, 1
  %v322 = vpop.permute.xlu0 %321
  %323 = vrot.lane.b32.xlu0 %v307, 1
  %v324 = vpop.permute.xlu0 %323
  %325 = vrot.lane.b32.xlu0 %v308, 1
  %v326 = vpop.permute.xlu0 %325
  %327 = vrot.lane.b32.xlu0 %v309, 1
  %v328 = vpop.permute.xlu0 %327
  %329 = vrot.lane.b32.xlu0 %v310, 1
  %v330 = vpop.permute.xlu0 %329
  %331 = vrot.lane.b32.xlu0 %v311, 1
  %v332 = vpop.permute.xlu0 %331
  %333 = vrot.lane.b32.xlu0 %v312, 1
  %v334 = vpop.permute.xlu0 %333
  %335 = vrot.lane.b32.xlu0 %v313, 1
  %v336 = vpop.permute.xlu0 %335
  %337 = vrot.lane.b32.xlu0 %v314, 1
  %v338 = vpop.permute.xlu0 %337
  %339 = vrot.lane.b32.xlu0 %v315, 1
  %v340 = vpop.permute.xlu0 %339
  %341 = vrot.lane.b32.xlu0 %v316, 1
  %v342 = vpop.permute.xlu0 %341
  %343 = vrot.lane.b32.xlu0 %v317, 1
  %v344 = vpop.permute.xlu0 %343
  %345 = vrot.lane.b32.xlu0 %v318, 1
  %v346 = vpop.permute.xlu0 %345
  %v347 = vadd.f32 %v305, %v320
  %v348 = vadd.f32 %v306, %v322
  %v349 = vadd.f32 %v307, %v324
  %v350 = vadd.f32 %v308, %v326
  %v351 = vadd.f32 %v309, %v328
  %v352 = vadd.f32 %v310, %v330
  %v353 = vadd.f32 %v311, %v332
  %v354 = vadd.f32 %v312, %v334
  %v355 = vadd.f32 %v313, %v336
  %v356 = vadd.f32 %v314, %v338
  %v357 = vadd.f32 %v315, %v340
  %v358 = vadd.f32 %v316, %v342
  %v359 = vadd.f32 %v317, %v344
  %v360 = vadd.f32 %v318, %v346
  %361 = vrot.lane.b32.xlu0 %v305, 2
  %v362 = vpop.permute.xlu0 %361
  %363 = vrot.lane.b32.xlu0 %v306, 2
  %v364 = vpop.permute.xlu0 %363
  %365 = vrot.lane.b32.xlu0 %v307, 2
  %v366 = vpop.permute.xlu0 %365
  %367 = vrot.lane.b32.xlu0 %v308, 2
  %v368 = vpop.permute.xlu0 %367
  %369 = vrot.lane.b32.xlu0 %v309, 2
  %v370 = vpop.permute.xlu0 %369
  %371 = vrot.lane.b32.xlu0 %v310, 2
  %v372 = vpop.permute.xlu0 %371
  %373 = vrot.lane.b32.xlu0 %v311, 2
  %v374 = vpop.permute.xlu0 %373
  %375 = vrot.lane.b32.xlu0 %v312, 2
  %v376 = vpop.permute.xlu0 %375
  %377 = vrot.lane.b32.xlu0 %v313, 2
  %v378 = vpop.permute.xlu0 %377
  %379 = vrot.lane.b32.xlu0 %v314, 2
  %v380 = vpop.permute.xlu0 %379
  %381 = vrot.lane.b32.xlu0 %v315, 2
  %v382 = vpop.permute.xlu0 %381
  %383 = vrot.lane.b32.xlu0 %v316, 2
  %v384 = vpop.permute.xlu0 %383
  %385 = vrot.lane.b32.xlu0 %v317, 2
  %v386 = vpop.permute.xlu0 %385
  %387 = vrot.lane.b32.xlu0 %v318, 2
  %v388 = vpop.permute.xlu0 %387
  %v389 = vadd.f32 %v347, %v362
  %v390 = vadd.f32 %v348, %v364
  %v391 = vadd.f32 %v349, %v366
  %v392 = vadd.f32 %v350, %v368
  %v393 = vadd.f32 %v351, %v370
  %v394 = vadd.f32 %v352, %v372
  %v395 = vadd.f32 %v353, %v374
  %v396 = vadd.f32 %v354, %v376
  %v397 = vadd.f32 %v355, %v378
  %v398 = vadd.f32 %v356, %v380
  %v399 = vadd.f32 %v357, %v382
  %v400 = vadd.f32 %v358, %v384
  %v401 = vadd.f32 %v359, %v386
  %v402 = vadd.f32 %v360, %v388
  %403 = vrot.lane.b32.xlu0 %v305, 126
  %v404 = vpop.permute.xlu0 %403
  %405 = vrot.lane.b32.xlu0 %v306, 126
  %v406 = vpop.permute.xlu0 %405
  %407 = vrot.lane.b32.xlu0 %v307, 126
  %v408 = vpop.permute.xlu0 %407
  %409 = vrot.lane.b32.xlu0 %v308, 126
  %v410 = vpop.permute.xlu0 %409
  %411 = vrot.lane.b32.xlu0 %v309, 126
  %v412 = vpop.permute.xlu0 %411
  %413 = vrot.lane.b32.xlu0 %v310, 126
  %v414 = vpop.permute.xlu0 %413
  %415 = vrot.lane.b32.xlu0 %v311, 126
  %v416 = vpop.permute.xlu0 %415
  %417 = vrot.lane.b32.xlu0 %v312, 126
  %v418 = vpop.permute.xlu0 %417
  %419 = vrot.lane.b32.xlu0 %v313, 126
  %v420 = vpop.permute.xlu0 %419
  %421 = vrot.lane.b32.xlu0 %v314, 126
  %v422 = vpop.permute.xlu0 %421
  %423 = vrot.lane.b32.xlu0 %v315, 126
  %v424 = vpop.permute.xlu0 %423
  %425 = vrot.lane.b32.xlu0 %v316, 126
  %v426 = vpop.permute.xlu0 %425
  %427 = vrot.lane.b32.xlu0 %v317, 126
  %v428 = vpop.permute.xlu0 %427
  %429 = vrot.lane.b32.xlu0 %v318, 126
  %v430 = vpop.permute.xlu0 %429
  %v431 = vadd.f32 %v389, %v404
  %v432 = vadd.f32 %v390, %v406
  %v433 = vadd.f32 %v391, %v408
  %v434 = vadd.f32 %v392, %v410
  %v435 = vadd.f32 %v393, %v412
  %v436 = vadd.f32 %v394, %v414
  %v437 = vadd.f32 %v395, %v416
  %v438 = vadd.f32 %v396, %v418
  %v439 = vadd.f32 %v397, %v420
  %v440 = vadd.f32 %v398, %v422
  %v441 = vadd.f32 %v399, %v424
  %v442 = vadd.f32 %v400, %v426
  %v443 = vadd.f32 %v401, %v428
  %v444 = vadd.f32 %v402, %v430
  %445 = vrot.lane.b32.xlu0 %v305, 127
  %v446 = vpop.permute.xlu0 %445
  %447 = vrot.lane.b32.xlu0 %v306, 127
  %v448 = vpop.permute.xlu0 %447
  %449 = vrot.lane.b32.xlu0 %v307, 127
  %v450 = vpop.permute.xlu0 %449
  %451 = vrot.lane.b32.xlu0 %v308, 127
  %v452 = vpop.permute.xlu0 %451
  %453 = vrot.lane.b32.xlu0 %v309, 127
  %v454 = vpop.permute.xlu0 %453
  %455 = vrot.lane.b32.xlu0 %v310, 127
  %v456 = vpop.permute.xlu0 %455
  %457 = vrot.lane.b32.xlu0 %v311, 127
  %v458 = vpop.permute.xlu0 %457
  %459 = vrot.lane.b32.xlu0 %v312, 127
  %v460 = vpop.permute.xlu0 %459
  %461 = vrot.lane.b32.xlu0 %v313, 127
  %v462 = vpop.permute.xlu0 %461
  %463 = vrot.lane.b32.xlu0 %v314, 127
  %v464 = vpop.permute.xlu0 %463
  %465 = vrot.lane.b32.xlu0 %v315, 127
  %v466 = vpop.permute.xlu0 %465
  %467 = vrot.lane.b32.xlu0 %v316, 127
  %v468 = vpop.permute.xlu0 %467
  %469 = vrot.lane.b32.xlu0 %v317, 127
  %v470 = vpop.permute.xlu0 %469
  %471 = vrot.lane.b32.xlu0 %v318, 127
  %v472 = vpop.permute.xlu0 %471
  %v473 = vadd.f32 %v431, %v446
  %v474 = vadd.f32 %v432, %v448
  %v475 = vadd.f32 %v433, %v450
  %v476 = vadd.f32 %v434, %v452
  %v477 = vadd.f32 %v435, %v454
  %v478 = vadd.f32 %v436, %v456
  %v479 = vadd.f32 %v437, %v458
  %v480 = vadd.f32 %v438, %v460
  %v481 = vadd.f32 %v439, %v462
  %v482 = vadd.f32 %v440, %v464
  %v483 = vadd.f32 %v441, %v466
  %v484 = vadd.f32 %v442, %v468
  %v485 = vadd.f32 %v443, %v470
  %v486 = vadd.f32 %v444, %v472
  %v487 = vmul.f32 %v473, 2e-05
  %v488 = vmul.f32 %v474, 2e-05
  %v489 = vmul.f32 %v475, 2e-05
  %v490 = vmul.f32 %v476, 2e-05
  %v491 = vmul.f32 %v477, 2e-05
  %v492 = vmul.f32 %v478, 2e-05
  %v493 = vmul.f32 %v479, 2e-05
  %v494 = vmul.f32 %v480, 2e-05
  %v495 = vmul.f32 %v481, 2e-05
  %v496 = vmul.f32 %v482, 2e-05
  %v497 = vmul.f32 %v483, 2e-05
  %v498 = vmul.f32 %v484, 2e-05
  %v499 = vmul.f32 %v485, 2e-05
  %v500 = vmul.f32 %v486, 2e-05
  %v501 = vadd.f32 %v487, 2.0
  %v502 = vadd.f32 %v488, 2.0
  %v503 = vadd.f32 %v489, 2.0
  %v504 = vadd.f32 %v490, 2.0
  %v505 = vadd.f32 %v491, 2.0
  %v506 = vadd.f32 %v492, 2.0
  %v507 = vadd.f32 %v493, 2.0
  %v508 = vadd.f32 %v494, 2.0
  %v509 = vadd.f32 %v495, 2.0
  %v510 = vadd.f32 %v496, 2.0
  %v511 = vadd.f32 %v497, 2.0
  %v512 = vadd.f32 %v498, 2.0
  %v513 = vadd.f32 %v499, 2.0
  %v514 = vadd.f32 %v500, 2.0
  %v515 = vlog2.pop %v501
  %v516 = vmul.f32 %v515, 0.6931472
  %v517 = vlog2.pop %v502
  %v518 = vmul.f32 %v517, 0.6931472
  %v519 = vlog2.pop %v503
  %v520 = vmul.f32 %v519, 0.6931472
  %v521 = vlog2.pop %v504
  %v522 = vmul.f32 %v521, 0.6931472
  %v523 = vlog2.pop %v505
  %v524 = vmul.f32 %v523, 0.6931472
  %v525 = vlog2.pop %v506
  %v526 = vmul.f32 %v525, 0.6931472
  %v527 = vlog2.pop %v507
  %v528 = vmul.f32 %v527, 0.6931472
  %v529 = vlog2.pop %v508
  %v530 = vmul.f32 %v529, 0.6931472
  %v531 = vlog2.pop %v509
  %v532 = vmul.f32 %v531, 0.6931472
  %v533 = vlog2.pop %v510
  %v534 = vmul.f32 %v533, 0.6931472
  %v535 = vlog2.pop %v511
  %v536 = vmul.f32 %v535, 0.6931472
  %v537 = vlog2.pop %v512
  %v538 = vmul.f32 %v537, 0.6931472
  %v539 = vlog2.pop %v513
  %v540 = vmul.f32 %v539, 0.6931472
  %v541 = vlog2.pop %v514
  %v542 = vmul.f32 %v541, 0.6931472
  %v543 = vmul.f32 %v516, -0.75
  %v544 = vmul.f32 %v518, -0.75
  %v545 = vmul.f32 %v520, -0.75
  %v546 = vmul.f32 %v522, -0.75
  %v547 = vmul.f32 %v524, -0.75
  %v548 = vmul.f32 %v526, -0.75
  %v549 = vmul.f32 %v528, -0.75
  %v550 = vmul.f32 %v530, -0.75
  %v551 = vmul.f32 %v532, -0.75
  %v552 = vmul.f32 %v534, -0.75
  %v553 = vmul.f32 %v536, -0.75
  %v554 = vmul.f32 %v538, -0.75
  %v555 = vmul.f32 %v540, -0.75
  %v556 = vmul.f32 %v542, -0.75
  %v557 = vmul.f32 %v543, 1.442695
  %v558 = vpow.pop %v557
  %v559 = vmul.f32 %v544, 1.442695
  %v560 = vpow.pop %v559
  %v561 = vmul.f32 %v545, 1.442695
  %v562 = vpow.pop %v561
  %v563 = vmul.f32 %v546, 1.442695
  %v564 = vpow.pop %v563
  %v565 = vmul.f32 %v547, 1.442695
  %v566 = vpow.pop %v565
  %v567 = vmul.f32 %v548, 1.442695
  %v568 = vpow.pop %v567
  %v569 = vmul.f32 %v549, 1.442695
  %v570 = vpow.pop %v569
  %v571 = vmul.f32 %v550, 1.442695
  %v572 = vpow.pop %v571
  %v573 = vmul.f32 %v551, 1.442695
  %v574 = vpow.pop %v573
  %v575 = vmul.f32 %v552, 1.442695
  %v576 = vpow.pop %v575
  %v577 = vmul.f32 %v553, 1.442695
  %v578 = vpow.pop %v577
  %v579 = vmul.f32 %v554, 1.442695
  %v580 = vpow.pop %v579
  %v581 = vmul.f32 %v555, 1.442695
  %v582 = vpow.pop %v581
  %v583 = vmul.f32 %v556, 1.442695
  %v584 = vpow.pop %v583
  %v585 = vmul.f32 %v291, %v558
  %v586 = vmul.f32 %v292, %v560
  %v587 = vmul.f32 %v293, %v562
  %v588 = vmul.f32 %v294, %v564
  %v589 = vmul.f32 %v295, %v566
  %v590 = vmul.f32 %v296, %v568
  %v591 = vmul.f32 %v297, %v570
  %v592 = vmul.f32 %v298, %v572
  %v593 = vmul.f32 %v299, %v574
  %v594 = vmul.f32 %v300, %v576
  %v595 = vmul.f32 %v301, %v578
  %v596 = vmul.f32 %v302, %v580
  %v597 = vmul.f32 %v303, %v582
  %v598 = vmul.f32 %v304, %v584
  %vm611 = vcmask 1046528
  %v612 = vrot.slane %v585, 1
  %v613 = vrot.slane %v586, 1
  %v614 = vsel %vm611, %v612, %v613
  %v615 = vrot.slane %v587, 1
  %v616 = vsel %vm611, %v613, %v615
  %v617 = vrot.slane %v588, 1
  %v618 = vsel %vm611, %v615, %v617
  %v619 = vrot.slane %v589, 1
  %v620 = vsel %vm611, %v617, %v619
  %v621 = vrot.slane %v590, 1
  %v622 = vsel %vm611, %v619, %v621
  %v623 = vrot.slane %v592, 1
  %v624 = vrot.slane %v593, 1
  %v625 = vsel %vm611, %v623, %v624
  %v626 = vrot.slane %v594, 1
  %v627 = vsel %vm611, %v624, %v626
  %v628 = vrot.slane %v595, 1
  %v629 = vsel %vm611, %v626, %v628
  %v630 = vrot.slane %v596, 1
  %v631 = vsel %vm611, %v628, %v630
  %v632 = vrot.slane %v597, 1
  %v633 = vsel %vm611, %v630, %v632
  %v646 = vmax.f32 %v585, %v614
  %v647 = vmax.f32 %v586, %v616
  %v648 = vmax.f32 %v587, %v618
  %v649 = vmax.f32 %v588, %v620
  %v650 = vmax.f32 %v589, %v622
  %v651 = vmax.f32 %v590, %v621
  %v652 = vmax.f32 %v592, %v625
  %v653 = vmax.f32 %v593, %v627
  %v654 = vmax.f32 %v594, %v629
  %v655 = vmax.f32 %v595, %v631
  %v656 = vmax.f32 %v596, %v633
  %v657 = vmax.f32 %v597, %v632
  %vm660 = vcmask 1045504
  %v661 = vrot.slane %v585, 2
  %v662 = vrot.slane %v586, 2
  %v663 = vsel %vm660, %v661, %v662
  %v664 = vrot.slane %v587, 2
  %v665 = vsel %vm660, %v662, %v664
  %v666 = vrot.slane %v588, 2
  %v667 = vsel %vm660, %v664, %v666
  %v668 = vrot.slane %v589, 2
  %v669 = vsel %vm660, %v666, %v668
  %v670 = vrot.slane %v590, 2
  %v671 = vsel %vm660, %v668, %v670
  %v672 = vrot.slane %v591, 2
  %v673 = vsel %vm660, %v670, %v672
  %v674 = vrot.slane %v592, 2
  %v675 = vrot.slane %v593, 2
  %v676 = vsel %vm660, %v674, %v675
  %v677 = vrot.slane %v594, 2
  %v678 = vsel %vm660, %v675, %v677
  %v679 = vrot.slane %v595, 2
  %v680 = vsel %vm660, %v677, %v679
  %v681 = vrot.slane %v596, 2
  %v682 = vsel %vm660, %v679, %v681
  %v683 = vrot.slane %v597, 2
  %v684 = vsel %vm660, %v681, %v683
  %v685 = vrot.slane %v598, 2
  %v686 = vsel %vm660, %v683, %v685
  %v699 = vmax.f32 %v646, %v663
  %v700 = vmax.f32 %v647, %v665
  %v701 = vmax.f32 %v648, %v667
  %v702 = vmax.f32 %v649, %v669
  %v703 = vmax.f32 %v650, %v671
  %v704 = vmax.f32 %v651, %v673
  %v705 = vmax.f32 %v652, %v676
  %v706 = vmax.f32 %v653, %v678
  %v707 = vmax.f32 %v654, %v680
  %v708 = vmax.f32 %v655, %v682
  %v709 = vmax.f32 %v656, %v684
  %v710 = vmax.f32 %v657, %v686
  %vm721 = vcmask 1040384
  %v722 = vrot.slane %v699, 7
  %v723 = vrot.slane %v700, 7
  %v724 = vsel %vm721, %v722, %v723
  %v725 = vrot.slane %v701, 7
  %v726 = vsel %vm721, %v723, %v725
  %v727 = vrot.slane %v702, 7
  %v728 = vsel %vm721, %v725, %v727
  %v729 = vrot.slane %v703, 7
  %v730 = vsel %vm721, %v727, %v729
  %v731 = vrot.slane %v705, 7
  %v732 = vrot.slane %v706, 7
  %v733 = vsel %vm721, %v731, %v732
  %v734 = vrot.slane %v707, 7
  %v735 = vsel %vm721, %v732, %v734
  %v736 = vrot.slane %v708, 7
  %v737 = vsel %vm721, %v734, %v736
  %v738 = vrot.slane %v709, 7
  %v739 = vsel %vm721, %v736, %v738
  %v750 = vmax.f32 %v699, %v724
  %v751 = vmax.f32 %v700, %v726
  %v752 = vmax.f32 %v701, %v728
  %v753 = vmax.f32 %v702, %v730
  %v754 = vmax.f32 %v703, %v729
  %v755 = vmax.f32 %v705, %v733
  %v756 = vmax.f32 %v706, %v735
  %v757 = vmax.f32 %v707, %v737
  %v758 = vmax.f32 %v708, %v739
  %v759 = vmax.f32 %v709, %v738
  %vm762 = vcmask 1041408
  %v763 = vrot.slane %v700, 6
  %v764 = vrot.slane %v701, 6
  %v765 = vsel %vm762, %v763, %v764
  %v766 = vrot.slane %v702, 6
  %v767 = vsel %vm762, %v764, %v766
  %v768 = vrot.slane %v703, 6
  %v769 = vsel %vm762, %v766, %v768
  %v770 = vrot.slane %v704, 6
  %v771 = vsel %vm762, %v768, %v770
  %v772 = vrot.slane %v706, 6
  %v773 = vrot.slane %v707, 6
  %v774 = vsel %vm762, %v772, %v773
  %v775 = vrot.slane %v708, 6
  %v776 = vsel %vm762, %v773, %v775
  %v777 = vrot.slane %v709, 6
  %v778 = vsel %vm762, %v775, %v777
  %v779 = vrot.slane %v710, 6
  %v780 = vsel %vm762, %v777, %v779
  %v791 = vmax.f32 %v750, %v765
  %v792 = vmax.f32 %v751, %v767
  %v793 = vmax.f32 %v752, %v769
  %v794 = vmax.f32 %v753, %v771
  %v795 = vmax.f32 %v754, %v770
  %v796 = vmax.f32 %v755, %v774
  %v797 = vmax.f32 %v756, %v776
  %v798 = vmax.f32 %v757, %v778
  %v799 = vmax.f32 %v758, %v780
  %v800 = vmax.f32 %v759, %v779
  %v803 = vrot.slane %v796, 7
  %vm804 = vcmask 1041409
  %v805 = vsel %vm804, %v803, %v791
  %v807 = vrot.slane %v791, 2
  %v808 = vrot.slane %v796, 1
  %v809 = vsel %vm804, %v808, %v807
  %v811 = vrot.slane %v791, 4
  %v812 = vrot.slane %v796, 3
  %v813 = vsel %vm804, %v812, %v811
  %v817 = vrot.slane %v792, 6
  %v818 = vrot.slane %v797, 5
  %v819 = vsel %vm804, %v818, %v817
  %v823 = vrot.slane %v798, 7
  %v824 = vsel %vm804, %v823, %v793
  %v826 = vrot.slane %v793, 2
  %v827 = vrot.slane %v798, 1
  %v828 = vsel %vm804, %v827, %v826
  %v832 = vrot.slane %v794, 4
  %v833 = vrot.slane %v799, 3
  %v834 = vsel %vm804, %v833, %v832
  %v836 = vrot.slane %v794, 6
  %v837 = vrot.slane %v799, 5
  %v838 = vsel %vm804, %v837, %v836
  %v842 = vrot.slane %v800, 7
  %v843 = vsel %vm804, %v842, %v795
  %v845 = vld [vmem:[%s3] sm:$0xff]
  %v846 = vld [vmem:[%s3 + $0x8] sm:$0xff]
  %v847 = vld [vmem:[%s3 + $0x10] sm:$0xff]
  %v848 = vld [vmem:[%s3 + $0x18] sm:$0xff]
  %v849 = vld [vmem:[%s3 + $0x20] sm:$0xff]
  %v850 = vld [vmem:[%s3 + $0x28] sm:$0xff]
  %v851 = vld [vmem:[%s3 + $0x30] sm:$0xff]
  %v852 = vld [vmem:[%s3 + $0x38] sm:$0xff]
  %v853 = vld [vmem:[%s3 + $0x40] sm:$0xff]
  %v854 = vld [vmem:[%s3 + $0x48] sm:$0xff]
  %v855 = vld [vmem:[%s3 + $0x50] sm:$0xff]
  %v856 = vld [vmem:[%s3 + $0x58] sm:$0xff]
  %v857 = vld [vmem:[%s3 + $0x60] sm:$0xff]
  %v858 = vld [vmem:[%s3 + $0x68] sm:$0xff]
  %v859 = vld [vmem:[%s3 + $0x70] sm:$0xff]
  %v860 = vld [vmem:[%s3 + $0x78] sm:$0xff]
  %v861 = vld [vmem:[%s3 + $0x80] sm:$0xff]
  %v862 = vld [vmem:[%s3 + $0x88] sm:$0xff]
  %v863 = vld [vmem:[%s3 + $0x90] sm:$0xff]
  %v864 = vld [vmem:[%s3 + $0x98] sm:$0xff]
  %v865 = vld [vmem:[%s3 + $0xa0] sm:$0xff]
  %v866 = vld [vmem:[%s3 + $0xa8] sm:$0xff]
  %v867 = vld [vmem:[%s3 + $0xb0] sm:$0xff]
  %v868 = vld [vmem:[%s3 + $0xb8] sm:$0xff]
  %v869 = vld [vmem:[%s3 + $0xc0] sm:$0xff]
  %v870 = vld [vmem:[%s3 + $0xc8] sm:$0xff]
  %v871 = vld [vmem:[%s3 + $0xd0] sm:$0xff]
  %v872 = vld [vmem:[%s3 + $0xd8] sm:$0xff]
  %v873 = vld [vmem:[%s3 + $0xe0] sm:$0xff]
  %v874 = vld [vmem:[%s3 + $0xe8] sm:$0xff]
  %v875 = vld [vmem:[%s3 + $0xf0] sm:$0xff]
  %v876 = vld [vmem:[%s3 + $0xf8] sm:$0xff]
  %v877 = vld [vmem:[%s3 + $0x100] sm:$0xff]
  %v878 = vld [vmem:[%s3 + $0x108] sm:$0xff]
  %v879 = vld [vmem:[%s3 + $0x110] sm:$0xff]
  %v880 = vld [vmem:[%s3 + $0x118] sm:$0xff]
  %v881 = vld [vmem:[%s3 + $0x120] sm:$0xff]
  %v882 = vld [vmem:[%s3 + $0x128] sm:$0xff]
  %v883 = vld [vmem:[%s3 + $0x130] sm:$0xff]
  %v884 = vld [vmem:[%s3 + $0x138] sm:$0xff]
  %v885 = vld [vmem:[%s3 + $0x140] sm:$0xff]
  %v886 = vld [vmem:[%s3 + $0x148] sm:$0xff]
  %v887 = vld [vmem:[%s3 + $0x150] sm:$0xff]
  %v888 = vld [vmem:[%s3 + $0x158] sm:$0xff]
  %v889 = vld [vmem:[%s3 + $0x160] sm:$0xff]
  %v890 = vld [vmem:[%s3 + $0x168] sm:$0xff]
  %v891 = vld [vmem:[%s3 + $0x170] sm:$0xff]
  %v892 = vld [vmem:[%s3 + $0x178] sm:$0xff]
  %v893 = vld [vmem:[%s3 + $0x180] sm:$0xff]
  %v894 = vld [vmem:[%s3 + $0x188] sm:$0xff]
  %v895 = vld [vmem:[%s3 + $0x190] sm:$0xff]
  %v896 = vld [vmem:[%s3 + $0x198] sm:$0xff]
  %v897 = vld [vmem:[%s3 + $0x1a0] sm:$0xff]
  %v898 = vld [vmem:[%s3 + $0x1a8] sm:$0xff]
  %v899 = vld [vmem:[%s3 + $0x1b0] sm:$0xff]
  %v900 = vld [vmem:[%s3 + $0x1b8] sm:$0xff]
  %v901 = vld [vmem:[%s3 + $0x1c0] sm:$0xff]
  %v902 = vld [vmem:[%s3 + $0x1c8] sm:$0xff]
  %v903 = vld [vmem:[%s3 + $0x1d0] sm:$0xff]
  %v904 = vld [vmem:[%s3 + $0x1d8] sm:$0xff]
  %v905 = vld [vmem:[%s3 + $0x1e0] sm:$0xff]
  %v906 = vld [vmem:[%s3 + $0x1e8] sm:$0xff]
  %v907 = vld [vmem:[%s3 + $0x1f0] sm:$0xff]
  %v908 = vld [vmem:[%s3 + $0x1f8] sm:$0xff]
  %v909 = vld [vmem:[%s3 + $0x200] sm:$0xff]
  %v910 = vld [vmem:[%s3 + $0x208] sm:$0xff]
  %v911 = vld [vmem:[%s3 + $0x210] sm:$0xff]
  %v912 = vld [vmem:[%s3 + $0x218] sm:$0xff]
  %v913 = vld [vmem:[%s3 + $0x220] sm:$0xff]
  %v914 = vld [vmem:[%s3 + $0x228] sm:$0xff]
  %v915 = vld [vmem:[%s3 + $0x230] sm:$0xff]
  %v916 = vld [vmem:[%s3 + $0x238] sm:$0xff]
  %v917 = vld [vmem:[%s3 + $0x240] sm:$0xff]
  %v918 = vld [vmem:[%s3 + $0x248] sm:$0xff]
  %v919 = vld [vmem:[%s3 + $0x250] sm:$0xff]
  %v920 = vld [vmem:[%s3 + $0x258] sm:$0xff]
  %v921 = vld [vmem:[%s3 + $0x260] sm:$0xff]
  %v922 = vld [vmem:[%s3 + $0x268] sm:$0xff]
  %v923 = vld [vmem:[%s3 + $0x270] sm:$0xff]
  %v924 = vld [vmem:[%s3 + $0x278] sm:$0xff]
  %v925 = vld [vmem:[%s3 + $0x280] sm:$0xff]
  %v926 = vld [vmem:[%s3 + $0x288] sm:$0xff]
  %v927 = vld [vmem:[%s3 + $0x290] sm:$0xff]
  %v928 = vld [vmem:[%s3 + $0x298] sm:$0xff]
  %v929 = vld [vmem:[%s3 + $0x2a0] sm:$0xff]
  %v930 = vld [vmem:[%s3 + $0x2a8] sm:$0xff]
  %v931 = vld [vmem:[%s3 + $0x2b0] sm:$0xff]
  %v932 = vld [vmem:[%s3 + $0x2b8] sm:$0xff]
  %v933 = vld [vmem:[%s3 + $0x2c0] sm:$0xff]
  %v934 = vld [vmem:[%s3 + $0x2c8] sm:$0xff]
  %v935 = vld [vmem:[%s3 + $0x2d0] sm:$0xff]
  %v936 = vld [vmem:[%s3 + $0x2d8] sm:$0xff]
  %v937 = vld [vmem:[%s3 + $0x2e0] sm:$0xff]
  %v938 = vld [vmem:[%s3 + $0x2e8] sm:$0xff]
  %v939 = vld [vmem:[%s3 + $0x2f0] sm:$0xff]
  %v940 = vld [vmem:[%s3 + $0x2f8] sm:$0xff]
  %v941 = vld [vmem:[%s3 + $0x300] sm:$0xff]
  %v942 = vld [vmem:[%s3 + $0x308] sm:$0xff]
  %v943 = vld [vmem:[%s3 + $0x310] sm:$0xff]
  %v944 = vld [vmem:[%s3 + $0x318] sm:$0xff]
  %v945 = vld [vmem:[%s3 + $0x320] sm:$0xff]
  %v946 = vld [vmem:[%s3 + $0x328] sm:$0xff]
  %v947 = vld [vmem:[%s3 + $0x330] sm:$0xff]
  %v948 = vld [vmem:[%s3 + $0x338] sm:$0xff]
  %v949 = vld [vmem:[%s3 + $0x340] sm:$0xff]
  %v950 = vld [vmem:[%s3 + $0x348] sm:$0xff]
  %v951 = vld [vmem:[%s3 + $0x350] sm:$0xff]
  %v952 = vld [vmem:[%s3 + $0x358] sm:$0xff]
  %v953 = vld [vmem:[%s3 + $0x360] sm:$0xff]
  %v954 = vld [vmem:[%s3 + $0x368] sm:$0xff]
  %v955 = vld [vmem:[%s3 + $0x370] sm:$0xff]
  %v956 = vld [vmem:[%s3 + $0x378] sm:$0xff]
  %v957 = vld [vmem:[%s3 + $0x380] sm:$0xff]
  %v958 = vld [vmem:[%s3 + $0x388] sm:$0xff]
  %v959 = vld [vmem:[%s3 + $0x390] sm:$0xff]
  %v960 = vld [vmem:[%s3 + $0x398] sm:$0xff]
  %v961 = vld [vmem:[%s3 + $0x3a0] sm:$0xff]
  %v962 = vld [vmem:[%s3 + $0x3a8] sm:$0xff]
  %v963 = vld [vmem:[%s3 + $0x3b0] sm:$0xff]
  %v964 = vld [vmem:[%s3 + $0x3b8] sm:$0xff]
  %v965 = vld [vmem:[%s3 + $0x3c0] sm:$0xff]
  %v966 = vld [vmem:[%s3 + $0x3c8] sm:$0xff]
  %v967 = vld [vmem:[%s3 + $0x3d0] sm:$0xff]
  %v968 = vld [vmem:[%s3 + $0x3d8] sm:$0xff]
  %v969 = vld [vmem:[%s3 + $0x3e0] sm:$0xff]
  %v970 = vld [vmem:[%s3 + $0x3e8] sm:$0xff]
  %v971 = vld [vmem:[%s3 + $0x3f0] sm:$0xff]
  %v972 = vld [vmem:[%s3 + $0x3f8] sm:$0xff]
  %v973 = vld [vmem:[%s3 + $0x400] sm:$0xff]
  %v974 = vld [vmem:[%s3 + $0x408] sm:$0xff]
  %v975 = vld [vmem:[%s3 + $0x410] sm:$0xff]
  %v976 = vld [vmem:[%s3 + $0x418] sm:$0xff]
  %v977 = vld [vmem:[%s3 + $0x420] sm:$0xff]
  %v978 = vld [vmem:[%s3 + $0x428] sm:$0xff]
  %v979 = vld [vmem:[%s3 + $0x430] sm:$0xff]
  %v980 = vld [vmem:[%s3 + $0x438] sm:$0xff]
  %v981 = vld [vmem:[%s3 + $0x440] sm:$0xff]
  %v982 = vld [vmem:[%s3 + $0x448] sm:$0xff]
  %v983 = vld [vmem:[%s3 + $0x450] sm:$0xff]
  %v984 = vld [vmem:[%s3 + $0x458] sm:$0xff]
  %v985 = vld [vmem:[%s3 + $0x460] sm:$0xff]
  %v986 = vld [vmem:[%s3 + $0x468] sm:$0xff]
  %v987 = vld [vmem:[%s3 + $0x470] sm:$0xff]
  %v988 = vld [vmem:[%s3 + $0x478] sm:$0xff]
  %v989 = vld [vmem:[%s3 + $0x480] sm:$0xff]
  %v990 = vld [vmem:[%s3 + $0x488] sm:$0xff]
  %v991 = vld [vmem:[%s3 + $0x490] sm:$0xff]
  %v992 = vld [vmem:[%s3 + $0x498] sm:$0xff]
  %v993 = vld [vmem:[%s3 + $0x4a0] sm:$0xff]
  %v994 = vld [vmem:[%s3 + $0x4a8] sm:$0xff]
  %v995 = vld [vmem:[%s3 + $0x4b0] sm:$0xff]
  %v996 = vld [vmem:[%s3 + $0x4b8] sm:$0xff]
  %v997 = vld [vmem:[%s3 + $0x4c0] sm:$0xff]
  %v998 = vld [vmem:[%s3 + $0x4c8] sm:$0xff]
  %v999 = vld [vmem:[%s3 + $0x4d0] sm:$0xff]
  %v1000 = vld [vmem:[%s3 + $0x4d8] sm:$0xff]
  %v1001 = vld [vmem:[%s3 + $0x4e0] sm:$0xff]
  %v1002 = vld [vmem:[%s3 + $0x4e8] sm:$0xff]
  %v1003 = vld [vmem:[%s3 + $0x4f0] sm:$0xff]
  %v1004 = vld [vmem:[%s3 + $0x4f8] sm:$0xff]
  %v1005 = vld [vmem:[%s3 + $0x500] sm:$0xff]
  %v1006 = vld [vmem:[%s3 + $0x508] sm:$0xff]
  %v1007 = vld [vmem:[%s3 + $0x510] sm:$0xff]
  %v1008 = vld [vmem:[%s3 + $0x518] sm:$0xff]
  %v1009 = vld [vmem:[%s3 + $0x520] sm:$0xff]
  %v1010 = vld [vmem:[%s3 + $0x528] sm:$0xff]
  %v1011 = vld [vmem:[%s3 + $0x530] sm:$0xff]
  %v1012 = vld [vmem:[%s3 + $0x538] sm:$0xff]
  %v1013 = vld [vmem:[%s3 + $0x540] sm:$0xff]
  %v1014 = vld [vmem:[%s3 + $0x548] sm:$0xff]
  %v1015 = vld [vmem:[%s3 + $0x550] sm:$0xff]
  %v1016 = vld [vmem:[%s3 + $0x558] sm:$0xff]
  %v1017 = vld [vmem:[%s3 + $0x560] sm:$0xff]
  %v1018 = vld [vmem:[%s3 + $0x568] sm:$0xff]
  %v1019 = vld [vmem:[%s3 + $0x570] sm:$0xff]
  %v1020 = vld [vmem:[%s3 + $0x578] sm:$0xff]
  %v1021 = vld [vmem:[%s3 + $0x580] sm:$0xff]
  %v1022 = vld [vmem:[%s3 + $0x588] sm:$0xff]
  %v1023 = vld [vmem:[%s3 + $0x590] sm:$0xff]
  %v1024 = vld [vmem:[%s3 + $0x598] sm:$0xff]
  %v1025 = vld [vmem:[%s3 + $0x5a0] sm:$0xff]
  %v1026 = vld [vmem:[%s3 + $0x5a8] sm:$0xff]
  %v1027 = vld [vmem:[%s3 + $0x5b0] sm:$0xff]
  %v1028 = vld [vmem:[%s3 + $0x5b8] sm:$0xff]
  %v1029 = vld [vmem:[%s3 + $0x5c0] sm:$0xff]
  %v1030 = vld [vmem:[%s3 + $0x5c8] sm:$0xff]
  %v1031 = vld [vmem:[%s3 + $0x5d0] sm:$0xff]
  %v1032 = vld [vmem:[%s3 + $0x5d8] sm:$0xff]
  %v1033 = vld [vmem:[%s3 + $0x5e0] sm:$0xff]
  %v1034 = vld [vmem:[%s3 + $0x5e8] sm:$0xff]
  %v1035 = vld [vmem:[%s3 + $0x5f0] sm:$0xff]
  %v1036 = vld [vmem:[%s3 + $0x5f8] sm:$0xff]
  %v1037 = vld [vmem:[%s3 + $0x600] sm:$0xff]
  %v1038 = vld [vmem:[%s3 + $0x608] sm:$0xff]
  %v1039 = vld [vmem:[%s3 + $0x610] sm:$0xff]
  %v1040 = vld [vmem:[%s3 + $0x618] sm:$0xff]
  %v1041 = vld [vmem:[%s3 + $0x620] sm:$0xff]
  %v1042 = vld [vmem:[%s3 + $0x628] sm:$0xff]
  %v1043 = vld [vmem:[%s3 + $0x630] sm:$0xff]
  %v1044 = vld [vmem:[%s3 + $0x638] sm:$0xff]
  %v1045 = vld [vmem:[%s3 + $0x640] sm:$0xff]
  %v1046 = vld [vmem:[%s3 + $0x648] sm:$0xff]
  %v1047 = vld [vmem:[%s3 + $0x650] sm:$0xff]
  %v1048 = vld [vmem:[%s3 + $0x658] sm:$0xff]
  %v1049 = vld [vmem:[%s3 + $0x660] sm:$0xff]
  %v1050 = vld [vmem:[%s3 + $0x668] sm:$0xff]
  %v1051 = vld [vmem:[%s3 + $0x670] sm:$0xff]
  %v1052 = vld [vmem:[%s3 + $0x678] sm:$0xff]
  %v1053 = vld [vmem:[%s3 + $0x680] sm:$0xff]
  %v1054 = vld [vmem:[%s3 + $0x688] sm:$0xff]
  %v1055 = vld [vmem:[%s3 + $0x690] sm:$0xff]
  %v1056 = vld [vmem:[%s3 + $0x698] sm:$0xff]
  %v1057 = vld [vmem:[%s3 + $0x6a0] sm:$0xff]
  %v1058 = vld [vmem:[%s3 + $0x6a8] sm:$0xff]
  %v1059 = vld [vmem:[%s3 + $0x6b0] sm:$0xff]
  %v1060 = vld [vmem:[%s3 + $0x6b8] sm:$0xff]
  %v1061 = vld [vmem:[%s3 + $0x6c0] sm:$0xff]
  %v1062 = vld [vmem:[%s3 + $0x6c8] sm:$0xff]
  %v1063 = vld [vmem:[%s3 + $0x6d0] sm:$0xff]
  %v1064 = vld [vmem:[%s3 + $0x6d8] sm:$0xff]
  %v1065 = vld [vmem:[%s3 + $0x6e0] sm:$0xff]
  %v1066 = vld [vmem:[%s3 + $0x6e8] sm:$0xff]
  %v1067 = vld [vmem:[%s3 + $0x6f0] sm:$0xff]
  %v1068 = vld [vmem:[%s3 + $0x6f8] sm:$0xff]
  %v1069 = vld [vmem:[%s3 + $0x700] sm:$0xff]
  %v1070 = vld [vmem:[%s3 + $0x708] sm:$0xff]
  %v1071 = vld [vmem:[%s3 + $0x710] sm:$0xff]
  %v1072 = vld [vmem:[%s3 + $0x718] sm:$0xff]
  %v1073 = vld [vmem:[%s3 + $0x720] sm:$0xff]
  %v1074 = vld [vmem:[%s3 + $0x728] sm:$0xff]
  %v1075 = vld [vmem:[%s3 + $0x730] sm:$0xff]
  %v1076 = vld [vmem:[%s3 + $0x738] sm:$0xff]
  %v1077 = vld [vmem:[%s3 + $0x740] sm:$0xff]
  %v1078 = vld [vmem:[%s3 + $0x748] sm:$0xff]
  %v1079 = vld [vmem:[%s3 + $0x750] sm:$0xff]
  %v1080 = vld [vmem:[%s3 + $0x758] sm:$0xff]
  %v1081 = vld [vmem:[%s3 + $0x760] sm:$0xff]
  %v1082 = vld [vmem:[%s3 + $0x768] sm:$0xff]
  %v1083 = vld [vmem:[%s3 + $0x770] sm:$0xff]
  %v1084 = vld [vmem:[%s3 + $0x778] sm:$0xff]
  %v1085 = vld [vmem:[%s3 + $0x780] sm:$0xff]
  %v1086 = vld [vmem:[%s3 + $0x788] sm:$0xff]
  %v1087 = vld [vmem:[%s3 + $0x790] sm:$0xff]
  %v1088 = vld [vmem:[%s3 + $0x798] sm:$0xff]
  %v1089 = vld [vmem:[%s3 + $0x7a0] sm:$0xff]
  %v1090 = vld [vmem:[%s3 + $0x7a8] sm:$0xff]
  %v1091 = vld [vmem:[%s3 + $0x7b0] sm:$0xff]
  %v1092 = vld [vmem:[%s3 + $0x7b8] sm:$0xff]
  %v1093 = vld [vmem:[%s3 + $0x7c0] sm:$0xff]
  %v1094 = vld [vmem:[%s3 + $0x7c8] sm:$0xff]
  %v1095 = vld [vmem:[%s3 + $0x7d0] sm:$0xff]
  %v1096 = vld [vmem:[%s3 + $0x7d8] sm:$0xff]
  %v1097 = vld [vmem:[%s3 + $0x7e0] sm:$0xff]
  %v1098 = vld [vmem:[%s3 + $0x7e8] sm:$0xff]
  %v1099 = vld [vmem:[%s3 + $0x7f0] sm:$0xff]
  %v1100 = vld [vmem:[%s3 + $0x7f8] sm:$0xff]
  %v1101 = vld [vmem:[%s3 + $0x800] sm:$0xff]
  %v1102 = vld [vmem:[%s3 + $0x808] sm:$0xff]
  %v1103 = vld [vmem:[%s3 + $0x810] sm:$0xff]
  %v1104 = vld [vmem:[%s3 + $0x818] sm:$0xff]
  %v1105 = vld [vmem:[%s3 + $0x820] sm:$0xff]
  %v1106 = vld [vmem:[%s3 + $0x828] sm:$0xff]
  %v1107 = vld [vmem:[%s3 + $0x830] sm:$0xff]
  %v1108 = vld [vmem:[%s3 + $0x838] sm:$0xff]
  %v1109 = vld [vmem:[%s3 + $0x840] sm:$0xff]
  %v1110 = vld [vmem:[%s3 + $0x848] sm:$0xff]
  %v1111 = vld [vmem:[%s3 + $0x850] sm:$0xff]
  %v1112 = vld [vmem:[%s3 + $0x858] sm:$0xff]
  %v1113 = vld [vmem:[%s3 + $0x860] sm:$0xff]
  %v1114 = vld [vmem:[%s3 + $0x868] sm:$0xff]
  %v1115 = vld [vmem:[%s3 + $0x870] sm:$0xff]
  %v1116 = vld [vmem:[%s3 + $0x878] sm:$0xff]
  %v1117 = vld [vmem:[%s3 + $0x880] sm:$0xff]
  %v1118 = vld [vmem:[%s3 + $0x888] sm:$0xff]
  %v1119 = vld [vmem:[%s3 + $0x890] sm:$0xff]
  %v1120 = vld [vmem:[%s3 + $0x898] sm:$0xff]
  %v1121 = vld [vmem:[%s3 + $0x8a0] sm:$0xff]
  %v1122 = vld [vmem:[%s3 + $0x8a8] sm:$0xff]
  %v1123 = vld [vmem:[%s3 + $0x8b0] sm:$0xff]
  %v1124 = vld [vmem:[%s3 + $0x8b8] sm:$0xff]
  %v1125 = vld [vmem:[%s3 + $0x8c0] sm:$0xff]
  %v1126 = vld [vmem:[%s3 + $0x8c8] sm:$0xff]
  %v1127 = vld [vmem:[%s3 + $0x8d0] sm:$0xff]
  %v1128 = vld [vmem:[%s3 + $0x8d8] sm:$0xff]
  %v1129 = vld [vmem:[%s3 + $0x8e0] sm:$0xff]
  %v1130 = vld [vmem:[%s3 + $0x8e8] sm:$0xff]
  %v1131 = vld [vmem:[%s3 + $0x8f0] sm:$0xff]
  %v1132 = vld [vmem:[%s3 + $0x8f8] sm:$0xff]
  %v1133 = vld [vmem:[%s3 + $0x900] sm:$0xff]
  %v1134 = vld [vmem:[%s3 + $0x908] sm:$0xff]
  %v1135 = vld [vmem:[%s3 + $0x910] sm:$0xff]
  %v1136 = vld [vmem:[%s3 + $0x918] sm:$0xff]
  %v1137 = vld [vmem:[%s3 + $0x920] sm:$0xff]
  %v1138 = vld [vmem:[%s3 + $0x928] sm:$0xff]
  %v1139 = vld [vmem:[%s3 + $0x930] sm:$0xff]
  %v1140 = vld [vmem:[%s3 + $0x938] sm:$0xff]
  %v1141 = vld [vmem:[%s3 + $0x940] sm:$0xff]
  %v1142 = vld [vmem:[%s3 + $0x948] sm:$0xff]
  %v1143 = vld [vmem:[%s3 + $0x950] sm:$0xff]
  %v1144 = vld [vmem:[%s3 + $0x958] sm:$0xff]
  %v1145 = vld [vmem:[%s3 + $0x960] sm:$0xff]
  %v1146 = vld [vmem:[%s3 + $0x968] sm:$0xff]
  %v1147 = vld [vmem:[%s3 + $0x970] sm:$0xff]
  %v1148 = vld [vmem:[%s3 + $0x978] sm:$0xff]
  %v1149 = vld [vmem:[%s3 + $0x980] sm:$0xff]
  %v1150 = vld [vmem:[%s3 + $0x988] sm:$0xff]
  %v1151 = vld [vmem:[%s3 + $0x990] sm:$0xff]
  %v1152 = vld [vmem:[%s3 + $0x998] sm:$0xff]
  %v1153 = vld [vmem:[%s3 + $0x9a0] sm:$0xff]
  %v1154 = vld [vmem:[%s3 + $0x9a8] sm:$0xff]
  %v1155 = vld [vmem:[%s3 + $0x9b0] sm:$0xff]
  %v1156 = vld [vmem:[%s3 + $0x9b8] sm:$0xff]
  %v1157 = vld [vmem:[%s3 + $0x9c0] sm:$0xff]
  %v1158 = vld [vmem:[%s3 + $0x9c8] sm:$0xff]
  %v1159 = vld [vmem:[%s3 + $0x9d0] sm:$0xff]
  %v1160 = vld [vmem:[%s3 + $0x9d8] sm:$0xff]
  %v1161 = vld [vmem:[%s3 + $0x9e0] sm:$0xff]
  %v1162 = vld [vmem:[%s3 + $0x9e8] sm:$0xff]
  %v1163 = vld [vmem:[%s3 + $0x9f0] sm:$0xff]
  %v1164 = vld [vmem:[%s3 + $0x9f8] sm:$0xff]
  %v1165 = vld [vmem:[%s3 + $0xa00] sm:$0xff]
  %v1166 = vld [vmem:[%s3 + $0xa08] sm:$0xff]
  %v1167 = vld [vmem:[%s3 + $0xa10] sm:$0xff]
  %v1168 = vld [vmem:[%s3 + $0xa18] sm:$0xff]
  %v1169 = vld [vmem:[%s3 + $0xa20] sm:$0xff]
  %v1170 = vld [vmem:[%s3 + $0xa28] sm:$0xff]
  %v1171 = vld [vmem:[%s3 + $0xa30] sm:$0xff]
  %v1172 = vld [vmem:[%s3 + $0xa38] sm:$0xff]
  %v1173 = vld [vmem:[%s3 + $0xa40] sm:$0xff]
  %v1174 = vld [vmem:[%s3 + $0xa48] sm:$0xff]
  %v1175 = vld [vmem:[%s3 + $0xa50] sm:$0xff]
  %v1176 = vld [vmem:[%s3 + $0xa58] sm:$0xff]
  %v1177 = vld [vmem:[%s3 + $0xa60] sm:$0xff]
  %v1178 = vld [vmem:[%s3 + $0xa68] sm:$0xff]
  %v1179 = vld [vmem:[%s3 + $0xa70] sm:$0xff]
  %v1180 = vld [vmem:[%s3 + $0xa78] sm:$0xff]
  %v1181 = vld [vmem:[%s3 + $0xa80] sm:$0xff]
  %v1182 = vld [vmem:[%s3 + $0xa88] sm:$0xff]
  %v1183 = vld [vmem:[%s3 + $0xa90] sm:$0xff]
  %v1184 = vld [vmem:[%s3 + $0xa98] sm:$0xff]
  %v1185 = vld [vmem:[%s3 + $0xaa0] sm:$0xff]
  %v1186 = vld [vmem:[%s3 + $0xaa8] sm:$0xff]
  %v1187 = vld [vmem:[%s3 + $0xab0] sm:$0xff]
  %v1188 = vld [vmem:[%s3 + $0xab8] sm:$0xff]
  %v1189 = vld [vmem:[%s3 + $0xac0] sm:$0xff]
  %v1190 = vld [vmem:[%s3 + $0xac8] sm:$0xff]
  %v1191 = vld [vmem:[%s3 + $0xad0] sm:$0xff]
  %v1192 = vld [vmem:[%s3 + $0xad8] sm:$0xff]
  %v1193 = vld [vmem:[%s3 + $0xae0] sm:$0xff]
  %v1194 = vld [vmem:[%s3 + $0xae8] sm:$0xff]
  %v1195 = vld [vmem:[%s3 + $0xaf0] sm:$0xff]
  %v1196 = vld [vmem:[%s3 + $0xaf8] sm:$0xff]
  %v1197 = vld [vmem:[%s3 + $0xb00] sm:$0xff]
  %v1198 = vld [vmem:[%s3 + $0xb08] sm:$0xff]
  %v1199 = vld [vmem:[%s3 + $0xb10] sm:$0xff]
  %v1200 = vld [vmem:[%s3 + $0xb18] sm:$0xff]
  %v1201 = vld [vmem:[%s3 + $0xb20] sm:$0xff]
  %v1202 = vld [vmem:[%s3 + $0xb28] sm:$0xff]
  %v1203 = vld [vmem:[%s3 + $0xb30] sm:$0xff]
  %v1204 = vld [vmem:[%s3 + $0xb38] sm:$0xff]
  %v1205 = vld [vmem:[%s3 + $0xb40] sm:$0xff]
  %v1206 = vld [vmem:[%s3 + $0xb48] sm:$0xff]
  %v1207 = vld [vmem:[%s3 + $0xb50] sm:$0xff]
  %v1208 = vld [vmem:[%s3 + $0xb58] sm:$0xff]
  %v1209 = vld [vmem:[%s3 + $0xb60] sm:$0xff]
  %v1210 = vld [vmem:[%s3 + $0xb68] sm:$0xff]
  %v1211 = vld [vmem:[%s3 + $0xb70] sm:$0xff]
  %v1212 = vld [vmem:[%s3 + $0xb78] sm:$0xff]
  %v1213 = vld [vmem:[%s3 + $0xb80] sm:$0xff]
  %v1214 = vld [vmem:[%s3 + $0xb88] sm:$0xff]
  %v1215 = vld [vmem:[%s3 + $0xb90] sm:$0xff]
  %v1216 = vld [vmem:[%s3 + $0xb98] sm:$0xff]
  %v1217 = vld [vmem:[%s3 + $0xba0] sm:$0xff]
  %v1218 = vld [vmem:[%s3 + $0xba8] sm:$0xff]
  %v1219 = vld [vmem:[%s3 + $0xbb0] sm:$0xff]
  %v1220 = vld [vmem:[%s3 + $0xbb8] sm:$0xff]
  %v1221 = vld [vmem:[%s3 + $0xbc0] sm:$0xff]
  %v1222 = vld [vmem:[%s3 + $0xbc8] sm:$0xff]
  %v1223 = vld [vmem:[%s3 + $0xbd0] sm:$0xff]
  %v1224 = vld [vmem:[%s3 + $0xbd8] sm:$0xff]
  %v1225 = vld [vmem:[%s3 + $0xbe0] sm:$0xff]
  %v1226 = vld [vmem:[%s3 + $0xbe8] sm:$0xff]
  %v1227 = vld [vmem:[%s3 + $0xbf0] sm:$0xff]
  %v1228 = vld [vmem:[%s3 + $0xbf8] sm:$0xff]
  %v1229 = vld [vmem:[%s3 + $0xc00] sm:$0xff]
  %v1230 = vld [vmem:[%s3 + $0xc08] sm:$0xff]
  %v1231 = vld [vmem:[%s3 + $0xc10] sm:$0xff]
  %v1232 = vld [vmem:[%s3 + $0xc18] sm:$0xff]
  %v1233 = vld [vmem:[%s3 + $0xc20] sm:$0xff]
  %v1234 = vld [vmem:[%s3 + $0xc28] sm:$0xff]
  %v1235 = vld [vmem:[%s3 + $0xc30] sm:$0xff]
  %v1236 = vld [vmem:[%s3 + $0xc38] sm:$0xff]
  %v1237 = vld [vmem:[%s3 + $0xc40] sm:$0xff]
  %v1238 = vld [vmem:[%s3 + $0xc48] sm:$0xff]
  %v1239 = vld [vmem:[%s3 + $0xc50] sm:$0xff]
  %v1240 = vld [vmem:[%s3 + $0xc58] sm:$0xff]
  %v1241 = vld [vmem:[%s3 + $0xc60] sm:$0xff]
  %v1242 = vld [vmem:[%s3 + $0xc68] sm:$0xff]
  %v1243 = vld [vmem:[%s3 + $0xc70] sm:$0xff]
  %v1244 = vld [vmem:[%s3 + $0xc78] sm:$0xff]
  %v1245 = vld [vmem:[%s3 + $0xc80] sm:$0xff]
  %v1246 = vld [vmem:[%s3 + $0xc88] sm:$0xff]
  %v1247 = vld [vmem:[%s3 + $0xc90] sm:$0xff]
  %v1248 = vld [vmem:[%s3 + $0xc98] sm:$0xff]
  %v1249 = vld [vmem:[%s3 + $0xca0] sm:$0xff]
  %v1250 = vld [vmem:[%s3 + $0xca8] sm:$0xff]
  %v1251 = vld [vmem:[%s3 + $0xcb0] sm:$0xff]
  %v1252 = vld [vmem:[%s3 + $0xcb8] sm:$0xff]
  %v1253 = vld [vmem:[%s3 + $0xcc0] sm:$0xff]
  %v1254 = vld [vmem:[%s3 + $0xcc8] sm:$0xff]
  %v1255 = vld [vmem:[%s3 + $0xcd0] sm:$0xff]
  %v1256 = vld [vmem:[%s3 + $0xcd8] sm:$0xff]
  %v1257 = vld [vmem:[%s3 + $0xce0] sm:$0xff]
  %v1258 = vld [vmem:[%s3 + $0xce8] sm:$0xff]
  %v1259 = vld [vmem:[%s3 + $0xcf0] sm:$0xff]
  %v1260 = vld [vmem:[%s3 + $0xcf8] sm:$0xff]
  %v1261 = vld [vmem:[%s3 + $0xd00] sm:$0xff]
  %v1262 = vld [vmem:[%s3 + $0xd08] sm:$0xff]
  %v1263 = vld [vmem:[%s3 + $0xd10] sm:$0xff]
  %v1264 = vld [vmem:[%s3 + $0xd18] sm:$0xff]
  %v1265 = vld [vmem:[%s3 + $0xd20] sm:$0xff]
  %v1266 = vld [vmem:[%s3 + $0xd28] sm:$0xff]
  %v1267 = vld [vmem:[%s3 + $0xd30] sm:$0xff]
  %v1268 = vld [vmem:[%s3 + $0xd38] sm:$0xff]
  %v1269 = vld [vmem:[%s3 + $0xd40] sm:$0xff]
  %v1270 = vld [vmem:[%s3 + $0xd48] sm:$0xff]
  %v1271 = vld [vmem:[%s3 + $0xd50] sm:$0xff]
  %v1272 = vld [vmem:[%s3 + $0xd58] sm:$0xff]
  %v1273 = vld [vmem:[%s3 + $0xd60] sm:$0xff]
  %v1274 = vld [vmem:[%s3 + $0xd68] sm:$0xff]
  %v1275 = vld [vmem:[%s3 + $0xd70] sm:$0xff]
  %v1276 = vld [vmem:[%s3 + $0xd78] sm:$0xff]
  %v1277 = vld [vmem:[%s3 + $0xd80] sm:$0xff]
  %v1278 = vld [vmem:[%s3 + $0xd88] sm:$0xff]
  %v1279 = vld [vmem:[%s3 + $0xd90] sm:$0xff]
  %v1280 = vld [vmem:[%s3 + $0xd98] sm:$0xff]
  %v1281 = vld [vmem:[%s3 + $0xda0] sm:$0xff]
  %v1282 = vld [vmem:[%s3 + $0xda8] sm:$0xff]
  %v1283 = vld [vmem:[%s3 + $0xdb0] sm:$0xff]
  %v1284 = vld [vmem:[%s3 + $0xdb8] sm:$0xff]
  %v1285 = vld [vmem:[%s3 + $0xdc0] sm:$0xff]
  %v1286 = vld [vmem:[%s3 + $0xdc8] sm:$0xff]
  %v1287 = vld [vmem:[%s3 + $0xdd0] sm:$0xff]
  %v1288 = vld [vmem:[%s3 + $0xdd8] sm:$0xff]
  %v1289 = vld [vmem:[%s3 + $0xde0] sm:$0xff]
  %v1290 = vld [vmem:[%s3 + $0xde8] sm:$0xff]
  %v1291 = vld [vmem:[%s3 + $0xdf0] sm:$0xff]
  %v1292 = vld [vmem:[%s3 + $0xdf8] sm:$0xff]
  %v1293 = vld [vmem:[%s3 + $0xe00] sm:$0xff]
  %v1294 = vld [vmem:[%s3 + $0xe08] sm:$0xff]
  %v1295 = vld [vmem:[%s3 + $0xe10] sm:$0xff]
  %v1296 = vld [vmem:[%s3 + $0xe18] sm:$0xff]
  %v1297 = vld [vmem:[%s3 + $0xe20] sm:$0xff]
  %v1298 = vld [vmem:[%s3 + $0xe28] sm:$0xff]
  %v1299 = vld [vmem:[%s3 + $0xe30] sm:$0xff]
  %v1300 = vld [vmem:[%s3 + $0xe38] sm:$0xff]
  %v1301 = vld [vmem:[%s3 + $0xe40] sm:$0xff]
  %v1302 = vld [vmem:[%s3 + $0xe48] sm:$0xff]
  %v1303 = vld [vmem:[%s3 + $0xe50] sm:$0xff]
  %v1304 = vld [vmem:[%s3 + $0xe58] sm:$0xff]
  %v1305 = vld [vmem:[%s3 + $0xe60] sm:$0xff]
  %v1306 = vld [vmem:[%s3 + $0xe68] sm:$0xff]
  %v1307 = vld [vmem:[%s3 + $0xe70] sm:$0xff]
  %v1308 = vld [vmem:[%s3 + $0xe78] sm:$0xff]
  %v1309 = vld [vmem:[%s3 + $0xe80] sm:$0xff]
  %v1310 = vld [vmem:[%s3 + $0xe88] sm:$0xff]
  %v1311 = vld [vmem:[%s3 + $0xe90] sm:$0xff]
  %v1312 = vld [vmem:[%s3 + $0xe98] sm:$0xff]
  %v1313 = vld [vmem:[%s3 + $0xea0] sm:$0xff]
  %v1314 = vld [vmem:[%s3 + $0xea8] sm:$0xff]
  %v1315 = vld [vmem:[%s3 + $0xeb0] sm:$0xff]
  %v1316 = vld [vmem:[%s3 + $0xeb8] sm:$0xff]
  %v1317 = vld [vmem:[%s3 + $0xec0] sm:$0xff]
  %v1318 = vld [vmem:[%s3 + $0xec8] sm:$0xff]
  %v1319 = vld [vmem:[%s3 + $0xed0] sm:$0xff]
  %v1320 = vld [vmem:[%s3 + $0xed8] sm:$0xff]
  %v1321 = vld [vmem:[%s3 + $0xee0] sm:$0xff]
  %v1322 = vld [vmem:[%s3 + $0xee8] sm:$0xff]
  %v1323 = vld [vmem:[%s3 + $0xef0] sm:$0xff]
  %v1324 = vld [vmem:[%s3 + $0xef8] sm:$0xff]
  %v1325 = vld [vmem:[%s3 + $0xf00] sm:$0xff]
  %v1326 = vld [vmem:[%s3 + $0xf08] sm:$0xff]
  %v1327 = vld [vmem:[%s3 + $0xf10] sm:$0xff]
  %v1328 = vld [vmem:[%s3 + $0xf18] sm:$0xff]
  %v1329 = vld [vmem:[%s3 + $0xf20] sm:$0xff]
  %v1330 = vld [vmem:[%s3 + $0xf28] sm:$0xff]
  %v1331 = vld [vmem:[%s3 + $0xf30] sm:$0xff]
  %v1332 = vld [vmem:[%s3 + $0xf38] sm:$0xff]
  %v1333 = vld [vmem:[%s3 + $0xf40] sm:$0xff]
  %v1334 = vld [vmem:[%s3 + $0xf48] sm:$0xff]
  %v1335 = vld [vmem:[%s3 + $0xf50] sm:$0xff]
  %v1336 = vld [vmem:[%s3 + $0xf58] sm:$0xff]
  %v1337 = vld [vmem:[%s3 + $0xf60] sm:$0xff]
  %v1338 = vld [vmem:[%s3 + $0xf68] sm:$0xff]
  %v1339 = vld [vmem:[%s3 + $0xf70] sm:$0xff]
  %v1340 = vld [vmem:[%s3 + $0xf78] sm:$0xff]
  %v1341 = vld [vmem:[%s3 + $0xf80] sm:$0xff]
  %v1342 = vld [vmem:[%s3 + $0xf88] sm:$0xff]
  %v1343 = vld [vmem:[%s3 + $0xf90] sm:$0xff]
  %v1344 = vld [vmem:[%s3 + $0xf98] sm:$0xff]
  %v1345 = vld [vmem:[%s3 + $0xfa0] sm:$0xff]
  %v1346 = vld [vmem:[%s3 + $0xfa8] sm:$0xff]
  %v1347 = vld [vmem:[%s3 + $0xfb0] sm:$0xff]
  %v1348 = vld [vmem:[%s3 + $0xfb8] sm:$0xff]
  %v1349 = vld [vmem:[%s3 + $0xfc0] sm:$0xff]
  %v1350 = vld [vmem:[%s3 + $0xfc8] sm:$0xff]
  %v1351 = vld [vmem:[%s3 + $0xfd0] sm:$0xff]
  %v1352 = vld [vmem:[%s3 + $0xfd8] sm:$0xff]
  %v1353 = vld [vmem:[%s3 + $0xfe0] sm:$0xff]
  %v1354 = vld [vmem:[%s3 + $0xfe8] sm:$0xff]
  %v1355 = vld [vmem:[%s3 + $0xff0] sm:$0xff]
  %v1356 = vld [vmem:[%s3 + $0xff8] sm:$0xff]
  %v1357 = vld [vmem:[%s3 + $0x1000] sm:$0xff]
  %v1358 = vld [vmem:[%s3 + $0x1008] sm:$0xff]
  %v1359 = vld [vmem:[%s3 + $0x1010] sm:$0xff]
  %v1360 = vld [vmem:[%s3 + $0x1018] sm:$0xff]
  %v1361 = vld [vmem:[%s3 + $0x1020] sm:$0xff]
  %v1362 = vld [vmem:[%s3 + $0x1028] sm:$0xff]
  %v1363 = vld [vmem:[%s3 + $0x1030] sm:$0xff]
  %v1364 = vld [vmem:[%s3 + $0x1038] sm:$0xff]
  %v1365 = vld [vmem:[%s3 + $0x1040] sm:$0xff]
  %v1366 = vld [vmem:[%s3 + $0x1048] sm:$0xff]
  %v1367 = vld [vmem:[%s3 + $0x1050] sm:$0xff]
  %v1368 = vld [vmem:[%s3 + $0x1058] sm:$0xff]
  %v1369 = vld [vmem:[%s3 + $0x1060] sm:$0xff]
  %v1370 = vld [vmem:[%s3 + $0x1068] sm:$0xff]
  %v1371 = vld [vmem:[%s3 + $0x1070] sm:$0xff]
  %v1372 = vld [vmem:[%s3 + $0x1078] sm:$0xff]
  %v1373 = vld [vmem:[%s3 + $0x1080] sm:$0xff]
  %v1374 = vld [vmem:[%s3 + $0x1088] sm:$0xff]
  %v1375 = vld [vmem:[%s3 + $0x1090] sm:$0xff]
  %v1376 = vld [vmem:[%s3 + $0x1098] sm:$0xff]
  %v1377 = vld [vmem:[%s3 + $0x10a0] sm:$0xff]
  %v1378 = vld [vmem:[%s3 + $0x10a8] sm:$0xff]
  %v1379 = vld [vmem:[%s3 + $0x10b0] sm:$0xff]
  %v1380 = vld [vmem:[%s3 + $0x10b8] sm:$0xff]
  %v1381 = vld [vmem:[%s3 + $0x10c0] sm:$0xff]
  %v1382 = vld [vmem:[%s3 + $0x10c8] sm:$0xff]
  %v1383 = vld [vmem:[%s3 + $0x10d0] sm:$0xff]
  %v1384 = vld [vmem:[%s3 + $0x10d8] sm:$0xff]
  %v1385 = vld [vmem:[%s3 + $0x10e0] sm:$0xff]
  %v1386 = vld [vmem:[%s3 + $0x10e8] sm:$0xff]
  %v1387 = vld [vmem:[%s3 + $0x10f0] sm:$0xff]
  %v1388 = vld [vmem:[%s3 + $0x10f8] sm:$0xff]
  %v1389 = vld [vmem:[%s3 + $0x1100] sm:$0xff]
  %v1390 = vld [vmem:[%s3 + $0x1108] sm:$0xff]
  %v1391 = vld [vmem:[%s3 + $0x1110] sm:$0xff]
  %v1392 = vld [vmem:[%s3 + $0x1118] sm:$0xff]
  %v1393 = vld [vmem:[%s3 + $0x1120] sm:$0xff]
  %v1394 = vld [vmem:[%s3 + $0x1128] sm:$0xff]
  %v1395 = vld [vmem:[%s3 + $0x1130] sm:$0xff]
  %v1396 = vld [vmem:[%s3 + $0x1138] sm:$0xff]
  %v1397 = vld [vmem:[%s3 + $0x1140] sm:$0xff]
  %v1398 = vld [vmem:[%s3 + $0x1148] sm:$0xff]
  %v1399 = vld [vmem:[%s3 + $0x1150] sm:$0xff]
  %v1400 = vld [vmem:[%s3 + $0x1158] sm:$0xff]
  %v1401 = vld [vmem:[%s3 + $0x1160] sm:$0xff]
  %v1402 = vld [vmem:[%s3 + $0x1168] sm:$0xff]
  %v1403 = vld [vmem:[%s3 + $0x1170] sm:$0xff]
  %v1404 = vld [vmem:[%s3 + $0x1178] sm:$0xff]
  %v1405 = vld [vmem:[%s3 + $0x1180] sm:$0xff]
  %v1406 = vld [vmem:[%s3 + $0x1188] sm:$0xff]
  %v1407 = vld [vmem:[%s3 + $0x1190] sm:$0xff]
  %v1408 = vld [vmem:[%s3 + $0x1198] sm:$0xff]
  %v1409 = vld [vmem:[%s3 + $0x11a0] sm:$0xff]
  %v1410 = vld [vmem:[%s3 + $0x11a8] sm:$0xff]
  %v1411 = vld [vmem:[%s3 + $0x11b0] sm:$0xff]
  %v1412 = vld [vmem:[%s3 + $0x11b8] sm:$0xff]
  %v1413 = vld [vmem:[%s3 + $0x11c0] sm:$0xff]
  %v1414 = vld [vmem:[%s3 + $0x11c8] sm:$0xff]
  %v1415 = vld [vmem:[%s3 + $0x11d0] sm:$0xff]
  %v1416 = vld [vmem:[%s3 + $0x11d8] sm:$0xff]
  %v1417 = vld [vmem:[%s3 + $0x11e0] sm:$0xff]
  %v1418 = vld [vmem:[%s3 + $0x11e8] sm:$0xff]
  %v1419 = vld [vmem:[%s3 + $0x11f0] sm:$0xff]
  %v1420 = vld [vmem:[%s3 + $0x11f8] sm:$0xff]
  %v1421 = vld [vmem:[%s3 + $0x1200] sm:$0xff]
  %v1422 = vld [vmem:[%s3 + $0x1208] sm:$0xff]
  %v1423 = vld [vmem:[%s3 + $0x1210] sm:$0xff]
  %v1424 = vld [vmem:[%s3 + $0x1218] sm:$0xff]
  %v1425 = vld [vmem:[%s3 + $0x1220] sm:$0xff]
  %v1426 = vld [vmem:[%s3 + $0x1228] sm:$0xff]
  %v1427 = vld [vmem:[%s3 + $0x1230] sm:$0xff]
  %v1428 = vld [vmem:[%s3 + $0x1238] sm:$0xff]
  %v1429 = vld [vmem:[%s3 + $0x1240] sm:$0xff]
  %v1430 = vld [vmem:[%s3 + $0x1248] sm:$0xff]
  %v1431 = vld [vmem:[%s3 + $0x1250] sm:$0xff]
  %v1432 = vld [vmem:[%s3 + $0x1258] sm:$0xff]
  %v1433 = vld [vmem:[%s3 + $0x1260] sm:$0xff]
  %v1434 = vld [vmem:[%s3 + $0x1268] sm:$0xff]
  %v1435 = vld [vmem:[%s3 + $0x1270] sm:$0xff]
  %v1436 = vld [vmem:[%s3 + $0x1278] sm:$0xff]
  %v1437 = vld [vmem:[%s3 + $0x1280] sm:$0xff]
  %v1438 = vld [vmem:[%s3 + $0x1288] sm:$0xff]
  %v1439 = vld [vmem:[%s3 + $0x1290] sm:$0xff]
  %v1440 = vld [vmem:[%s3 + $0x1298] sm:$0xff]
  %v1441 = vld [vmem:[%s3 + $0x12a0] sm:$0xff]
  %v1442 = vld [vmem:[%s3 + $0x12a8] sm:$0xff]
  %v1443 = vld [vmem:[%s3 + $0x12b0] sm:$0xff]
  %v1444 = vld [vmem:[%s3 + $0x12b8] sm:$0xff]
  %v1445 = vld [vmem:[%s3 + $0x12c0] sm:$0xff]
  %v1446 = vld [vmem:[%s3 + $0x12c8] sm:$0xff]
  %v1447 = vld [vmem:[%s3 + $0x12d0] sm:$0xff]
  %v1448 = vld [vmem:[%s3 + $0x12d8] sm:$0xff]
  %v1449 = vld [vmem:[%s3 + $0x12e0] sm:$0xff]
  %v1450 = vld [vmem:[%s3 + $0x12e8] sm:$0xff]
  %v1451 = vld [vmem:[%s3 + $0x12f0] sm:$0xff]
  %v1452 = vld [vmem:[%s3 + $0x12f8] sm:$0xff]
  %v1453 = vld [vmem:[%s3 + $0x1300] sm:$0xff]
  %v1454 = vld [vmem:[%s3 + $0x1308] sm:$0xff]
  %v1455 = vld [vmem:[%s3 + $0x1310] sm:$0xff]
  %v1456 = vld [vmem:[%s3 + $0x1318] sm:$0xff]
  %v1457 = vld [vmem:[%s3 + $0x1320] sm:$0xff]
  %v1458 = vld [vmem:[%s3 + $0x1328] sm:$0xff]
  %v1459 = vld [vmem:[%s3 + $0x1330] sm:$0xff]
  %v1460 = vld [vmem:[%s3 + $0x1338] sm:$0xff]
  %v1461 = vld [vmem:[%s3 + $0x1340] sm:$0xff]
  %v1462 = vld [vmem:[%s3 + $0x1348] sm:$0xff]
  %v1463 = vld [vmem:[%s3 + $0x1350] sm:$0xff]
  %v1464 = vld [vmem:[%s3 + $0x1358] sm:$0xff]
  %v1465 = vld [vmem:[%s3 + $0x1360] sm:$0xff]
  %v1466 = vld [vmem:[%s3 + $0x1368] sm:$0xff]
  %v1467 = vld [vmem:[%s3 + $0x1370] sm:$0xff]
  %v1468 = vld [vmem:[%s3 + $0x1378] sm:$0xff]
  %v1469 = vld [vmem:[%s3 + $0x1380] sm:$0xff]
  %v1470 = vld [vmem:[%s3 + $0x1388] sm:$0xff]
  %v1471 = vld [vmem:[%s3 + $0x1390] sm:$0xff]
  %v1472 = vld [vmem:[%s3 + $0x1398] sm:$0xff]
  %v1473 = vld [vmem:[%s3 + $0x13a0] sm:$0xff]
  %v1474 = vld [vmem:[%s3 + $0x13a8] sm:$0xff]
  %v1475 = vld [vmem:[%s3 + $0x13b0] sm:$0xff]
  %v1476 = vld [vmem:[%s3 + $0x13b8] sm:$0xff]
  %v1477 = vld [vmem:[%s3 + $0x13c0] sm:$0xff]
  %v1478 = vld [vmem:[%s3 + $0x13c8] sm:$0xff]
  %v1479 = vld [vmem:[%s3 + $0x13d0] sm:$0xff]
  %v1480 = vld [vmem:[%s3 + $0x13d8] sm:$0xff]
  %v1481 = vld [vmem:[%s3 + $0x13e0] sm:$0xff]
  %v1482 = vld [vmem:[%s3 + $0x13e8] sm:$0xff]
  %v1483 = vld [vmem:[%s3 + $0x13f0] sm:$0xff]
  %v1484 = vld [vmem:[%s3 + $0x13f8] sm:$0xff]
  %v1485 = vld [vmem:[%s3 + $0x1400] sm:$0xff]
  %v1486 = vld [vmem:[%s3 + $0x1408] sm:$0xff]
  %v1487 = vld [vmem:[%s3 + $0x1410] sm:$0xff]
  %v1488 = vld [vmem:[%s3 + $0x1418] sm:$0xff]
  %v1489 = vld [vmem:[%s3 + $0x1420] sm:$0xff]
  %v1490 = vld [vmem:[%s3 + $0x1428] sm:$0xff]
  %v1491 = vld [vmem:[%s3 + $0x1430] sm:$0xff]
  %v1492 = vld [vmem:[%s3 + $0x1438] sm:$0xff]
  %v1493 = vld [vmem:[%s3 + $0x1440] sm:$0xff]
  %v1494 = vld [vmem:[%s3 + $0x1448] sm:$0xff]
  %v1495 = vld [vmem:[%s3 + $0x1450] sm:$0xff]
  %v1496 = vld [vmem:[%s3 + $0x1458] sm:$0xff]
  %v1497 = vld [vmem:[%s3 + $0x1460] sm:$0xff]
  %v1498 = vld [vmem:[%s3 + $0x1468] sm:$0xff]
  %v1499 = vld [vmem:[%s3 + $0x1470] sm:$0xff]
  %v1500 = vld [vmem:[%s3 + $0x1478] sm:$0xff]
  %v1501 = vld [vmem:[%s3 + $0x1480] sm:$0xff]
  %v1502 = vld [vmem:[%s3 + $0x1488] sm:$0xff]
  %v1503 = vld [vmem:[%s3 + $0x1490] sm:$0xff]
  %v1504 = vld [vmem:[%s3 + $0x1498] sm:$0xff]
  %v1505 = vld [vmem:[%s3 + $0x14a0] sm:$0xff]
  %v1506 = vld [vmem:[%s3 + $0x14a8] sm:$0xff]
  %v1507 = vld [vmem:[%s3 + $0x14b0] sm:$0xff]
  %v1508 = vld [vmem:[%s3 + $0x14b8] sm:$0xff]
  %v1509 = vld [vmem:[%s3 + $0x14c0] sm:$0xff]
  %v1510 = vld [vmem:[%s3 + $0x14c8] sm:$0xff]
  %v1511 = vld [vmem:[%s3 + $0x14d0] sm:$0xff]
  %v1512 = vld [vmem:[%s3 + $0x14d8] sm:$0xff]
  %v1513 = vld [vmem:[%s3 + $0x14e0] sm:$0xff]
  %v1514 = vld [vmem:[%s3 + $0x14e8] sm:$0xff]
  %v1515 = vld [vmem:[%s3 + $0x14f0] sm:$0xff]
  %v1516 = vld [vmem:[%s3 + $0x14f8] sm:$0xff]
  %v1517 = vld [vmem:[%s3 + $0x1500] sm:$0xff]
  %v1518 = vld [vmem:[%s3 + $0x1508] sm:$0xff]
  %v1519 = vld [vmem:[%s3 + $0x1510] sm:$0xff]
  %v1520 = vld [vmem:[%s3 + $0x1518] sm:$0xff]
  %v1521 = vld [vmem:[%s3 + $0x1520] sm:$0xff]
  %v1522 = vld [vmem:[%s3 + $0x1528] sm:$0xff]
  %v1523 = vld [vmem:[%s3 + $0x1530] sm:$0xff]
  %v1524 = vld [vmem:[%s3 + $0x1538] sm:$0xff]
  %v1525 = vld [vmem:[%s3 + $0x1540] sm:$0xff]
  %v1526 = vld [vmem:[%s3 + $0x1548] sm:$0xff]
  %v1527 = vld [vmem:[%s3 + $0x1550] sm:$0xff]
  %v1528 = vld [vmem:[%s3 + $0x1558] sm:$0xff]
  %v1529 = vld [vmem:[%s3 + $0x1560] sm:$0xff]
  %v1530 = vld [vmem:[%s3 + $0x1568] sm:$0xff]
  %v1531 = vld [vmem:[%s3 + $0x1570] sm:$0xff]
  %v1532 = vld [vmem:[%s3 + $0x1578] sm:$0xff]
  %v1533 = vld [vmem:[%s3 + $0x1580] sm:$0xff]
  %v1534 = vld [vmem:[%s3 + $0x1588] sm:$0xff]
  %v1535 = vld [vmem:[%s3 + $0x1590] sm:$0xff]
  %v1536 = vld [vmem:[%s3 + $0x1598] sm:$0xff]
  %v1537 = vld [vmem:[%s3 + $0x15a0] sm:$0xff]
  %v1538 = vld [vmem:[%s3 + $0x15a8] sm:$0xff]
  %v1539 = vld [vmem:[%s3 + $0x15b0] sm:$0xff]
  %v1540 = vld [vmem:[%s3 + $0x15b8] sm:$0xff]
  %v1541 = vld [vmem:[%s3 + $0x15c0] sm:$0xff]
  %v1542 = vld [vmem:[%s3 + $0x15c8] sm:$0xff]
  %v1543 = vld [vmem:[%s3 + $0x15d0] sm:$0xff]
  %v1544 = vld [vmem:[%s3 + $0x15d8] sm:$0xff]
  %v1545 = vld [vmem:[%s3 + $0x15e0] sm:$0xff]
  %v1546 = vld [vmem:[%s3 + $0x15e8] sm:$0xff]
  %v1547 = vld [vmem:[%s3 + $0x15f0] sm:$0xff]
  %v1548 = vld [vmem:[%s3 + $0x15f8] sm:$0xff]
  %v1549 = vld [vmem:[%s3 + $0x1600] sm:$0xff]
  %v1550 = vld [vmem:[%s3 + $0x1608] sm:$0xff]
  %v1551 = vld [vmem:[%s3 + $0x1610] sm:$0xff]
  %v1552 = vld [vmem:[%s3 + $0x1618] sm:$0xff]
  %v1553 = vld [vmem:[%s3 + $0x1620] sm:$0xff]
  %v1554 = vld [vmem:[%s3 + $0x1628] sm:$0xff]
  %v1555 = vld [vmem:[%s3 + $0x1630] sm:$0xff]
  %v1556 = vld [vmem:[%s3 + $0x1638] sm:$0xff]
  %v1557 = vld [vmem:[%s3 + $0x1640] sm:$0xff]
  %v1558 = vld [vmem:[%s3 + $0x1648] sm:$0xff]
  %v1559 = vld [vmem:[%s3 + $0x1650] sm:$0xff]
  %v1560 = vld [vmem:[%s3 + $0x1658] sm:$0xff]
  %v1561 = vld [vmem:[%s3 + $0x1660] sm:$0xff]
  %v1562 = vld [vmem:[%s3 + $0x1668] sm:$0xff]
  %v1563 = vld [vmem:[%s3 + $0x1670] sm:$0xff]
  %v1564 = vld [vmem:[%s3 + $0x1678] sm:$0xff]
  %v1565 = vld [vmem:[%s3 + $0x1680] sm:$0xff]
  %v1566 = vld [vmem:[%s3 + $0x1688] sm:$0xff]
  %v1567 = vld [vmem:[%s3 + $0x1690] sm:$0xff]
  %v1568 = vld [vmem:[%s3 + $0x1698] sm:$0xff]
  %v1569 = vld [vmem:[%s3 + $0x16a0] sm:$0xff]
  %v1570 = vld [vmem:[%s3 + $0x16a8] sm:$0xff]
  %v1571 = vld [vmem:[%s3 + $0x16b0] sm:$0xff]
  %v1572 = vld [vmem:[%s3 + $0x16b8] sm:$0xff]
  %v1573 = vld [vmem:[%s3 + $0x16c0] sm:$0xff]
  %v1574 = vld [vmem:[%s3 + $0x16c8] sm:$0xff]
  %v1575 = vld [vmem:[%s3 + $0x16d0] sm:$0xff]
  %v1576 = vld [vmem:[%s3 + $0x16d8] sm:$0xff]
  %v1577 = vld [vmem:[%s3 + $0x16e0] sm:$0xff]
  %v1578 = vld [vmem:[%s3 + $0x16e8] sm:$0xff]
  %v1579 = vld [vmem:[%s3 + $0x16f0] sm:$0xff]
  %v1580 = vld [vmem:[%s3 + $0x16f8] sm:$0xff]
  %v1581 = vld [vmem:[%s3 + $0x1700] sm:$0xff]
  %v1582 = vld [vmem:[%s3 + $0x1708] sm:$0xff]
  %v1583 = vld [vmem:[%s3 + $0x1710] sm:$0xff]
  %v1584 = vld [vmem:[%s3 + $0x1718] sm:$0xff]
  %v1585 = vld [vmem:[%s3 + $0x1720] sm:$0xff]
  %v1586 = vld [vmem:[%s3 + $0x1728] sm:$0xff]
  %v1587 = vld [vmem:[%s3 + $0x1730] sm:$0xff]
  %v1588 = vld [vmem:[%s3 + $0x1738] sm:$0xff]
  %v1589 = vld [vmem:[%s3 + $0x1740] sm:$0xff]
  %v1590 = vld [vmem:[%s3 + $0x1748] sm:$0xff]
  %v1591 = vld [vmem:[%s3 + $0x1750] sm:$0xff]
  %v1592 = vld [vmem:[%s3 + $0x1758] sm:$0xff]
  %v1593 = vld [vmem:[%s3 + $0x1760] sm:$0xff]
  %v1594 = vld [vmem:[%s3 + $0x1768] sm:$0xff]
  %v1595 = vld [vmem:[%s3 + $0x1770] sm:$0xff]
  %v1596 = vld [vmem:[%s3 + $0x1778] sm:$0xff]
  %v1597 = vld [vmem:[%s3 + $0x1780] sm:$0xff]
  %v1598 = vld [vmem:[%s3 + $0x1788] sm:$0xff]
  %v1599 = vld [vmem:[%s3 + $0x1790] sm:$0xff]
  %v1600 = vld [vmem:[%s3 + $0x1798] sm:$0xff]
  %v1601 = vld [vmem:[%s3 + $0x17a0] sm:$0xff]
  %v1602 = vld [vmem:[%s3 + $0x17a8] sm:$0xff]
  %v1603 = vld [vmem:[%s3 + $0x17b0] sm:$0xff]
  %v1604 = vld [vmem:[%s3 + $0x17b8] sm:$0xff]
  %v1605 = vld [vmem:[%s3 + $0x17c0] sm:$0xff]
  %v1606 = vld [vmem:[%s3 + $0x17c8] sm:$0xff]
  %v1607 = vld [vmem:[%s3 + $0x17d0] sm:$0xff]
  %v1608 = vld [vmem:[%s3 + $0x17d8] sm:$0xff]
  %v1609 = vld [vmem:[%s3 + $0x17e0] sm:$0xff]
  %v1610 = vld [vmem:[%s3 + $0x17e8] sm:$0xff]
  %v1611 = vld [vmem:[%s3 + $0x17f0] sm:$0xff]
  %v1612 = vld [vmem:[%s3 + $0x17f8] sm:$0xff]
  %v1613 = vld [vmem:[%s3 + $0x1800] sm:$0xff]
  %v1614 = vld [vmem:[%s3 + $0x1808] sm:$0xff]
  %v1615 = vld [vmem:[%s3 + $0x1810] sm:$0xff]
  %v1616 = vld [vmem:[%s3 + $0x1818] sm:$0xff]
  %v1617 = vld [vmem:[%s3 + $0x1820] sm:$0xff]
  %v1618 = vld [vmem:[%s3 + $0x1828] sm:$0xff]
  %v1619 = vld [vmem:[%s3 + $0x1830] sm:$0xff]
  %v1620 = vld [vmem:[%s3 + $0x1838] sm:$0xff]
  %v1621 = vld [vmem:[%s3 + $0x1840] sm:$0xff]
  %v1622 = vld [vmem:[%s3 + $0x1848] sm:$0xff]
  %v1623 = vld [vmem:[%s3 + $0x1850] sm:$0xff]
  %v1624 = vld [vmem:[%s3 + $0x1858] sm:$0xff]
  %v1625 = vld [vmem:[%s3 + $0x1860] sm:$0xff]
  %v1626 = vld [vmem:[%s3 + $0x1868] sm:$0xff]
  %v1627 = vld [vmem:[%s3 + $0x1870] sm:$0xff]
  %v1628 = vld [vmem:[%s3 + $0x1878] sm:$0xff]
  %v1629 = vld [vmem:[%s3 + $0x1880] sm:$0xff]
  %v1630 = vld [vmem:[%s3 + $0x1888] sm:$0xff]
  %v1631 = vld [vmem:[%s3 + $0x1890] sm:$0xff]
  %v1632 = vld [vmem:[%s3 + $0x1898] sm:$0xff]
  %v1633 = vld [vmem:[%s3 + $0x18a0] sm:$0xff]
  %v1634 = vld [vmem:[%s3 + $0x18a8] sm:$0xff]
  %v1635 = vld [vmem:[%s3 + $0x18b0] sm:$0xff]
  %v1636 = vld [vmem:[%s3 + $0x18b8] sm:$0xff]
  %v1637 = vld [vmem:[%s3 + $0x18c0] sm:$0xff]
  %v1638 = vld [vmem:[%s3 + $0x18c8] sm:$0xff]
  %v1639 = vld [vmem:[%s3 + $0x18d0] sm:$0xff]
  %v1640 = vld [vmem:[%s3 + $0x18d8] sm:$0xff]
  %v1641 = vld [vmem:[%s3 + $0x18e0] sm:$0xff]
  %v1642 = vld [vmem:[%s3 + $0x18e8] sm:$0xff]
  %v1643 = vld [vmem:[%s3 + $0x18f0] sm:$0xff]
  %v1644 = vld [vmem:[%s3 + $0x18f8] sm:$0xff]
  %v1645 = vld [vmem:[%s3 + $0x1900] sm:$0xff]
  %v1646 = vld [vmem:[%s3 + $0x1908] sm:$0xff]
  %v1647 = vld [vmem:[%s3 + $0x1910] sm:$0xff]
  %v1648 = vld [vmem:[%s3 + $0x1918] sm:$0xff]
  %v1649 = vld [vmem:[%s3 + $0x1920] sm:$0xff]
  %v1650 = vld [vmem:[%s3 + $0x1928] sm:$0xff]
  %v1651 = vld [vmem:[%s3 + $0x1930] sm:$0xff]
  %v1652 = vld [vmem:[%s3 + $0x1938] sm:$0xff]
  %v1653 = vld [vmem:[%s3 + $0x1940] sm:$0xff]
  %v1654 = vld [vmem:[%s3 + $0x1948] sm:$0xff]
  %v1655 = vld [vmem:[%s3 + $0x1950] sm:$0xff]
  %v1656 = vld [vmem:[%s3 + $0x1958] sm:$0xff]
  %v1657 = vld [vmem:[%s3 + $0x1960] sm:$0xff]
  %v1658 = vld [vmem:[%s3 + $0x1968] sm:$0xff]
  %v1659 = vld [vmem:[%s3 + $0x1970] sm:$0xff]
  %v1660 = vld [vmem:[%s3 + $0x1978] sm:$0xff]
  %v1661 = vld [vmem:[%s3 + $0x1980] sm:$0xff]
  %v1662 = vld [vmem:[%s3 + $0x1988] sm:$0xff]
  %v1663 = vld [vmem:[%s3 + $0x1990] sm:$0xff]
  %v1664 = vld [vmem:[%s3 + $0x1998] sm:$0xff]
  %v1665 = vld [vmem:[%s3 + $0x19a0] sm:$0xff]
  %v1666 = vld [vmem:[%s3 + $0x19a8] sm:$0xff]
  %v1667 = vld [vmem:[%s3 + $0x19b0] sm:$0xff]
  %v1668 = vld [vmem:[%s3 + $0x19b8] sm:$0xff]
  %v1669 = vld [vmem:[%s3 + $0x19c0] sm:$0xff]
  %v1670 = vld [vmem:[%s3 + $0x19c8] sm:$0xff]
  %v1671 = vld [vmem:[%s3 + $0x19d0] sm:$0xff]
  %v1672 = vld [vmem:[%s3 + $0x19d8] sm:$0xff]
  %v1673 = vld [vmem:[%s3 + $0x19e0] sm:$0xff]
  %v1674 = vld [vmem:[%s3 + $0x19e8] sm:$0xff]
  %v1675 = vld [vmem:[%s3 + $0x19f0] sm:$0xff]
  %v1676 = vld [vmem:[%s3 + $0x19f8] sm:$0xff]
  %v1677 = vld [vmem:[%s3 + $0x1a00] sm:$0xff]
  %v1678 = vld [vmem:[%s3 + $0x1a08] sm:$0xff]
  %v1679 = vld [vmem:[%s3 + $0x1a10] sm:$0xff]
  %v1680 = vld [vmem:[%s3 + $0x1a18] sm:$0xff]
  %v1681 = vld [vmem:[%s3 + $0x1a20] sm:$0xff]
  %v1682 = vld [vmem:[%s3 + $0x1a28] sm:$0xff]
  %v1683 = vld [vmem:[%s3 + $0x1a30] sm:$0xff]
  %v1684 = vld [vmem:[%s3 + $0x1a38] sm:$0xff]
  %v1685 = vld [vmem:[%s3 + $0x1a40] sm:$0xff]
  %v1686 = vld [vmem:[%s3 + $0x1a48] sm:$0xff]
  %v1687 = vld [vmem:[%s3 + $0x1a50] sm:$0xff]
  %v1688 = vld [vmem:[%s3 + $0x1a58] sm:$0xff]
  %v1689 = vld [vmem:[%s3 + $0x1a60] sm:$0xff]
  %v1690 = vld [vmem:[%s3 + $0x1a68] sm:$0xff]
  %v1691 = vld [vmem:[%s3 + $0x1a70] sm:$0xff]
  %v1692 = vld [vmem:[%s3 + $0x1a78] sm:$0xff]
  %v1693 = vld [vmem:[%s3 + $0x1a80] sm:$0xff]
  %v1694 = vld [vmem:[%s3 + $0x1a88] sm:$0xff]
  %v1695 = vld [vmem:[%s3 + $0x1a90] sm:$0xff]
  %v1696 = vld [vmem:[%s3 + $0x1a98] sm:$0xff]
  %v1697 = vld [vmem:[%s3 + $0x1aa0] sm:$0xff]
  %v1698 = vld [vmem:[%s3 + $0x1aa8] sm:$0xff]
  %v1699 = vld [vmem:[%s3 + $0x1ab0] sm:$0xff]
  %v1700 = vld [vmem:[%s3 + $0x1ab8] sm:$0xff]
  %v1701 = vld [vmem:[%s3 + $0x1ac0] sm:$0xff]
  %v1702 = vld [vmem:[%s3 + $0x1ac8] sm:$0xff]
  %v1703 = vld [vmem:[%s3 + $0x1ad0] sm:$0xff]
  %v1704 = vld [vmem:[%s3 + $0x1ad8] sm:$0xff]
  %v1705 = vld [vmem:[%s3 + $0x1ae0] sm:$0xff]
  %v1706 = vld [vmem:[%s3 + $0x1ae8] sm:$0xff]
  %v1707 = vld [vmem:[%s3 + $0x1af0] sm:$0xff]
  %v1708 = vld [vmem:[%s3 + $0x1af8] sm:$0xff]
  %v1709 = vld [vmem:[%s3 + $0x1b00] sm:$0xff]
  %v1710 = vld [vmem:[%s3 + $0x1b08] sm:$0xff]
  %v1711 = vld [vmem:[%s3 + $0x1b10] sm:$0xff]
  %v1712 = vld [vmem:[%s3 + $0x1b18] sm:$0xff]
  %v1713 = vld [vmem:[%s3 + $0x1b20] sm:$0xff]
  %v1714 = vld [vmem:[%s3 + $0x1b28] sm:$0xff]
  %v1715 = vld [vmem:[%s3 + $0x1b30] sm:$0xff]
  %v1716 = vld [vmem:[%s3 + $0x1b38] sm:$0xff]
  %v1717 = vld [vmem:[%s3 + $0x1b40] sm:$0xff]
  %v1718 = vld [vmem:[%s3 + $0x1b48] sm:$0xff]
  %v1719 = vld [vmem:[%s3 + $0x1b50] sm:$0xff]
  %v1720 = vld [vmem:[%s3 + $0x1b58] sm:$0xff]
  %v1721 = vld [vmem:[%s3 + $0x1b60] sm:$0xff]
  %v1722 = vld [vmem:[%s3 + $0x1b68] sm:$0xff]
  %v1723 = vld [vmem:[%s3 + $0x1b70] sm:$0xff]
  %v1724 = vld [vmem:[%s3 + $0x1b78] sm:$0xff]
  %v1725 = vld [vmem:[%s3 + $0x1b80] sm:$0xff]
  %v1726 = vld [vmem:[%s3 + $0x1b88] sm:$0xff]
  %v1727 = vld [vmem:[%s3 + $0x1b90] sm:$0xff]
  %v1728 = vld [vmem:[%s3 + $0x1b98] sm:$0xff]
  %v1729 = vld [vmem:[%s3 + $0x1ba0] sm:$0xff]
  %v1730 = vld [vmem:[%s3 + $0x1ba8] sm:$0xff]
  %v1731 = vld [vmem:[%s3 + $0x1bb0] sm:$0xff]
  %v1732 = vld [vmem:[%s3 + $0x1bb8] sm:$0xff]
  %v1733 = vld [vmem:[%s3 + $0x1bc0] sm:$0xff]
  %v1734 = vld [vmem:[%s3 + $0x1bc8] sm:$0xff]
  %v1735 = vld [vmem:[%s3 + $0x1bd0] sm:$0xff]
  %v1736 = vld [vmem:[%s3 + $0x1bd8] sm:$0xff]
  %v1737 = vld [vmem:[%s3 + $0x1be0] sm:$0xff]
  %v1738 = vld [vmem:[%s3 + $0x1be8] sm:$0xff]
  %v1739 = vld [vmem:[%s3 + $0x1bf0] sm:$0xff]
  %v1740 = vld [vmem:[%s3 + $0x1bf8] sm:$0xff]
  %v1741 = vld [vmem:[%s3 + $0x1c00] sm:$0xff]
  %v1742 = vld [vmem:[%s3 + $0x1c08] sm:$0xff]
  %v1743 = vld [vmem:[%s3 + $0x1c10] sm:$0xff]
  %v1744 = vld [vmem:[%s3 + $0x1c18] sm:$0xff]
  %v1745 = vld [vmem:[%s3 + $0x1c20] sm:$0xff]
  %v1746 = vld [vmem:[%s3 + $0x1c28] sm:$0xff]
  %v1747 = vld [vmem:[%s3 + $0x1c30] sm:$0xff]
  %v1748 = vld [vmem:[%s3 + $0x1c38] sm:$0xff]
  %v1749 = vld [vmem:[%s3 + $0x1c40] sm:$0xff]
  %v1750 = vld [vmem:[%s3 + $0x1c48] sm:$0xff]
  %v1751 = vld [vmem:[%s3 + $0x1c50] sm:$0xff]
  %v1752 = vld [vmem:[%s3 + $0x1c58] sm:$0xff]
  %v1753 = vld [vmem:[%s3 + $0x1c60] sm:$0xff]
  %v1754 = vld [vmem:[%s3 + $0x1c68] sm:$0xff]
  %v1755 = vld [vmem:[%s3 + $0x1c70] sm:$0xff]
  %v1756 = vld [vmem:[%s3 + $0x1c78] sm:$0xff]
  %v1757 = vld [vmem:[%s3 + $0x1c80] sm:$0xff]
  %v1758 = vld [vmem:[%s3 + $0x1c88] sm:$0xff]
  %v1759 = vld [vmem:[%s3 + $0x1c90] sm:$0xff]
  %v1760 = vld [vmem:[%s3 + $0x1c98] sm:$0xff]
  %v1761 = vld [vmem:[%s3 + $0x1ca0] sm:$0xff]
  %v1762 = vld [vmem:[%s3 + $0x1ca8] sm:$0xff]
  %v1763 = vld [vmem:[%s3 + $0x1cb0] sm:$0xff]
  %v1764 = vld [vmem:[%s3 + $0x1cb8] sm:$0xff]
  %v1765 = vld [vmem:[%s3 + $0x1cc0] sm:$0xff]
  %v1766 = vld [vmem:[%s3 + $0x1cc8] sm:$0xff]
  %v1767 = vld [vmem:[%s3 + $0x1cd0] sm:$0xff]
  %v1768 = vld [vmem:[%s3 + $0x1cd8] sm:$0xff]
  %v1769 = vld [vmem:[%s3 + $0x1ce0] sm:$0xff]
  %v1770 = vld [vmem:[%s3 + $0x1ce8] sm:$0xff]
  %v1771 = vld [vmem:[%s3 + $0x1cf0] sm:$0xff]
  %v1772 = vld [vmem:[%s3 + $0x1cf8] sm:$0xff]
  %v1773 = vld [vmem:[%s3 + $0x1d00] sm:$0xff]
  %v1774 = vld [vmem:[%s3 + $0x1d08] sm:$0xff]
  %v1775 = vld [vmem:[%s3 + $0x1d10] sm:$0xff]
  %v1776 = vld [vmem:[%s3 + $0x1d18] sm:$0xff]
  %v1777 = vld [vmem:[%s3 + $0x1d20] sm:$0xff]
  %v1778 = vld [vmem:[%s3 + $0x1d28] sm:$0xff]
  %v1779 = vld [vmem:[%s3 + $0x1d30] sm:$0xff]
  %v1780 = vld [vmem:[%s3 + $0x1d38] sm:$0xff]
  %v1781 = vld [vmem:[%s3 + $0x1d40] sm:$0xff]
  %v1782 = vld [vmem:[%s3 + $0x1d48] sm:$0xff]
  %v1783 = vld [vmem:[%s3 + $0x1d50] sm:$0xff]
  %v1784 = vld [vmem:[%s3 + $0x1d58] sm:$0xff]
  %v1785 = vld [vmem:[%s3 + $0x1d60] sm:$0xff]
  %v1786 = vld [vmem:[%s3 + $0x1d68] sm:$0xff]
  %v1787 = vld [vmem:[%s3 + $0x1d70] sm:$0xff]
  %v1788 = vld [vmem:[%s3 + $0x1d78] sm:$0xff]
  %v1789 = vld [vmem:[%s3 + $0x1d80] sm:$0xff]
  %v1790 = vld [vmem:[%s3 + $0x1d88] sm:$0xff]
  %v1791 = vld [vmem:[%s3 + $0x1d90] sm:$0xff]
  %v1792 = vld [vmem:[%s3 + $0x1d98] sm:$0xff]
  %v1793 = vld [vmem:[%s3 + $0x1da0] sm:$0xff]
  %v1794 = vld [vmem:[%s3 + $0x1da8] sm:$0xff]
  %v1795 = vld [vmem:[%s3 + $0x1db0] sm:$0xff]
  %v1796 = vld [vmem:[%s3 + $0x1db8] sm:$0xff]
  %v1797 = vld [vmem:[%s3 + $0x1dc0] sm:$0xff]
  %v1798 = vld [vmem:[%s3 + $0x1dc8] sm:$0xff]
  %v1799 = vld [vmem:[%s3 + $0x1dd0] sm:$0xff]
  %v1800 = vld [vmem:[%s3 + $0x1dd8] sm:$0xff]
  %v1801 = vld [vmem:[%s3 + $0x1de0] sm:$0xff]
  %v1802 = vld [vmem:[%s3 + $0x1de8] sm:$0xff]
  %v1803 = vld [vmem:[%s3 + $0x1df0] sm:$0xff]
  %v1804 = vld [vmem:[%s3 + $0x1df8] sm:$0xff]
  %v1805 = vld [vmem:[%s3 + $0x1e00] sm:$0xff]
  %v1806 = vld [vmem:[%s3 + $0x1e08] sm:$0xff]
  %v1807 = vld [vmem:[%s3 + $0x1e10] sm:$0xff]
  %v1808 = vld [vmem:[%s3 + $0x1e18] sm:$0xff]
  %v1809 = vld [vmem:[%s3 + $0x1e20] sm:$0xff]
  %v1810 = vld [vmem:[%s3 + $0x1e28] sm:$0xff]
  %v1811 = vld [vmem:[%s3 + $0x1e30] sm:$0xff]
  %v1812 = vld [vmem:[%s3 + $0x1e38] sm:$0xff]
  %v1813 = vld [vmem:[%s3 + $0x1e40] sm:$0xff]
  %v1814 = vld [vmem:[%s3 + $0x1e48] sm:$0xff]
  %v1815 = vld [vmem:[%s3 + $0x1e50] sm:$0xff]
  %v1816 = vld [vmem:[%s3 + $0x1e58] sm:$0xff]
  %v1817 = vld [vmem:[%s3 + $0x1e60] sm:$0xff]
  %v1818 = vld [vmem:[%s3 + $0x1e68] sm:$0xff]
  %v1819 = vld [vmem:[%s3 + $0x1e70] sm:$0xff]
  %v1820 = vld [vmem:[%s3 + $0x1e78] sm:$0xff]
  %v1821 = vld [vmem:[%s3 + $0x1e80] sm:$0xff]
  %v1822 = vld [vmem:[%s3 + $0x1e88] sm:$0xff]
  %v1823 = vld [vmem:[%s3 + $0x1e90] sm:$0xff]
  %v1824 = vld [vmem:[%s3 + $0x1e98] sm:$0xff]
  %v1825 = vld [vmem:[%s3 + $0x1ea0] sm:$0xff]
  %v1826 = vld [vmem:[%s3 + $0x1ea8] sm:$0xff]
  %v1827 = vld [vmem:[%s3 + $0x1eb0] sm:$0xff]
  %v1828 = vld [vmem:[%s3 + $0x1eb8] sm:$0xff]
  %v1829 = vld [vmem:[%s3 + $0x1ec0] sm:$0xff]
  %v1830 = vld [vmem:[%s3 + $0x1ec8] sm:$0xff]
  %v1831 = vld [vmem:[%s3 + $0x1ed0] sm:$0xff]
  %v1832 = vld [vmem:[%s3 + $0x1ed8] sm:$0xff]
  %v1833 = vld [vmem:[%s3 + $0x1ee0] sm:$0xff]
  %v1834 = vld [vmem:[%s3 + $0x1ee8] sm:$0xff]
  %v1835 = vld [vmem:[%s3 + $0x1ef0] sm:$0xff]
  %v1836 = vld [vmem:[%s3 + $0x1ef8] sm:$0xff]
  %v1837 = vld [vmem:[%s3 + $0x1f00] sm:$0xff]
  %v1838 = vld [vmem:[%s3 + $0x1f08] sm:$0xff]
  %v1839 = vld [vmem:[%s3 + $0x1f10] sm:$0xff]
  %v1840 = vld [vmem:[%s3 + $0x1f18] sm:$0xff]
  %v1841 = vld [vmem:[%s3 + $0x1f20] sm:$0xff]
  %v1842 = vld [vmem:[%s3 + $0x1f28] sm:$0xff]
  %v1843 = vld [vmem:[%s3 + $0x1f30] sm:$0xff]
  %v1844 = vld [vmem:[%s3 + $0x1f38] sm:$0xff]
  %v1845 = vld [vmem:[%s3 + $0x1f40] sm:$0xff]
  %v1846 = vld [vmem:[%s3 + $0x1f48] sm:$0xff]
  %v1847 = vld [vmem:[%s3 + $0x1f50] sm:$0xff]
  %v1848 = vld [vmem:[%s3 + $0x1f58] sm:$0xff]
  %v1849 = vld [vmem:[%s3 + $0x1f60] sm:$0xff]
  %v1850 = vld [vmem:[%s3 + $0x1f68] sm:$0xff]
  %v1851 = vld [vmem:[%s3 + $0x1f70] sm:$0xff]
  %v1852 = vld [vmem:[%s3 + $0x1f78] sm:$0xff]
  %v1853 = vld [vmem:[%s3 + $0x1f80] sm:$0xff]
  %v1854 = vld [vmem:[%s3 + $0x1f88] sm:$0xff]
  %v1855 = vld [vmem:[%s3 + $0x1f90] sm:$0xff]
  %v1856 = vld [vmem:[%s3 + $0x1f98] sm:$0xff]
  %v1857 = vld [vmem:[%s3 + $0x1fa0] sm:$0xff]
  %v1858 = vld [vmem:[%s3 + $0x1fa8] sm:$0xff]
  %v1859 = vld [vmem:[%s3 + $0x1fb0] sm:$0xff]
  %v1860 = vld [vmem:[%s3 + $0x1fb8] sm:$0xff]
  %v1861 = vld [vmem:[%s3 + $0x1fc0] sm:$0xff]
  %v1862 = vld [vmem:[%s3 + $0x1fc8] sm:$0xff]
  %v1863 = vld [vmem:[%s3 + $0x1fd0] sm:$0xff]
  %v1864 = vld [vmem:[%s3 + $0x1fd8] sm:$0xff]
  %v1865 = vld [vmem:[%s3 + $0x1fe0] sm:$0xff]
  %v1866 = vld [vmem:[%s3 + $0x1fe8] sm:$0xff]
  %v1867 = vld [vmem:[%s3 + $0x1ff0] sm:$0xff]
  %v1868 = vld [vmem:[%s3 + $0x1ff8] sm:$0xff]
  %v1869 = vld [vmem:[%s3 + $0x2000] sm:$0xff]
  %v1870 = vld [vmem:[%s3 + $0x2008] sm:$0xff]
  %v1871 = vld [vmem:[%s3 + $0x2010] sm:$0xff]
  %v1872 = vld [vmem:[%s3 + $0x2018] sm:$0xff]
  %v1873 = vld [vmem:[%s3 + $0x2020] sm:$0xff]
  %v1874 = vld [vmem:[%s3 + $0x2028] sm:$0xff]
  %v1875 = vld [vmem:[%s3 + $0x2030] sm:$0xff]
  %v1876 = vld [vmem:[%s3 + $0x2038] sm:$0xff]
  %v1877 = vld [vmem:[%s3 + $0x2040] sm:$0xff]
  %v1878 = vld [vmem:[%s3 + $0x2048] sm:$0xff]
  %v1879 = vld [vmem:[%s3 + $0x2050] sm:$0xff]
  %v1880 = vld [vmem:[%s3 + $0x2058] sm:$0xff]
  %v1881 = vld [vmem:[%s3 + $0x2060] sm:$0xff]
  %v1882 = vld [vmem:[%s3 + $0x2068] sm:$0xff]
  %v1883 = vld [vmem:[%s3 + $0x2070] sm:$0xff]
  %v1884 = vld [vmem:[%s3 + $0x2078] sm:$0xff]
  %v1885 = vld [vmem:[%s3 + $0x2080] sm:$0xff]
  %v1886 = vld [vmem:[%s3 + $0x2088] sm:$0xff]
  %v1887 = vld [vmem:[%s3 + $0x2090] sm:$0xff]
  %v1888 = vld [vmem:[%s3 + $0x2098] sm:$0xff]
  %v1889 = vld [vmem:[%s3 + $0x20a0] sm:$0xff]
  %v1890 = vld [vmem:[%s3 + $0x20a8] sm:$0xff]
  %v1891 = vld [vmem:[%s3 + $0x20b0] sm:$0xff]
  %v1892 = vld [vmem:[%s3 + $0x20b8] sm:$0xff]
  %v1893 = vld [vmem:[%s3 + $0x20c0] sm:$0xff]
  %v1894 = vld [vmem:[%s3 + $0x20c8] sm:$0xff]
  %v1895 = vld [vmem:[%s3 + $0x20d0] sm:$0xff]
  %v1896 = vld [vmem:[%s3 + $0x20d8] sm:$0xff]
  %v1897 = vld [vmem:[%s3 + $0x20e0] sm:$0xff]
  %v1898 = vld [vmem:[%s3 + $0x20e8] sm:$0xff]
  %v1899 = vld [vmem:[%s3 + $0x20f0] sm:$0xff]
  %v1900 = vld [vmem:[%s3 + $0x20f8] sm:$0xff]
  %v1901 = vld [vmem:[%s3 + $0x2100] sm:$0xff]
  %v1902 = vld [vmem:[%s3 + $0x2108] sm:$0xff]
  %v1903 = vld [vmem:[%s3 + $0x2110] sm:$0xff]
  %v1904 = vld [vmem:[%s3 + $0x2118] sm:$0xff]
  %v1905 = vld [vmem:[%s3 + $0x2120] sm:$0xff]
  %v1906 = vld [vmem:[%s3 + $0x2128] sm:$0xff]
  %v1907 = vld [vmem:[%s3 + $0x2130] sm:$0xff]
  %v1908 = vld [vmem:[%s3 + $0x2138] sm:$0xff]
  %v1909 = vld [vmem:[%s3 + $0x2140] sm:$0xff]
  %v1910 = vld [vmem:[%s3 + $0x2148] sm:$0xff]
  %v1911 = vld [vmem:[%s3 + $0x2150] sm:$0xff]
  %v1912 = vld [vmem:[%s3 + $0x2158] sm:$0xff]
  %v1913 = vld [vmem:[%s3 + $0x2160] sm:$0xff]
  %v1914 = vld [vmem:[%s3 + $0x2168] sm:$0xff]
  %v1915 = vld [vmem:[%s3 + $0x2170] sm:$0xff]
  %v1916 = vld [vmem:[%s3 + $0x2178] sm:$0xff]
  %v1917 = vld [vmem:[%s3 + $0x2180] sm:$0xff]
  %v1918 = vld [vmem:[%s3 + $0x2188] sm:$0xff]
  %v1919 = vld [vmem:[%s3 + $0x2190] sm:$0xff]
  %v1920 = vld [vmem:[%s3 + $0x2198] sm:$0xff]
  %v1921 = vld [vmem:[%s3 + $0x21a0] sm:$0xff]
  %v1922 = vld [vmem:[%s3 + $0x21a8] sm:$0xff]
  %v1923 = vld [vmem:[%s3 + $0x21b0] sm:$0xff]
  %v1924 = vld [vmem:[%s3 + $0x21b8] sm:$0xff]
  %v1925 = vld [vmem:[%s3 + $0x21c0] sm:$0xff]
  %v1926 = vld [vmem:[%s3 + $0x21c8] sm:$0xff]
  %v1927 = vld [vmem:[%s3 + $0x21d0] sm:$0xff]
  %v1928 = vld [vmem:[%s3 + $0x21d8] sm:$0xff]
  %v1929 = vld [vmem:[%s3 + $0x21e0] sm:$0xff]
  %v1930 = vld [vmem:[%s3 + $0x21e8] sm:$0xff]
  %v1931 = vld [vmem:[%s3 + $0x21f0] sm:$0xff]
  %v1932 = vld [vmem:[%s3 + $0x21f8] sm:$0xff]
  %v1933 = vld [vmem:[%s3 + $0x2200] sm:$0xff]
  %v1934 = vld [vmem:[%s3 + $0x2208] sm:$0xff]
  %v1935 = vld [vmem:[%s3 + $0x2210] sm:$0xff]
  %v1936 = vld [vmem:[%s3 + $0x2218] sm:$0xff]
  %v1937 = vld [vmem:[%s3 + $0x2220] sm:$0xff]
  %v1938 = vld [vmem:[%s3 + $0x2228] sm:$0xff]
  %v1939 = vld [vmem:[%s3 + $0x2230] sm:$0xff]
  %v1940 = vld [vmem:[%s3 + $0x2238] sm:$0xff]
  %v1941 = vld [vmem:[%s3 + $0x2240] sm:$0xff]
  %v1942 = vld [vmem:[%s3 + $0x2248] sm:$0xff]
  %v1943 = vld [vmem:[%s3 + $0x2250] sm:$0xff]
  %v1944 = vld [vmem:[%s3 + $0x2258] sm:$0xff]
  %v1945 = vld [vmem:[%s3 + $0x2260] sm:$0xff]
  %v1946 = vld [vmem:[%s3 + $0x2268] sm:$0xff]
  %v1947 = vld [vmem:[%s3 + $0x2270] sm:$0xff]
  %v1948 = vld [vmem:[%s3 + $0x2278] sm:$0xff]
  %v1949 = vld [vmem:[%s3 + $0x2280] sm:$0xff]
  %v1950 = vld [vmem:[%s3 + $0x2288] sm:$0xff]
  %v1951 = vld [vmem:[%s3 + $0x2290] sm:$0xff]
  %v1952 = vld [vmem:[%s3 + $0x2298] sm:$0xff]
  %v1953 = vld [vmem:[%s3 + $0x22a0] sm:$0xff]
  %v1954 = vld [vmem:[%s3 + $0x22a8] sm:$0xff]
  %v1955 = vld [vmem:[%s3 + $0x22b0] sm:$0xff]
  %v1956 = vld [vmem:[%s3 + $0x22b8] sm:$0xff]
  %v1957 = vld [vmem:[%s3 + $0x22c0] sm:$0xff]
  %v1958 = vld [vmem:[%s3 + $0x22c8] sm:$0xff]
  %v1959 = vld [vmem:[%s3 + $0x22d0] sm:$0xff]
  %v1960 = vld [vmem:[%s3 + $0x22d8] sm:$0xff]
  %v1961 = vld [vmem:[%s3 + $0x22e0] sm:$0xff]
  %v1962 = vld [vmem:[%s3 + $0x22e8] sm:$0xff]
  %v1963 = vld [vmem:[%s3 + $0x22f0] sm:$0xff]
  %v1964 = vld [vmem:[%s3 + $0x22f8] sm:$0xff]
  %v1965 = vld [vmem:[%s3 + $0x2300] sm:$0xff]
  %v1966 = vld [vmem:[%s3 + $0x2308] sm:$0xff]
  %v1967 = vld [vmem:[%s3 + $0x2310] sm:$0xff]
  %v1968 = vld [vmem:[%s3 + $0x2318] sm:$0xff]
  %v1969 = vld [vmem:[%s3 + $0x2320] sm:$0xff]
  %v1970 = vld [vmem:[%s3 + $0x2328] sm:$0xff]
  %v1971 = vld [vmem:[%s3 + $0x2330] sm:$0xff]
  %v1972 = vld [vmem:[%s3 + $0x2338] sm:$0xff]
  %v1973 = vld [vmem:[%s3 + $0x2340] sm:$0xff]
  %v1974 = vld [vmem:[%s3 + $0x2348] sm:$0xff]
  %v1975 = vld [vmem:[%s3 + $0x2350] sm:$0xff]
  %v1976 = vld [vmem:[%s3 + $0x2358] sm:$0xff]
  %v1977 = vld [vmem:[%s3 + $0x2360] sm:$0xff]
  %v1978 = vld [vmem:[%s3 + $0x2368] sm:$0xff]
  %v1979 = vld [vmem:[%s3 + $0x2370] sm:$0xff]
  %v1980 = vld [vmem:[%s3 + $0x2378] sm:$0xff]
  %v1981 = vld [vmem:[%s3 + $0x2380] sm:$0xff]
  %v1982 = vld [vmem:[%s3 + $0x2388] sm:$0xff]
  %v1983 = vld [vmem:[%s3 + $0x2390] sm:$0xff]
  %v1984 = vld [vmem:[%s3 + $0x2398] sm:$0xff]
  %v1985 = vld [vmem:[%s3 + $0x23a0] sm:$0xff]
  %v1986 = vld [vmem:[%s3 + $0x23a8] sm:$0xff]
  %v1987 = vld [vmem:[%s3 + $0x23b0] sm:$0xff]
  %v1988 = vld [vmem:[%s3 + $0x23b8] sm:$0xff]
  %v1989 = vld [vmem:[%s3 + $0x23c0] sm:$0xff]
  %v1990 = vld [vmem:[%s3 + $0x23c8] sm:$0xff]
  %v1991 = vld [vmem:[%s3 + $0x23d0] sm:$0xff]
  %v1992 = vld [vmem:[%s3 + $0x23d8] sm:$0xff]
  %v1993 = vld [vmem:[%s3 + $0x23e0] sm:$0xff]
  %v1994 = vld [vmem:[%s3 + $0x23e8] sm:$0xff]
  %v1995 = vld [vmem:[%s3 + $0x23f0] sm:$0xff]
  %v1996 = vld [vmem:[%s3 + $0x23f8] sm:$0xff]
  %v1997 = vld [vmem:[%s3 + $0x2400] sm:$0xff]
  %v1998 = vld [vmem:[%s3 + $0x2408] sm:$0xff]
  %v1999 = vld [vmem:[%s3 + $0x2410] sm:$0xff]
  %v2000 = vld [vmem:[%s3 + $0x2418] sm:$0xff]
  %v2001 = vld [vmem:[%s3 + $0x2420] sm:$0xff]
  %v2002 = vld [vmem:[%s3 + $0x2428] sm:$0xff]
  %v2003 = vld [vmem:[%s3 + $0x2430] sm:$0xff]
  %v2004 = vld [vmem:[%s3 + $0x2438] sm:$0xff]
  %v2005 = vld [vmem:[%s3 + $0x2440] sm:$0xff]
  %v2006 = vld [vmem:[%s3 + $0x2448] sm:$0xff]
  %v2007 = vld [vmem:[%s3 + $0x2450] sm:$0xff]
  %v2008 = vld [vmem:[%s3 + $0x2458] sm:$0xff]
  %v2009 = vld [vmem:[%s3 + $0x2460] sm:$0xff]
  %v2010 = vld [vmem:[%s3 + $0x2468] sm:$0xff]
  %v2011 = vld [vmem:[%s3 + $0x2470] sm:$0xff]
  %v2012 = vld [vmem:[%s3 + $0x2478] sm:$0xff]
  %v2013 = vld [vmem:[%s3 + $0x2480] sm:$0xff]
  %v2014 = vld [vmem:[%s3 + $0x2488] sm:$0xff]
  %v2015 = vld [vmem:[%s3 + $0x2490] sm:$0xff]
  %v2016 = vld [vmem:[%s3 + $0x2498] sm:$0xff]
  %v2017 = vld [vmem:[%s3 + $0x24a0] sm:$0xff]
  %v2018 = vld [vmem:[%s3 + $0x24a8] sm:$0xff]
  %v2019 = vld [vmem:[%s3 + $0x24b0] sm:$0xff]
  %v2020 = vld [vmem:[%s3 + $0x24b8] sm:$0xff]
  %v2021 = vld [vmem:[%s3 + $0x24c0] sm:$0xff]
  %v2022 = vld [vmem:[%s3 + $0x24c8] sm:$0xff]
  %v2023 = vld [vmem:[%s3 + $0x24d0] sm:$0xff]
  %v2024 = vld [vmem:[%s3 + $0x24d8] sm:$0xff]
  %v2025 = vld [vmem:[%s3 + $0x24e0] sm:$0xff]
  %v2026 = vld [vmem:[%s3 + $0x24e8] sm:$0xff]
  %v2027 = vld [vmem:[%s3 + $0x24f0] sm:$0xff]
  %v2028 = vld [vmem:[%s3 + $0x24f8] sm:$0xff]
  %v2029 = vld [vmem:[%s3 + $0x2500] sm:$0xff]
  %v2030 = vld [vmem:[%s3 + $0x2508] sm:$0xff]
  %v2031 = vld [vmem:[%s3 + $0x2510] sm:$0xff]
  %v2032 = vld [vmem:[%s3 + $0x2518] sm:$0xff]
  %v2033 = vld [vmem:[%s3 + $0x2520] sm:$0xff]
  %v2034 = vld [vmem:[%s3 + $0x2528] sm:$0xff]
  %v2035 = vld [vmem:[%s3 + $0x2530] sm:$0xff]
  %v2036 = vld [vmem:[%s3 + $0x2538] sm:$0xff]
  %v2037 = vld [vmem:[%s3 + $0x2540] sm:$0xff]
  %v2038 = vld [vmem:[%s3 + $0x2548] sm:$0xff]
  %v2039 = vld [vmem:[%s3 + $0x2550] sm:$0xff]
  %v2040 = vld [vmem:[%s3 + $0x2558] sm:$0xff]
  %v2041 = vld [vmem:[%s3 + $0x2560] sm:$0xff]
  %v2042 = vld [vmem:[%s3 + $0x2568] sm:$0xff]
  %v2043 = vld [vmem:[%s3 + $0x2570] sm:$0xff]
  %v2044 = vld [vmem:[%s3 + $0x2578] sm:$0xff]
  %v2045 = vld [vmem:[%s3 + $0x2580] sm:$0xff]
  %v2046 = vld [vmem:[%s3 + $0x2588] sm:$0xff]
  %v2047 = vld [vmem:[%s3 + $0x2590] sm:$0xff]
  %v2048 = vld [vmem:[%s3 + $0x2598] sm:$0xff]
  %v2049 = vld [vmem:[%s3 + $0x25a0] sm:$0xff]
  %v2050 = vld [vmem:[%s3 + $0x25a8] sm:$0xff]
  %v2051 = vld [vmem:[%s3 + $0x25b0] sm:$0xff]
  %v2052 = vld [vmem:[%s3 + $0x25b8] sm:$0xff]
  %v2053 = vld [vmem:[%s3 + $0x25c0] sm:$0xff]
  %v2054 = vld [vmem:[%s3 + $0x25c8] sm:$0xff]
  %v2055 = vld [vmem:[%s3 + $0x25d0] sm:$0xff]
  %v2056 = vld [vmem:[%s3 + $0x25d8] sm:$0xff]
  %v2057 = vld [vmem:[%s3 + $0x25e0] sm:$0xff]
  %v2058 = vld [vmem:[%s3 + $0x25e8] sm:$0xff]
  %v2059 = vld [vmem:[%s3 + $0x25f0] sm:$0xff]
  %v2060 = vld [vmem:[%s3 + $0x25f8] sm:$0xff]
  %v2061 = vld [vmem:[%s3 + $0x2600] sm:$0xff]
  %v2062 = vld [vmem:[%s3 + $0x2608] sm:$0xff]
  %v2063 = vld [vmem:[%s3 + $0x2610] sm:$0xff]
  %v2064 = vld [vmem:[%s3 + $0x2618] sm:$0xff]
  %v2065 = vld [vmem:[%s3 + $0x2620] sm:$0xff]
  %v2066 = vld [vmem:[%s3 + $0x2628] sm:$0xff]
  %v2067 = vld [vmem:[%s3 + $0x2630] sm:$0xff]
  %v2068 = vld [vmem:[%s3 + $0x2638] sm:$0xff]
  %v2069 = vld [vmem:[%s3 + $0x2640] sm:$0xff]
  %v2070 = vld [vmem:[%s3 + $0x2648] sm:$0xff]
  %v2071 = vld [vmem:[%s3 + $0x2650] sm:$0xff]
  %v2072 = vld [vmem:[%s3 + $0x2658] sm:$0xff]
  %v2073 = vld [vmem:[%s3 + $0x2660] sm:$0xff]
  %v2074 = vld [vmem:[%s3 + $0x2668] sm:$0xff]
  %v2075 = vld [vmem:[%s3 + $0x2670] sm:$0xff]
  %v2076 = vld [vmem:[%s3 + $0x2678] sm:$0xff]
  %v2077 = vld [vmem:[%s3 + $0x2680] sm:$0xff]
  %v2078 = vld [vmem:[%s3 + $0x2688] sm:$0xff]
  %v2079 = vld [vmem:[%s3 + $0x2690] sm:$0xff]
  %v2080 = vld [vmem:[%s3 + $0x2698] sm:$0xff]
  %v2081 = vld [vmem:[%s3 + $0x26a0] sm:$0xff]
  %v2082 = vld [vmem:[%s3 + $0x26a8] sm:$0xff]
  %v2083 = vld [vmem:[%s3 + $0x26b0] sm:$0xff]
  %v2084 = vld [vmem:[%s3 + $0x26b8] sm:$0xff]
  %v2085 = vld [vmem:[%s3 + $0x26c0] sm:$0xff]
  %v2086 = vld [vmem:[%s3 + $0x26c8] sm:$0xff]
  %v2087 = vld [vmem:[%s3 + $0x26d0] sm:$0xff]
  %v2088 = vld [vmem:[%s3 + $0x26d8] sm:$0xff]
  %v2089 = vld [vmem:[%s3 + $0x26e0] sm:$0xff]
  %v2090 = vld [vmem:[%s3 + $0x26e8] sm:$0xff]
  %v2091 = vld [vmem:[%s3 + $0x26f0] sm:$0xff]
  %v2092 = vld [vmem:[%s3 + $0x26f8] sm:$0xff]
  %v2093 = vld [vmem:[%s3 + $0x2700] sm:$0xff]
  %v2094 = vld [vmem:[%s3 + $0x2708] sm:$0xff]
  %v2095 = vld [vmem:[%s3 + $0x2710] sm:$0xff]
  %v2096 = vld [vmem:[%s3 + $0x2718] sm:$0xff]
  %v2097 = vld [vmem:[%s3 + $0x2720] sm:$0xff]
  %v2098 = vld [vmem:[%s3 + $0x2728] sm:$0xff]
  %v2099 = vld [vmem:[%s3 + $0x2730] sm:$0xff]
  %v2100 = vld [vmem:[%s3 + $0x2738] sm:$0xff]
  %v2101 = vld [vmem:[%s3 + $0x2740] sm:$0xff]
  %v2102 = vld [vmem:[%s3 + $0x2748] sm:$0xff]
  %v2103 = vld [vmem:[%s3 + $0x2750] sm:$0xff]
  %v2104 = vld [vmem:[%s3 + $0x2758] sm:$0xff]
  %v2105 = vld [vmem:[%s3 + $0x2760] sm:$0xff]
  %v2106 = vld [vmem:[%s3 + $0x2768] sm:$0xff]
  %v2107 = vld [vmem:[%s3 + $0x2770] sm:$0xff]
  %v2108 = vld [vmem:[%s3 + $0x2778] sm:$0xff]
  %v2109 = vld [vmem:[%s3 + $0x2780] sm:$0xff]
  %v2110 = vld [vmem:[%s3 + $0x2788] sm:$0xff]
  %v2111 = vld [vmem:[%s3 + $0x2790] sm:$0xff]
  %v2112 = vld [vmem:[%s3 + $0x2798] sm:$0xff]
  %v2113 = vld [vmem:[%s3 + $0x27a0] sm:$0xff]
  %v2114 = vld [vmem:[%s3 + $0x27a8] sm:$0xff]
  %v2115 = vld [vmem:[%s3 + $0x27b0] sm:$0xff]
  %v2116 = vld [vmem:[%s3 + $0x27b8] sm:$0xff]
  %v2117 = vld [vmem:[%s3 + $0x27c0] sm:$0xff]
  %v2118 = vld [vmem:[%s3 + $0x27c8] sm:$0xff]
  %v2119 = vld [vmem:[%s3 + $0x27d0] sm:$0xff]
  %v2120 = vld [vmem:[%s3 + $0x27d8] sm:$0xff]
  %v2121 = vld [vmem:[%s3 + $0x27e0] sm:$0xff]
  %v2122 = vld [vmem:[%s3 + $0x27e8] sm:$0xff]
  %v2123 = vld [vmem:[%s3 + $0x27f0] sm:$0xff]
  %v2124 = vld [vmem:[%s3 + $0x27f8] sm:$0xff]
  %v2125 = vld [vmem:[%s3 + $0x2800] sm:$0xff]
  %v2126 = vld [vmem:[%s3 + $0x2808] sm:$0xff]
  %v2127 = vld [vmem:[%s3 + $0x2810] sm:$0xff]
  %v2128 = vld [vmem:[%s3 + $0x2818] sm:$0xff]
  %v2129 = vld [vmem:[%s3 + $0x2820] sm:$0xff]
  %v2130 = vld [vmem:[%s3 + $0x2828] sm:$0xff]
  %v2131 = vld [vmem:[%s3 + $0x2830] sm:$0xff]
  %v2132 = vld [vmem:[%s3 + $0x2838] sm:$0xff]
  %v2133 = vld [vmem:[%s3 + $0x2840] sm:$0xff]
  %v2134 = vld [vmem:[%s3 + $0x2848] sm:$0xff]
  %v2135 = vld [vmem:[%s3 + $0x2850] sm:$0xff]
  %v2136 = vld [vmem:[%s3 + $0x2858] sm:$0xff]
  %v2137 = vld [vmem:[%s3 + $0x2860] sm:$0xff]
  %v2138 = vld [vmem:[%s3 + $0x2868] sm:$0xff]
  %v2139 = vld [vmem:[%s3 + $0x2870] sm:$0xff]
  %v2140 = vld [vmem:[%s3 + $0x2878] sm:$0xff]
  %v2141 = vld [vmem:[%s4] sm:$0xff]
  %v2142 = vld [vmem:[%s4 + $0x8] sm:$0x1]
  %v2145 = vperm.slane %v2141, 0
  %v2146 = vperm.slane %v2141, 1
  %v2147 = vperm.slane %v2141, 2
  %v2148 = vperm.slane %v2141, 3
  %v2149 = vperm.slane %v2141, 4
  %v2150 = vperm.slane %v2141, 5
  %v2151 = vperm.slane %v2141, 6
  %v2152 = vperm.slane %v2141, 7
  %v2153 = vperm.slane %v2142, 0
  %2163 = vmatpush.msra.mxu0 %v980
  %2164 = vmatpush.msra.mxu0 %v971
  %2165 = vmatpush.msra.mxu0 %v962
  %2166 = vmatpush.msra.mxu0 %v953
  %2167 = vmatpush.msra.mxu0 %v944
  %2168 = vmatpush.msra.mxu0 %v935
  %2169 = vmatpush.msra.mxu0 %v926
  %2170 = vmatpush.msra.mxu0 %v917
  %2171 = vmatpush.msra.mxu0 %v908
  %2172 = vmatpush.msra.mxu0 %v899
  %2173 = vmatpush.msra.mxu0 %v890
  %2174 = vmatpush.msra.mxu0 %v881
  %2175 = vmatpush.msra.mxu0 %v872
  %2176 = vmatpush.msra.mxu0 %v863
  %2177 = vmatpush.msra.mxu0 %v854
  %2178 = vmatpush.msra.mxu0 %v845
  %2179 = vmatmul.f32.gmra.mxu0 %v805
  %v2180 = vpop.f32.mrf.mxu0
  %v2181 = vadd.f32 %v2145, %v2180
  %2182 = vdwg.mxu0
  %2183 = vmatpush.msra.mxu0 %v1124
  %2184 = vmatpush.msra.mxu0 %v1115
  %2185 = vmatpush.msra.mxu0 %v1106
  %2186 = vmatpush.msra.mxu0 %v1097
  %2187 = vmatpush.msra.mxu0 %v1088
  %2188 = vmatpush.msra.mxu0 %v1079
  %2189 = vmatpush.msra.mxu0 %v1070
  %2190 = vmatpush.msra.mxu0 %v1061
  %2191 = vmatpush.msra.mxu0 %v1052
  %2192 = vmatpush.msra.mxu0 %v1043
  %2193 = vmatpush.msra.mxu0 %v1034
  %2194 = vmatpush.msra.mxu0 %v1025
  %2195 = vmatpush.msra.mxu0 %v1016
  %2196 = vmatpush.msra.mxu0 %v1007
  %2197 = vmatpush.msra.mxu0 %v998
  %2198 = vmatpush.msra.mxu0 %v989
  %2199 = vmatmul.f32.gmra.mxu0 %v809
  %v2200 = vpop.f32.mrf.mxu0
  %v2201 = vadd.f32 %v2181, %v2200
  %2202 = vdwg.mxu0
  %2203 = vmatpush.msra.mxu0 %v1268
  %2204 = vmatpush.msra.mxu0 %v1259
  %2205 = vmatpush.msra.mxu0 %v1250
  %2206 = vmatpush.msra.mxu0 %v1241
  %2207 = vmatpush.msra.mxu0 %v1232
  %2208 = vmatpush.msra.mxu0 %v1223
  %2209 = vmatpush.msra.mxu0 %v1214
  %2210 = vmatpush.msra.mxu0 %v1205
  %2211 = vmatpush.msra.mxu0 %v1196
  %2212 = vmatpush.msra.mxu0 %v1187
  %2213 = vmatpush.msra.mxu0 %v1178
  %2214 = vmatpush.msra.mxu0 %v1169
  %2215 = vmatpush.msra.mxu0 %v1160
  %2216 = vmatpush.msra.mxu0 %v1151
  %2217 = vmatpush.msra.mxu0 %v1142
  %2218 = vmatpush.msra.mxu0 %v1133
  %2219 = vmatmul.f32.gmra.mxu0 %v813
  %v2220 = vpop.f32.mrf.mxu0
  %v2221 = vadd.f32 %v2201, %v2220
  %2222 = vdwg.mxu0
  %2223 = vmatpush.msra.mxu0 %v1412
  %2224 = vmatpush.msra.mxu0 %v1403
  %2225 = vmatpush.msra.mxu0 %v1394
  %2226 = vmatpush.msra.mxu0 %v1385
  %2227 = vmatpush.msra.mxu0 %v1376
  %2228 = vmatpush.msra.mxu0 %v1367
  %2229 = vmatpush.msra.mxu0 %v1358
  %2230 = vmatpush.msra.mxu0 %v1349
  %2231 = vmatpush.msra.mxu0 %v1340
  %2232 = vmatpush.msra.mxu0 %v1331
  %2233 = vmatpush.msra.mxu0 %v1322
  %2234 = vmatpush.msra.mxu0 %v1313
  %2235 = vmatpush.msra.mxu0 %v1304
  %2236 = vmatpush.msra.mxu0 %v1295
  %2237 = vmatpush.msra.mxu0 %v1286
  %2238 = vmatpush.msra.mxu0 %v1277
  %2239 = vmatmul.f32.gmra.mxu0 %v819
  %v2240 = vpop.f32.mrf.mxu0
  %v2241 = vadd.f32 %v2221, %v2240
  %2242 = vdwg.mxu0
  %2243 = vmatpush.msra.mxu0 %v1556
  %2244 = vmatpush.msra.mxu0 %v1547
  %2245 = vmatpush.msra.mxu0 %v1538
  %2246 = vmatpush.msra.mxu0 %v1529
  %2247 = vmatpush.msra.mxu0 %v1520
  %2248 = vmatpush.msra.mxu0 %v1511
  %2249 = vmatpush.msra.mxu0 %v1502
  %2250 = vmatpush.msra.mxu0 %v1493
  %2251 = vmatpush.msra.mxu0 %v1484
  %2252 = vmatpush.msra.mxu0 %v1475
  %2253 = vmatpush.msra.mxu0 %v1466
  %2254 = vmatpush.msra.mxu0 %v1457
  %2255 = vmatpush.msra.mxu0 %v1448
  %2256 = vmatpush.msra.mxu0 %v1439
  %2257 = vmatpush.msra.mxu0 %v1430
  %2258 = vmatpush.msra.mxu0 %v1421
  %2259 = vmatmul.f32.gmra.mxu0 %v824
  %v2260 = vpop.f32.mrf.mxu0
  %v2261 = vadd.f32 %v2241, %v2260
  %2262 = vdwg.mxu0
  %2263 = vmatpush.msra.mxu0 %v1700
  %2264 = vmatpush.msra.mxu0 %v1691
  %2265 = vmatpush.msra.mxu0 %v1682
  %2266 = vmatpush.msra.mxu0 %v1673
  %2267 = vmatpush.msra.mxu0 %v1664
  %2268 = vmatpush.msra.mxu0 %v1655
  %2269 = vmatpush.msra.mxu0 %v1646
  %2270 = vmatpush.msra.mxu0 %v1637
  %2271 = vmatpush.msra.mxu0 %v1628
  %2272 = vmatpush.msra.mxu0 %v1619
  %2273 = vmatpush.msra.mxu0 %v1610
  %2274 = vmatpush.msra.mxu0 %v1601
  %2275 = vmatpush.msra.mxu0 %v1592
  %2276 = vmatpush.msra.mxu0 %v1583
  %2277 = vmatpush.msra.mxu0 %v1574
  %2278 = vmatpush.msra.mxu0 %v1565
  %2279 = vmatmul.f32.gmra.mxu0 %v828
  %v2280 = vpop.f32.mrf.mxu0
  %v2281 = vadd.f32 %v2261, %v2280
  %2282 = vdwg.mxu0
  %2283 = vmatpush.msra.mxu0 %v1844
  %2284 = vmatpush.msra.mxu0 %v1835
  %2285 = vmatpush.msra.mxu0 %v1826
  %2286 = vmatpush.msra.mxu0 %v1817
  %2287 = vmatpush.msra.mxu0 %v1808
  %2288 = vmatpush.msra.mxu0 %v1799
  %2289 = vmatpush.msra.mxu0 %v1790
  %2290 = vmatpush.msra.mxu0 %v1781
  %2291 = vmatpush.msra.mxu0 %v1772
  %2292 = vmatpush.msra.mxu0 %v1763
  %2293 = vmatpush.msra.mxu0 %v1754
  %2294 = vmatpush.msra.mxu0 %v1745
  %2295 = vmatpush.msra.mxu0 %v1736
  %2296 = vmatpush.msra.mxu0 %v1727
  %2297 = vmatpush.msra.mxu0 %v1718
  %2298 = vmatpush.msra.mxu0 %v1709
  %2299 = vmatmul.f32.gmra.mxu0 %v834
  %v2300 = vpop.f32.mrf.mxu0
  %v2301 = vadd.f32 %v2281, %v2300
  %2302 = vdwg.mxu0
  %2303 = vmatpush.msra.mxu0 %v1988
  %2304 = vmatpush.msra.mxu0 %v1979
  %2305 = vmatpush.msra.mxu0 %v1970
  %2306 = vmatpush.msra.mxu0 %v1961
  %2307 = vmatpush.msra.mxu0 %v1952
  %2308 = vmatpush.msra.mxu0 %v1943
  %2309 = vmatpush.msra.mxu0 %v1934
  %2310 = vmatpush.msra.mxu0 %v1925
  %2311 = vmatpush.msra.mxu0 %v1916
  %2312 = vmatpush.msra.mxu0 %v1907
  %2313 = vmatpush.msra.mxu0 %v1898
  %2314 = vmatpush.msra.mxu0 %v1889
  %2315 = vmatpush.msra.mxu0 %v1880
  %2316 = vmatpush.msra.mxu0 %v1871
  %2317 = vmatpush.msra.mxu0 %v1862
  %2318 = vmatpush.msra.mxu0 %v1853
  %2319 = vmatmul.f32.gmra.mxu0 %v838
  %v2320 = vpop.f32.mrf.mxu0
  %v2321 = vadd.f32 %v2301, %v2320
  %2322 = vdwg.mxu0
  %2323 = vmatpush.msra.mxu0 %v2132
  %2324 = vmatpush.msra.mxu0 %v2123
  %2325 = vmatpush.msra.mxu0 %v2114
  %2326 = vmatpush.msra.mxu0 %v2105
  %2327 = vmatpush.msra.mxu0 %v2096
  %2328 = vmatpush.msra.mxu0 %v2087
  %2329 = vmatpush.msra.mxu0 %v2078
  %2330 = vmatpush.msra.mxu0 %v2069
  %2331 = vmatpush.msra.mxu0 %v2060
  %2332 = vmatpush.msra.mxu0 %v2051
  %2333 = vmatpush.msra.mxu0 %v2042
  %2334 = vmatpush.msra.mxu0 %v2033
  %2335 = vmatpush.msra.mxu0 %v2024
  %2336 = vmatpush.msra.mxu0 %v2015
  %2337 = vmatpush.msra.mxu0 %v2006
  %2338 = vmatpush.msra.mxu0 %v1997
  %2339 = vmatmul.f32.gmra.mxu0 %v843
  %v2340 = vpop.f32.mrf.mxu0
  %v2341 = vadd.f32 %v2321, %v2340
  %2342 = vdwg.mxu0
  %2343 = vmatpush.msra.mxu0 %v981
  %2344 = vmatpush.msra.mxu0 %v972
  %2345 = vmatpush.msra.mxu0 %v963
  %2346 = vmatpush.msra.mxu0 %v954
  %2347 = vmatpush.msra.mxu0 %v945
  %2348 = vmatpush.msra.mxu0 %v936
  %2349 = vmatpush.msra.mxu0 %v927
  %2350 = vmatpush.msra.mxu0 %v918
  %2351 = vmatpush.msra.mxu0 %v909
  %2352 = vmatpush.msra.mxu0 %v900
  %2353 = vmatpush.msra.mxu0 %v891
  %2354 = vmatpush.msra.mxu0 %v882
  %2355 = vmatpush.msra.mxu0 %v873
  %2356 = vmatpush.msra.mxu0 %v864
  %2357 = vmatpush.msra.mxu0 %v855
  %2358 = vmatpush.msra.mxu0 %v846
  %2359 = vmatmul.f32.gmra.mxu0 %v805
  %v2360 = vpop.f32.mrf.mxu0
  %v2361 = vadd.f32 %v2146, %v2360
  %2362 = vdwg.mxu0
  %2363 = vmatpush.msra.mxu0 %v1125
  %2364 = vmatpush.msra.mxu0 %v1116
  %2365 = vmatpush.msra.mxu0 %v1107
  %2366 = vmatpush.msra.mxu0 %v1098
  %2367 = vmatpush.msra.mxu0 %v1089
  %2368 = vmatpush.msra.mxu0 %v1080
  %2369 = vmatpush.msra.mxu0 %v1071
  %2370 = vmatpush.msra.mxu0 %v1062
  %2371 = vmatpush.msra.mxu0 %v1053
  %2372 = vmatpush.msra.mxu0 %v1044
  %2373 = vmatpush.msra.mxu0 %v1035
  %2374 = vmatpush.msra.mxu0 %v1026
  %2375 = vmatpush.msra.mxu0 %v1017
  %2376 = vmatpush.msra.mxu0 %v1008
  %2377 = vmatpush.msra.mxu0 %v999
  %2378 = vmatpush.msra.mxu0 %v990
  %2379 = vmatmul.f32.gmra.mxu0 %v809
  %v2380 = vpop.f32.mrf.mxu0
  %v2381 = vadd.f32 %v2361, %v2380
  %2382 = vdwg.mxu0
  %2383 = vmatpush.msra.mxu0 %v1269
  %2384 = vmatpush.msra.mxu0 %v1260
  %2385 = vmatpush.msra.mxu0 %v1251
  %2386 = vmatpush.msra.mxu0 %v1242
  %2387 = vmatpush.msra.mxu0 %v1233
  %2388 = vmatpush.msra.mxu0 %v1224
  %2389 = vmatpush.msra.mxu0 %v1215
  %2390 = vmatpush.msra.mxu0 %v1206
  %2391 = vmatpush.msra.mxu0 %v1197
  %2392 = vmatpush.msra.mxu0 %v1188
  %2393 = vmatpush.msra.mxu0 %v1179
  %2394 = vmatpush.msra.mxu0 %v1170
  %2395 = vmatpush.msra.mxu0 %v1161
  %2396 = vmatpush.msra.mxu0 %v1152
  %2397 = vmatpush.msra.mxu0 %v1143
  %2398 = vmatpush.msra.mxu0 %v1134
  %2399 = vmatmul.f32.gmra.mxu0 %v813
  %v2400 = vpop.f32.mrf.mxu0
  %v2401 = vadd.f32 %v2381, %v2400
  %2402 = vdwg.mxu0
  %2403 = vmatpush.msra.mxu0 %v1413
  %2404 = vmatpush.msra.mxu0 %v1404
  %2405 = vmatpush.msra.mxu0 %v1395
  %2406 = vmatpush.msra.mxu0 %v1386
  %2407 = vmatpush.msra.mxu0 %v1377
  %2408 = vmatpush.msra.mxu0 %v1368
  %2409 = vmatpush.msra.mxu0 %v1359
  %2410 = vmatpush.msra.mxu0 %v1350
  %2411 = vmatpush.msra.mxu0 %v1341
  %2412 = vmatpush.msra.mxu0 %v1332
  %2413 = vmatpush.msra.mxu0 %v1323
  %2414 = vmatpush.msra.mxu0 %v1314
  %2415 = vmatpush.msra.mxu0 %v1305
  %2416 = vmatpush.msra.mxu0 %v1296
  %2417 = vmatpush.msra.mxu0 %v1287
  %2418 = vmatpush.msra.mxu0 %v1278
  %2419 = vmatmul.f32.gmra.mxu0 %v819
  %v2420 = vpop.f32.mrf.mxu0
  %v2421 = vadd.f32 %v2401, %v2420
  %2422 = vdwg.mxu0
  %2423 = vmatpush.msra.mxu0 %v1557
  %2424 = vmatpush.msra.mxu0 %v1548
  %2425 = vmatpush.msra.mxu0 %v1539
  %2426 = vmatpush.msra.mxu0 %v1530
  %2427 = vmatpush.msra.mxu0 %v1521
  %2428 = vmatpush.msra.mxu0 %v1512
  %2429 = vmatpush.msra.mxu0 %v1503
  %2430 = vmatpush.msra.mxu0 %v1494
  %2431 = vmatpush.msra.mxu0 %v1485
  %2432 = vmatpush.msra.mxu0 %v1476
  %2433 = vmatpush.msra.mxu0 %v1467
  %2434 = vmatpush.msra.mxu0 %v1458
  %2435 = vmatpush.msra.mxu0 %v1449
  %2436 = vmatpush.msra.mxu0 %v1440
  %2437 = vmatpush.msra.mxu0 %v1431
  %2438 = vmatpush.msra.mxu0 %v1422
  %2439 = vmatmul.f32.gmra.mxu0 %v824
  %v2440 = vpop.f32.mrf.mxu0
  %v2441 = vadd.f32 %v2421, %v2440
  %2442 = vdwg.mxu0
  %2443 = vmatpush.msra.mxu0 %v1701
  %2444 = vmatpush.msra.mxu0 %v1692
  %2445 = vmatpush.msra.mxu0 %v1683
  %2446 = vmatpush.msra.mxu0 %v1674
  %2447 = vmatpush.msra.mxu0 %v1665
  %2448 = vmatpush.msra.mxu0 %v1656
  %2449 = vmatpush.msra.mxu0 %v1647
  %2450 = vmatpush.msra.mxu0 %v1638
  %2451 = vmatpush.msra.mxu0 %v1629
  %2452 = vmatpush.msra.mxu0 %v1620
  %2453 = vmatpush.msra.mxu0 %v1611
  %2454 = vmatpush.msra.mxu0 %v1602
  %2455 = vmatpush.msra.mxu0 %v1593
  %2456 = vmatpush.msra.mxu0 %v1584
  %2457 = vmatpush.msra.mxu0 %v1575
  %2458 = vmatpush.msra.mxu0 %v1566
  %2459 = vmatmul.f32.gmra.mxu0 %v828
  %v2460 = vpop.f32.mrf.mxu0
  %v2461 = vadd.f32 %v2441, %v2460
  %2462 = vdwg.mxu0
  %2463 = vmatpush.msra.mxu0 %v1845
  %2464 = vmatpush.msra.mxu0 %v1836
  %2465 = vmatpush.msra.mxu0 %v1827
  %2466 = vmatpush.msra.mxu0 %v1818
  %2467 = vmatpush.msra.mxu0 %v1809
  %2468 = vmatpush.msra.mxu0 %v1800
  %2469 = vmatpush.msra.mxu0 %v1791
  %2470 = vmatpush.msra.mxu0 %v1782
  %2471 = vmatpush.msra.mxu0 %v1773
  %2472 = vmatpush.msra.mxu0 %v1764
  %2473 = vmatpush.msra.mxu0 %v1755
  %2474 = vmatpush.msra.mxu0 %v1746
  %2475 = vmatpush.msra.mxu0 %v1737
  %2476 = vmatpush.msra.mxu0 %v1728
  %2477 = vmatpush.msra.mxu0 %v1719
  %2478 = vmatpush.msra.mxu0 %v1710
  %2479 = vmatmul.f32.gmra.mxu0 %v834
  %v2480 = vpop.f32.mrf.mxu0
  %v2481 = vadd.f32 %v2461, %v2480
  %2482 = vdwg.mxu0
  %2483 = vmatpush.msra.mxu0 %v1989
  %2484 = vmatpush.msra.mxu0 %v1980
  %2485 = vmatpush.msra.mxu0 %v1971
  %2486 = vmatpush.msra.mxu0 %v1962
  %2487 = vmatpush.msra.mxu0 %v1953
  %2488 = vmatpush.msra.mxu0 %v1944
  %2489 = vmatpush.msra.mxu0 %v1935
  %2490 = vmatpush.msra.mxu0 %v1926
  %2491 = vmatpush.msra.mxu0 %v1917
  %2492 = vmatpush.msra.mxu0 %v1908
  %2493 = vmatpush.msra.mxu0 %v1899
  %2494 = vmatpush.msra.mxu0 %v1890
  %2495 = vmatpush.msra.mxu0 %v1881
  %2496 = vmatpush.msra.mxu0 %v1872
  %2497 = vmatpush.msra.mxu0 %v1863
  %2498 = vmatpush.msra.mxu0 %v1854
  %2499 = vmatmul.f32.gmra.mxu0 %v838
  %v2500 = vpop.f32.mrf.mxu0
  %v2501 = vadd.f32 %v2481, %v2500
  %2502 = vdwg.mxu0
  %2503 = vmatpush.msra.mxu0 %v2133
  %2504 = vmatpush.msra.mxu0 %v2124
  %2505 = vmatpush.msra.mxu0 %v2115
  %2506 = vmatpush.msra.mxu0 %v2106
  %2507 = vmatpush.msra.mxu0 %v2097
  %2508 = vmatpush.msra.mxu0 %v2088
  %2509 = vmatpush.msra.mxu0 %v2079
  %2510 = vmatpush.msra.mxu0 %v2070
  %2511 = vmatpush.msra.mxu0 %v2061
  %2512 = vmatpush.msra.mxu0 %v2052
  %2513 = vmatpush.msra.mxu0 %v2043
  %2514 = vmatpush.msra.mxu0 %v2034
  %2515 = vmatpush.msra.mxu0 %v2025
  %2516 = vmatpush.msra.mxu0 %v2016
  %2517 = vmatpush.msra.mxu0 %v2007
  %2518 = vmatpush.msra.mxu0 %v1998
  %2519 = vmatmul.f32.gmra.mxu0 %v843
  %v2520 = vpop.f32.mrf.mxu0
  %v2521 = vadd.f32 %v2501, %v2520
  %2522 = vdwg.mxu0
  %2523 = vmatpush.msra.mxu0 %v982
  %2524 = vmatpush.msra.mxu0 %v973
  %2525 = vmatpush.msra.mxu0 %v964
  %2526 = vmatpush.msra.mxu0 %v955
  %2527 = vmatpush.msra.mxu0 %v946
  %2528 = vmatpush.msra.mxu0 %v937
  %2529 = vmatpush.msra.mxu0 %v928
  %2530 = vmatpush.msra.mxu0 %v919
  %2531 = vmatpush.msra.mxu0 %v910
  %2532 = vmatpush.msra.mxu0 %v901
  %2533 = vmatpush.msra.mxu0 %v892
  %2534 = vmatpush.msra.mxu0 %v883
  %2535 = vmatpush.msra.mxu0 %v874
  %2536 = vmatpush.msra.mxu0 %v865
  %2537 = vmatpush.msra.mxu0 %v856
  %2538 = vmatpush.msra.mxu0 %v847
  %2539 = vmatmul.f32.gmra.mxu0 %v805
  %v2540 = vpop.f32.mrf.mxu0
  %v2541 = vadd.f32 %v2147, %v2540
  %2542 = vdwg.mxu0
  %2543 = vmatpush.msra.mxu0 %v1126
  %2544 = vmatpush.msra.mxu0 %v1117
  %2545 = vmatpush.msra.mxu0 %v1108
  %2546 = vmatpush.msra.mxu0 %v1099
  %2547 = vmatpush.msra.mxu0 %v1090
  %2548 = vmatpush.msra.mxu0 %v1081
  %2549 = vmatpush.msra.mxu0 %v1072
  %2550 = vmatpush.msra.mxu0 %v1063
  %2551 = vmatpush.msra.mxu0 %v1054
  %2552 = vmatpush.msra.mxu0 %v1045
  %2553 = vmatpush.msra.mxu0 %v1036
  %2554 = vmatpush.msra.mxu0 %v1027
  %2555 = vmatpush.msra.mxu0 %v1018
  %2556 = vmatpush.msra.mxu0 %v1009
  %2557 = vmatpush.msra.mxu0 %v1000
  %2558 = vmatpush.msra.mxu0 %v991
  %2559 = vmatmul.f32.gmra.mxu0 %v809
  %v2560 = vpop.f32.mrf.mxu0
  %v2561 = vadd.f32 %v2541, %v2560
  %2562 = vdwg.mxu0
  %2563 = vmatpush.msra.mxu0 %v1270
  %2564 = vmatpush.msra.mxu0 %v1261
  %2565 = vmatpush.msra.mxu0 %v1252
  %2566 = vmatpush.msra.mxu0 %v1243
  %2567 = vmatpush.msra.mxu0 %v1234
  %2568 = vmatpush.msra.mxu0 %v1225
  %2569 = vmatpush.msra.mxu0 %v1216
  %2570 = vmatpush.msra.mxu0 %v1207
  %2571 = vmatpush.msra.mxu0 %v1198
  %2572 = vmatpush.msra.mxu0 %v1189
  %2573 = vmatpush.msra.mxu0 %v1180
  %2574 = vmatpush.msra.mxu0 %v1171
  %2575 = vmatpush.msra.mxu0 %v1162
  %2576 = vmatpush.msra.mxu0 %v1153
  %2577 = vmatpush.msra.mxu0 %v1144
  %2578 = vmatpush.msra.mxu0 %v1135
  %2579 = vmatmul.f32.gmra.mxu0 %v813
  %v2580 = vpop.f32.mrf.mxu0
  %v2581 = vadd.f32 %v2561, %v2580
  %2582 = vdwg.mxu0
  %2583 = vmatpush.msra.mxu0 %v1414
  %2584 = vmatpush.msra.mxu0 %v1405
  %2585 = vmatpush.msra.mxu0 %v1396
  %2586 = vmatpush.msra.mxu0 %v1387
  %2587 = vmatpush.msra.mxu0 %v1378
  %2588 = vmatpush.msra.mxu0 %v1369
  %2589 = vmatpush.msra.mxu0 %v1360
  %2590 = vmatpush.msra.mxu0 %v1351
  %2591 = vmatpush.msra.mxu0 %v1342
  %2592 = vmatpush.msra.mxu0 %v1333
  %2593 = vmatpush.msra.mxu0 %v1324
  %2594 = vmatpush.msra.mxu0 %v1315
  %2595 = vmatpush.msra.mxu0 %v1306
  %2596 = vmatpush.msra.mxu0 %v1297
  %2597 = vmatpush.msra.mxu0 %v1288
  %2598 = vmatpush.msra.mxu0 %v1279
  %2599 = vmatmul.f32.gmra.mxu0 %v819
  %v2600 = vpop.f32.mrf.mxu0
  %v2601 = vadd.f32 %v2581, %v2600
  %2602 = vdwg.mxu0
  %2603 = vmatpush.msra.mxu0 %v1558
  %2604 = vmatpush.msra.mxu0 %v1549
  %2605 = vmatpush.msra.mxu0 %v1540
  %2606 = vmatpush.msra.mxu0 %v1531
  %2607 = vmatpush.msra.mxu0 %v1522
  %2608 = vmatpush.msra.mxu0 %v1513
  %2609 = vmatpush.msra.mxu0 %v1504
  %2610 = vmatpush.msra.mxu0 %v1495
  %2611 = vmatpush.msra.mxu0 %v1486
  %2612 = vmatpush.msra.mxu0 %v1477
  %2613 = vmatpush.msra.mxu0 %v1468
  %2614 = vmatpush.msra.mxu0 %v1459
  %2615 = vmatpush.msra.mxu0 %v1450
  %2616 = vmatpush.msra.mxu0 %v1441
  %2617 = vmatpush.msra.mxu0 %v1432
  %2618 = vmatpush.msra.mxu0 %v1423
  %2619 = vmatmul.f32.gmra.mxu0 %v824
  %v2620 = vpop.f32.mrf.mxu0
  %v2621 = vadd.f32 %v2601, %v2620
  %2622 = vdwg.mxu0
  %2623 = vmatpush.msra.mxu0 %v1702
  %2624 = vmatpush.msra.mxu0 %v1693
  %2625 = vmatpush.msra.mxu0 %v1684
  %2626 = vmatpush.msra.mxu0 %v1675
  %2627 = vmatpush.msra.mxu0 %v1666
  %2628 = vmatpush.msra.mxu0 %v1657
  %2629 = vmatpush.msra.mxu0 %v1648
  %2630 = vmatpush.msra.mxu0 %v1639
  %2631 = vmatpush.msra.mxu0 %v1630
  %2632 = vmatpush.msra.mxu0 %v1621
  %2633 = vmatpush.msra.mxu0 %v1612
  %2634 = vmatpush.msra.mxu0 %v1603
  %2635 = vmatpush.msra.mxu0 %v1594
  %2636 = vmatpush.msra.mxu0 %v1585
  %2637 = vmatpush.msra.mxu0 %v1576
  %2638 = vmatpush.msra.mxu0 %v1567
  %2639 = vmatmul.f32.gmra.mxu0 %v828
  %v2640 = vpop.f32.mrf.mxu0
  %v2641 = vadd.f32 %v2621, %v2640
  %2642 = vdwg.mxu0
  %2643 = vmatpush.msra.mxu0 %v1846
  %2644 = vmatpush.msra.mxu0 %v1837
  %2645 = vmatpush.msra.mxu0 %v1828
  %2646 = vmatpush.msra.mxu0 %v1819
  %2647 = vmatpush.msra.mxu0 %v1810
  %2648 = vmatpush.msra.mxu0 %v1801
  %2649 = vmatpush.msra.mxu0 %v1792
  %2650 = vmatpush.msra.mxu0 %v1783
  %2651 = vmatpush.msra.mxu0 %v1774
  %2652 = vmatpush.msra.mxu0 %v1765
  %2653 = vmatpush.msra.mxu0 %v1756
  %2654 = vmatpush.msra.mxu0 %v1747
  %2655 = vmatpush.msra.mxu0 %v1738
  %2656 = vmatpush.msra.mxu0 %v1729
  %2657 = vmatpush.msra.mxu0 %v1720
  %2658 = vmatpush.msra.mxu0 %v1711
  %2659 = vmatmul.f32.gmra.mxu0 %v834
  %v2660 = vpop.f32.mrf.mxu0
  %v2661 = vadd.f32 %v2641, %v2660
  %2662 = vdwg.mxu0
  %2663 = vmatpush.msra.mxu0 %v1990
  %2664 = vmatpush.msra.mxu0 %v1981
  %2665 = vmatpush.msra.mxu0 %v1972
  %2666 = vmatpush.msra.mxu0 %v1963
  %2667 = vmatpush.msra.mxu0 %v1954
  %2668 = vmatpush.msra.mxu0 %v1945
  %2669 = vmatpush.msra.mxu0 %v1936
  %2670 = vmatpush.msra.mxu0 %v1927
  %2671 = vmatpush.msra.mxu0 %v1918
  %2672 = vmatpush.msra.mxu0 %v1909
  %2673 = vmatpush.msra.mxu0 %v1900
  %2674 = vmatpush.msra.mxu0 %v1891
  %2675 = vmatpush.msra.mxu0 %v1882
  %2676 = vmatpush.msra.mxu0 %v1873
  %2677 = vmatpush.msra.mxu0 %v1864
  %2678 = vmatpush.msra.mxu0 %v1855
  %2679 = vmatmul.f32.gmra.mxu0 %v838
  %v2680 = vpop.f32.mrf.mxu0
  %v2681 = vadd.f32 %v2661, %v2680
  %2682 = vdwg.mxu0
  %2683 = vmatpush.msra.mxu0 %v2134
  %2684 = vmatpush.msra.mxu0 %v2125
  %2685 = vmatpush.msra.mxu0 %v2116
  %2686 = vmatpush.msra.mxu0 %v2107
  %2687 = vmatpush.msra.mxu0 %v2098
  %2688 = vmatpush.msra.mxu0 %v2089
  %2689 = vmatpush.msra.mxu0 %v2080
  %2690 = vmatpush.msra.mxu0 %v2071
  %2691 = vmatpush.msra.mxu0 %v2062
  %2692 = vmatpush.msra.mxu0 %v2053
  %2693 = vmatpush.msra.mxu0 %v2044
  %2694 = vmatpush.msra.mxu0 %v2035
  %2695 = vmatpush.msra.mxu0 %v2026
  %2696 = vmatpush.msra.mxu0 %v2017
  %2697 = vmatpush.msra.mxu0 %v2008
  %2698 = vmatpush.msra.mxu0 %v1999
  %2699 = vmatmul.f32.gmra.mxu0 %v843
  %v2700 = vpop.f32.mrf.mxu0
  %v2701 = vadd.f32 %v2681, %v2700
  %2702 = vdwg.mxu0
  %2703 = vmatpush.msra.mxu0 %v983
  %2704 = vmatpush.msra.mxu0 %v974
  %2705 = vmatpush.msra.mxu0 %v965
  %2706 = vmatpush.msra.mxu0 %v956
  %2707 = vmatpush.msra.mxu0 %v947
  %2708 = vmatpush.msra.mxu0 %v938
  %2709 = vmatpush.msra.mxu0 %v929
  %2710 = vmatpush.msra.mxu0 %v920
  %2711 = vmatpush.msra.mxu0 %v911
  %2712 = vmatpush.msra.mxu0 %v902
  %2713 = vmatpush.msra.mxu0 %v893
  %2714 = vmatpush.msra.mxu0 %v884
  %2715 = vmatpush.msra.mxu0 %v875
  %2716 = vmatpush.msra.mxu0 %v866
  %2717 = vmatpush.msra.mxu0 %v857
  %2718 = vmatpush.msra.mxu0 %v848
  %2719 = vmatmul.f32.gmra.mxu0 %v805
  %v2720 = vpop.f32.mrf.mxu0
  %v2721 = vadd.f32 %v2148, %v2720
  %2722 = vdwg.mxu0
  %2723 = vmatpush.msra.mxu0 %v1127
  %2724 = vmatpush.msra.mxu0 %v1118
  %2725 = vmatpush.msra.mxu0 %v1109
  %2726 = vmatpush.msra.mxu0 %v1100
  %2727 = vmatpush.msra.mxu0 %v1091
  %2728 = vmatpush.msra.mxu0 %v1082
  %2729 = vmatpush.msra.mxu0 %v1073
  %2730 = vmatpush.msra.mxu0 %v1064
  %2731 = vmatpush.msra.mxu0 %v1055
  %2732 = vmatpush.msra.mxu0 %v1046
  %2733 = vmatpush.msra.mxu0 %v1037
  %2734 = vmatpush.msra.mxu0 %v1028
  %2735 = vmatpush.msra.mxu0 %v1019
  %2736 = vmatpush.msra.mxu0 %v1010
  %2737 = vmatpush.msra.mxu0 %v1001
  %2738 = vmatpush.msra.mxu0 %v992
  %2739 = vmatmul.f32.gmra.mxu0 %v809
  %v2740 = vpop.f32.mrf.mxu0
  %v2741 = vadd.f32 %v2721, %v2740
  %2742 = vdwg.mxu0
  %2743 = vmatpush.msra.mxu0 %v1271
  %2744 = vmatpush.msra.mxu0 %v1262
  %2745 = vmatpush.msra.mxu0 %v1253
  %2746 = vmatpush.msra.mxu0 %v1244
  %2747 = vmatpush.msra.mxu0 %v1235
  %2748 = vmatpush.msra.mxu0 %v1226
  %2749 = vmatpush.msra.mxu0 %v1217
  %2750 = vmatpush.msra.mxu0 %v1208
  %2751 = vmatpush.msra.mxu0 %v1199
  %2752 = vmatpush.msra.mxu0 %v1190
  %2753 = vmatpush.msra.mxu0 %v1181
  %2754 = vmatpush.msra.mxu0 %v1172
  %2755 = vmatpush.msra.mxu0 %v1163
  %2756 = vmatpush.msra.mxu0 %v1154
  %2757 = vmatpush.msra.mxu0 %v1145
  %2758 = vmatpush.msra.mxu0 %v1136
  %2759 = vmatmul.f32.gmra.mxu0 %v813
  %v2760 = vpop.f32.mrf.mxu0
  %v2761 = vadd.f32 %v2741, %v2760
  %2762 = vdwg.mxu0
  %2763 = vmatpush.msra.mxu0 %v1415
  %2764 = vmatpush.msra.mxu0 %v1406
  %2765 = vmatpush.msra.mxu0 %v1397
  %2766 = vmatpush.msra.mxu0 %v1388
  %2767 = vmatpush.msra.mxu0 %v1379
  %2768 = vmatpush.msra.mxu0 %v1370
  %2769 = vmatpush.msra.mxu0 %v1361
  %2770 = vmatpush.msra.mxu0 %v1352
  %2771 = vmatpush.msra.mxu0 %v1343
  %2772 = vmatpush.msra.mxu0 %v1334
  %2773 = vmatpush.msra.mxu0 %v1325
  %2774 = vmatpush.msra.mxu0 %v1316
  %2775 = vmatpush.msra.mxu0 %v1307
  %2776 = vmatpush.msra.mxu0 %v1298
  %2777 = vmatpush.msra.mxu0 %v1289
  %2778 = vmatpush.msra.mxu0 %v1280
  %2779 = vmatmul.f32.gmra.mxu0 %v819
  %v2780 = vpop.f32.mrf.mxu0
  %v2781 = vadd.f32 %v2761, %v2780
  %2782 = vdwg.mxu0
  %2783 = vmatpush.msra.mxu0 %v1559
  %2784 = vmatpush.msra.mxu0 %v1550
  %2785 = vmatpush.msra.mxu0 %v1541
  %2786 = vmatpush.msra.mxu0 %v1532
  %2787 = vmatpush.msra.mxu0 %v1523
  %2788 = vmatpush.msra.mxu0 %v1514
  %2789 = vmatpush.msra.mxu0 %v1505
  %2790 = vmatpush.msra.mxu0 %v1496
  %2791 = vmatpush.msra.mxu0 %v1487
  %2792 = vmatpush.msra.mxu0 %v1478
  %2793 = vmatpush.msra.mxu0 %v1469
  %2794 = vmatpush.msra.mxu0 %v1460
  %2795 = vmatpush.msra.mxu0 %v1451
  %2796 = vmatpush.msra.mxu0 %v1442
  %2797 = vmatpush.msra.mxu0 %v1433
  %2798 = vmatpush.msra.mxu0 %v1424
  %2799 = vmatmul.f32.gmra.mxu0 %v824
  %v2800 = vpop.f32.mrf.mxu0
  %v2801 = vadd.f32 %v2781, %v2800
  %2802 = vdwg.mxu0
  %2803 = vmatpush.msra.mxu0 %v1703
  %2804 = vmatpush.msra.mxu0 %v1694
  %2805 = vmatpush.msra.mxu0 %v1685
  %2806 = vmatpush.msra.mxu0 %v1676
  %2807 = vmatpush.msra.mxu0 %v1667
  %2808 = vmatpush.msra.mxu0 %v1658
  %2809 = vmatpush.msra.mxu0 %v1649
  %2810 = vmatpush.msra.mxu0 %v1640
  %2811 = vmatpush.msra.mxu0 %v1631
  %2812 = vmatpush.msra.mxu0 %v1622
  %2813 = vmatpush.msra.mxu0 %v1613
  %2814 = vmatpush.msra.mxu0 %v1604
  %2815 = vmatpush.msra.mxu0 %v1595
  %2816 = vmatpush.msra.mxu0 %v1586
  %2817 = vmatpush.msra.mxu0 %v1577
  %2818 = vmatpush.msra.mxu0 %v1568
  %2819 = vmatmul.f32.gmra.mxu0 %v828
  %v2820 = vpop.f32.mrf.mxu0
  %v2821 = vadd.f32 %v2801, %v2820
  %2822 = vdwg.mxu0
  %2823 = vmatpush.msra.mxu0 %v1847
  %2824 = vmatpush.msra.mxu0 %v1838
  %2825 = vmatpush.msra.mxu0 %v1829
  %2826 = vmatpush.msra.mxu0 %v1820
  %2827 = vmatpush.msra.mxu0 %v1811
  %2828 = vmatpush.msra.mxu0 %v1802
  %2829 = vmatpush.msra.mxu0 %v1793
  %2830 = vmatpush.msra.mxu0 %v1784
  %2831 = vmatpush.msra.mxu0 %v1775
  %2832 = vmatpush.msra.mxu0 %v1766
  %2833 = vmatpush.msra.mxu0 %v1757
  %2834 = vmatpush.msra.mxu0 %v1748
  %2835 = vmatpush.msra.mxu0 %v1739
  %2836 = vmatpush.msra.mxu0 %v1730
  %2837 = vmatpush.msra.mxu0 %v1721
  %2838 = vmatpush.msra.mxu0 %v1712
  %2839 = vmatmul.f32.gmra.mxu0 %v834
  %v2840 = vpop.f32.mrf.mxu0
  %v2841 = vadd.f32 %v2821, %v2840
  %2842 = vdwg.mxu0
  %2843 = vmatpush.msra.mxu0 %v1991
  %2844 = vmatpush.msra.mxu0 %v1982
  %2845 = vmatpush.msra.mxu0 %v1973
  %2846 = vmatpush.msra.mxu0 %v1964
  %2847 = vmatpush.msra.mxu0 %v1955
  %2848 = vmatpush.msra.mxu0 %v1946
  %2849 = vmatpush.msra.mxu0 %v1937
  %2850 = vmatpush.msra.mxu0 %v1928
  %2851 = vmatpush.msra.mxu0 %v1919
  %2852 = vmatpush.msra.mxu0 %v1910
  %2853 = vmatpush.msra.mxu0 %v1901
  %2854 = vmatpush.msra.mxu0 %v1892
  %2855 = vmatpush.msra.mxu0 %v1883
  %2856 = vmatpush.msra.mxu0 %v1874
  %2857 = vmatpush.msra.mxu0 %v1865
  %2858 = vmatpush.msra.mxu0 %v1856
  %2859 = vmatmul.f32.gmra.mxu0 %v838
  %v2860 = vpop.f32.mrf.mxu0
  %v2861 = vadd.f32 %v2841, %v2860
  %2862 = vdwg.mxu0
  %2863 = vmatpush.msra.mxu0 %v2135
  %2864 = vmatpush.msra.mxu0 %v2126
  %2865 = vmatpush.msra.mxu0 %v2117
  %2866 = vmatpush.msra.mxu0 %v2108
  %2867 = vmatpush.msra.mxu0 %v2099
  %2868 = vmatpush.msra.mxu0 %v2090
  %2869 = vmatpush.msra.mxu0 %v2081
  %2870 = vmatpush.msra.mxu0 %v2072
  %2871 = vmatpush.msra.mxu0 %v2063
  %2872 = vmatpush.msra.mxu0 %v2054
  %2873 = vmatpush.msra.mxu0 %v2045
  %2874 = vmatpush.msra.mxu0 %v2036
  %2875 = vmatpush.msra.mxu0 %v2027
  %2876 = vmatpush.msra.mxu0 %v2018
  %2877 = vmatpush.msra.mxu0 %v2009
  %2878 = vmatpush.msra.mxu0 %v2000
  %2879 = vmatmul.f32.gmra.mxu0 %v843
  %v2880 = vpop.f32.mrf.mxu0
  %v2881 = vadd.f32 %v2861, %v2880
  %2882 = vdwg.mxu0
  %2883 = vmatpush.msra.mxu0 %v984
  %2884 = vmatpush.msra.mxu0 %v975
  %2885 = vmatpush.msra.mxu0 %v966
  %2886 = vmatpush.msra.mxu0 %v957
  %2887 = vmatpush.msra.mxu0 %v948
  %2888 = vmatpush.msra.mxu0 %v939
  %2889 = vmatpush.msra.mxu0 %v930
  %2890 = vmatpush.msra.mxu0 %v921
  %2891 = vmatpush.msra.mxu0 %v912
  %2892 = vmatpush.msra.mxu0 %v903
  %2893 = vmatpush.msra.mxu0 %v894
  %2894 = vmatpush.msra.mxu0 %v885
  %2895 = vmatpush.msra.mxu0 %v876
  %2896 = vmatpush.msra.mxu0 %v867
  %2897 = vmatpush.msra.mxu0 %v858
  %2898 = vmatpush.msra.mxu0 %v849
  %2899 = vmatmul.f32.gmra.mxu0 %v805
  %v2900 = vpop.f32.mrf.mxu0
  %v2901 = vadd.f32 %v2149, %v2900
  %2902 = vdwg.mxu0
  %2903 = vmatpush.msra.mxu0 %v1128
  %2904 = vmatpush.msra.mxu0 %v1119
  %2905 = vmatpush.msra.mxu0 %v1110
  %2906 = vmatpush.msra.mxu0 %v1101
  %2907 = vmatpush.msra.mxu0 %v1092
  %2908 = vmatpush.msra.mxu0 %v1083
  %2909 = vmatpush.msra.mxu0 %v1074
  %2910 = vmatpush.msra.mxu0 %v1065
  %2911 = vmatpush.msra.mxu0 %v1056
  %2912 = vmatpush.msra.mxu0 %v1047
  %2913 = vmatpush.msra.mxu0 %v1038
  %2914 = vmatpush.msra.mxu0 %v1029
  %2915 = vmatpush.msra.mxu0 %v1020
  %2916 = vmatpush.msra.mxu0 %v1011
  %2917 = vmatpush.msra.mxu0 %v1002
  %2918 = vmatpush.msra.mxu0 %v993
  %2919 = vmatmul.f32.gmra.mxu0 %v809
  %v2920 = vpop.f32.mrf.mxu0
  %v2921 = vadd.f32 %v2901, %v2920
  %2922 = vdwg.mxu0
  %2923 = vmatpush.msra.mxu0 %v1272
  %2924 = vmatpush.msra.mxu0 %v1263
  %2925 = vmatpush.msra.mxu0 %v1254
  %2926 = vmatpush.msra.mxu0 %v1245
  %2927 = vmatpush.msra.mxu0 %v1236
  %2928 = vmatpush.msra.mxu0 %v1227
  %2929 = vmatpush.msra.mxu0 %v1218
  %2930 = vmatpush.msra.mxu0 %v1209
  %2931 = vmatpush.msra.mxu0 %v1200
  %2932 = vmatpush.msra.mxu0 %v1191
  %2933 = vmatpush.msra.mxu0 %v1182
  %2934 = vmatpush.msra.mxu0 %v1173
  %2935 = vmatpush.msra.mxu0 %v1164
  %2936 = vmatpush.msra.mxu0 %v1155
  %2937 = vmatpush.msra.mxu0 %v1146
  %2938 = vmatpush.msra.mxu0 %v1137
  %2939 = vmatmul.f32.gmra.mxu0 %v813
  %v2940 = vpop.f32.mrf.mxu0
  %v2941 = vadd.f32 %v2921, %v2940
  %2942 = vdwg.mxu0
  %2943 = vmatpush.msra.mxu0 %v1416
  %2944 = vmatpush.msra.mxu0 %v1407
  %2945 = vmatpush.msra.mxu0 %v1398
  %2946 = vmatpush.msra.mxu0 %v1389
  %2947 = vmatpush.msra.mxu0 %v1380
  %2948 = vmatpush.msra.mxu0 %v1371
  %2949 = vmatpush.msra.mxu0 %v1362
  %2950 = vmatpush.msra.mxu0 %v1353
  %2951 = vmatpush.msra.mxu0 %v1344
  %2952 = vmatpush.msra.mxu0 %v1335
  %2953 = vmatpush.msra.mxu0 %v1326
  %2954 = vmatpush.msra.mxu0 %v1317
  %2955 = vmatpush.msra.mxu0 %v1308
  %2956 = vmatpush.msra.mxu0 %v1299
  %2957 = vmatpush.msra.mxu0 %v1290
  %2958 = vmatpush.msra.mxu0 %v1281
  %2959 = vmatmul.f32.gmra.mxu0 %v819
  %v2960 = vpop.f32.mrf.mxu0
  %v2961 = vadd.f32 %v2941, %v2960
  %2962 = vdwg.mxu0
  %2963 = vmatpush.msra.mxu0 %v1560
  %2964 = vmatpush.msra.mxu0 %v1551
  %2965 = vmatpush.msra.mxu0 %v1542
  %2966 = vmatpush.msra.mxu0 %v1533
  %2967 = vmatpush.msra.mxu0 %v1524
  %2968 = vmatpush.msra.mxu0 %v1515
  %2969 = vmatpush.msra.mxu0 %v1506
  %2970 = vmatpush.msra.mxu0 %v1497
  %2971 = vmatpush.msra.mxu0 %v1488
  %2972 = vmatpush.msra.mxu0 %v1479
  %2973 = vmatpush.msra.mxu0 %v1470
  %2974 = vmatpush.msra.mxu0 %v1461
  %2975 = vmatpush.msra.mxu0 %v1452
  %2976 = vmatpush.msra.mxu0 %v1443
  %2977 = vmatpush.msra.mxu0 %v1434
  %2978 = vmatpush.msra.mxu0 %v1425
  %2979 = vmatmul.f32.gmra.mxu0 %v824
  %v2980 = vpop.f32.mrf.mxu0
  %v2981 = vadd.f32 %v2961, %v2980
  %2982 = vdwg.mxu0
  %2983 = vmatpush.msra.mxu0 %v1704
  %2984 = vmatpush.msra.mxu0 %v1695
  %2985 = vmatpush.msra.mxu0 %v1686
  %2986 = vmatpush.msra.mxu0 %v1677
  %2987 = vmatpush.msra.mxu0 %v1668
  %2988 = vmatpush.msra.mxu0 %v1659
  %2989 = vmatpush.msra.mxu0 %v1650
  %2990 = vmatpush.msra.mxu0 %v1641
  %2991 = vmatpush.msra.mxu0 %v1632
  %2992 = vmatpush.msra.mxu0 %v1623
  %2993 = vmatpush.msra.mxu0 %v1614
  %2994 = vmatpush.msra.mxu0 %v1605
  %2995 = vmatpush.msra.mxu0 %v1596
  %2996 = vmatpush.msra.mxu0 %v1587
  %2997 = vmatpush.msra.mxu0 %v1578
  %2998 = vmatpush.msra.mxu0 %v1569
  %2999 = vmatmul.f32.gmra.mxu0 %v828
  %v3000 = vpop.f32.mrf.mxu0
  %v3001 = vadd.f32 %v2981, %v3000
  %3002 = vdwg.mxu0
  %3003 = vmatpush.msra.mxu0 %v1848
  %3004 = vmatpush.msra.mxu0 %v1839
  %3005 = vmatpush.msra.mxu0 %v1830
  %3006 = vmatpush.msra.mxu0 %v1821
  %3007 = vmatpush.msra.mxu0 %v1812
  %3008 = vmatpush.msra.mxu0 %v1803
  %3009 = vmatpush.msra.mxu0 %v1794
  %3010 = vmatpush.msra.mxu0 %v1785
  %3011 = vmatpush.msra.mxu0 %v1776
  %3012 = vmatpush.msra.mxu0 %v1767
  %3013 = vmatpush.msra.mxu0 %v1758
  %3014 = vmatpush.msra.mxu0 %v1749
  %3015 = vmatpush.msra.mxu0 %v1740
  %3016 = vmatpush.msra.mxu0 %v1731
  %3017 = vmatpush.msra.mxu0 %v1722
  %3018 = vmatpush.msra.mxu0 %v1713
  %3019 = vmatmul.f32.gmra.mxu0 %v834
  %v3020 = vpop.f32.mrf.mxu0
  %v3021 = vadd.f32 %v3001, %v3020
  %3022 = vdwg.mxu0
  %3023 = vmatpush.msra.mxu0 %v1992
  %3024 = vmatpush.msra.mxu0 %v1983
  %3025 = vmatpush.msra.mxu0 %v1974
  %3026 = vmatpush.msra.mxu0 %v1965
  %3027 = vmatpush.msra.mxu0 %v1956
  %3028 = vmatpush.msra.mxu0 %v1947
  %3029 = vmatpush.msra.mxu0 %v1938
  %3030 = vmatpush.msra.mxu0 %v1929
  %3031 = vmatpush.msra.mxu0 %v1920
  %3032 = vmatpush.msra.mxu0 %v1911
  %3033 = vmatpush.msra.mxu0 %v1902
  %3034 = vmatpush.msra.mxu0 %v1893
  %3035 = vmatpush.msra.mxu0 %v1884
  %3036 = vmatpush.msra.mxu0 %v1875
  %3037 = vmatpush.msra.mxu0 %v1866
  %3038 = vmatpush.msra.mxu0 %v1857
  %3039 = vmatmul.f32.gmra.mxu0 %v838
  %v3040 = vpop.f32.mrf.mxu0
  %v3041 = vadd.f32 %v3021, %v3040
  %3042 = vdwg.mxu0
  %3043 = vmatpush.msra.mxu0 %v2136
  %3044 = vmatpush.msra.mxu0 %v2127
  %3045 = vmatpush.msra.mxu0 %v2118
  %3046 = vmatpush.msra.mxu0 %v2109
  %3047 = vmatpush.msra.mxu0 %v2100
  %3048 = vmatpush.msra.mxu0 %v2091
  %3049 = vmatpush.msra.mxu0 %v2082
  %3050 = vmatpush.msra.mxu0 %v2073
  %3051 = vmatpush.msra.mxu0 %v2064
  %3052 = vmatpush.msra.mxu0 %v2055
  %3053 = vmatpush.msra.mxu0 %v2046
  %3054 = vmatpush.msra.mxu0 %v2037
  %3055 = vmatpush.msra.mxu0 %v2028
  %3056 = vmatpush.msra.mxu0 %v2019
  %3057 = vmatpush.msra.mxu0 %v2010
  %3058 = vmatpush.msra.mxu0 %v2001
  %3059 = vmatmul.f32.gmra.mxu0 %v843
  %v3060 = vpop.f32.mrf.mxu0
  %v3061 = vadd.f32 %v3041, %v3060
  %3062 = vdwg.mxu0
  %3063 = vmatpush.msra.mxu0 %v985
  %3064 = vmatpush.msra.mxu0 %v976
  %3065 = vmatpush.msra.mxu0 %v967
  %3066 = vmatpush.msra.mxu0 %v958
  %3067 = vmatpush.msra.mxu0 %v949
  %3068 = vmatpush.msra.mxu0 %v940
  %3069 = vmatpush.msra.mxu0 %v931
  %3070 = vmatpush.msra.mxu0 %v922
  %3071 = vmatpush.msra.mxu0 %v913
  %3072 = vmatpush.msra.mxu0 %v904
  %3073 = vmatpush.msra.mxu0 %v895
  %3074 = vmatpush.msra.mxu0 %v886
  %3075 = vmatpush.msra.mxu0 %v877
  %3076 = vmatpush.msra.mxu0 %v868
  %3077 = vmatpush.msra.mxu0 %v859
  %3078 = vmatpush.msra.mxu0 %v850
  %3079 = vmatmul.f32.gmra.mxu0 %v805
  %v3080 = vpop.f32.mrf.mxu0
  %v3081 = vadd.f32 %v2150, %v3080
  %3082 = vdwg.mxu0
  %3083 = vmatpush.msra.mxu0 %v1129
  %3084 = vmatpush.msra.mxu0 %v1120
  %3085 = vmatpush.msra.mxu0 %v1111
  %3086 = vmatpush.msra.mxu0 %v1102
  %3087 = vmatpush.msra.mxu0 %v1093
  %3088 = vmatpush.msra.mxu0 %v1084
  %3089 = vmatpush.msra.mxu0 %v1075
  %3090 = vmatpush.msra.mxu0 %v1066
  %3091 = vmatpush.msra.mxu0 %v1057
  %3092 = vmatpush.msra.mxu0 %v1048
  %3093 = vmatpush.msra.mxu0 %v1039
  %3094 = vmatpush.msra.mxu0 %v1030
  %3095 = vmatpush.msra.mxu0 %v1021
  %3096 = vmatpush.msra.mxu0 %v1012
  %3097 = vmatpush.msra.mxu0 %v1003
  %3098 = vmatpush.msra.mxu0 %v994
  %3099 = vmatmul.f32.gmra.mxu0 %v809
  %v3100 = vpop.f32.mrf.mxu0
  %v3101 = vadd.f32 %v3081, %v3100
  %3102 = vdwg.mxu0
  %3103 = vmatpush.msra.mxu0 %v1273
  %3104 = vmatpush.msra.mxu0 %v1264
  %3105 = vmatpush.msra.mxu0 %v1255
  %3106 = vmatpush.msra.mxu0 %v1246
  %3107 = vmatpush.msra.mxu0 %v1237
  %3108 = vmatpush.msra.mxu0 %v1228
  %3109 = vmatpush.msra.mxu0 %v1219
  %3110 = vmatpush.msra.mxu0 %v1210
  %3111 = vmatpush.msra.mxu0 %v1201
  %3112 = vmatpush.msra.mxu0 %v1192
  %3113 = vmatpush.msra.mxu0 %v1183
  %3114 = vmatpush.msra.mxu0 %v1174
  %3115 = vmatpush.msra.mxu0 %v1165
  %3116 = vmatpush.msra.mxu0 %v1156
  %3117 = vmatpush.msra.mxu0 %v1147
  %3118 = vmatpush.msra.mxu0 %v1138
  %3119 = vmatmul.f32.gmra.mxu0 %v813
  %v3120 = vpop.f32.mrf.mxu0
  %v3121 = vadd.f32 %v3101, %v3120
  %3122 = vdwg.mxu0
  %3123 = vmatpush.msra.mxu0 %v1417
  %3124 = vmatpush.msra.mxu0 %v1408
  %3125 = vmatpush.msra.mxu0 %v1399
  %3126 = vmatpush.msra.mxu0 %v1390
  %3127 = vmatpush.msra.mxu0 %v1381
  %3128 = vmatpush.msra.mxu0 %v1372
  %3129 = vmatpush.msra.mxu0 %v1363
  %3130 = vmatpush.msra.mxu0 %v1354
  %3131 = vmatpush.msra.mxu0 %v1345
  %3132 = vmatpush.msra.mxu0 %v1336
  %3133 = vmatpush.msra.mxu0 %v1327
  %3134 = vmatpush.msra.mxu0 %v1318
  %3135 = vmatpush.msra.mxu0 %v1309
  %3136 = vmatpush.msra.mxu0 %v1300
  %3137 = vmatpush.msra.mxu0 %v1291
  %3138 = vmatpush.msra.mxu0 %v1282
  %3139 = vmatmul.f32.gmra.mxu0 %v819
  %v3140 = vpop.f32.mrf.mxu0
  %v3141 = vadd.f32 %v3121, %v3140
  %3142 = vdwg.mxu0
  %3143 = vmatpush.msra.mxu0 %v1561
  %3144 = vmatpush.msra.mxu0 %v1552
  %3145 = vmatpush.msra.mxu0 %v1543
  %3146 = vmatpush.msra.mxu0 %v1534
  %3147 = vmatpush.msra.mxu0 %v1525
  %3148 = vmatpush.msra.mxu0 %v1516
  %3149 = vmatpush.msra.mxu0 %v1507
  %3150 = vmatpush.msra.mxu0 %v1498
  %3151 = vmatpush.msra.mxu0 %v1489
  %3152 = vmatpush.msra.mxu0 %v1480
  %3153 = vmatpush.msra.mxu0 %v1471
  %3154 = vmatpush.msra.mxu0 %v1462
  %3155 = vmatpush.msra.mxu0 %v1453
  %3156 = vmatpush.msra.mxu0 %v1444
  %3157 = vmatpush.msra.mxu0 %v1435
  %3158 = vmatpush.msra.mxu0 %v1426
  %3159 = vmatmul.f32.gmra.mxu0 %v824
  %v3160 = vpop.f32.mrf.mxu0
  %v3161 = vadd.f32 %v3141, %v3160
  %3162 = vdwg.mxu0
  %3163 = vmatpush.msra.mxu0 %v1705
  %3164 = vmatpush.msra.mxu0 %v1696
  %3165 = vmatpush.msra.mxu0 %v1687
  %3166 = vmatpush.msra.mxu0 %v1678
  %3167 = vmatpush.msra.mxu0 %v1669
  %3168 = vmatpush.msra.mxu0 %v1660
  %3169 = vmatpush.msra.mxu0 %v1651
  %3170 = vmatpush.msra.mxu0 %v1642
  %3171 = vmatpush.msra.mxu0 %v1633
  %3172 = vmatpush.msra.mxu0 %v1624
  %3173 = vmatpush.msra.mxu0 %v1615
  %3174 = vmatpush.msra.mxu0 %v1606
  %3175 = vmatpush.msra.mxu0 %v1597
  %3176 = vmatpush.msra.mxu0 %v1588
  %3177 = vmatpush.msra.mxu0 %v1579
  %3178 = vmatpush.msra.mxu0 %v1570
  %3179 = vmatmul.f32.gmra.mxu0 %v828
  %v3180 = vpop.f32.mrf.mxu0
  %v3181 = vadd.f32 %v3161, %v3180
  %3182 = vdwg.mxu0
  %3183 = vmatpush.msra.mxu0 %v1849
  %3184 = vmatpush.msra.mxu0 %v1840
  %3185 = vmatpush.msra.mxu0 %v1831
  %3186 = vmatpush.msra.mxu0 %v1822
  %3187 = vmatpush.msra.mxu0 %v1813
  %3188 = vmatpush.msra.mxu0 %v1804
  %3189 = vmatpush.msra.mxu0 %v1795
  %3190 = vmatpush.msra.mxu0 %v1786
  %3191 = vmatpush.msra.mxu0 %v1777
  %3192 = vmatpush.msra.mxu0 %v1768
  %3193 = vmatpush.msra.mxu0 %v1759
  %3194 = vmatpush.msra.mxu0 %v1750
  %3195 = vmatpush.msra.mxu0 %v1741
  %3196 = vmatpush.msra.mxu0 %v1732
  %3197 = vmatpush.msra.mxu0 %v1723
  %3198 = vmatpush.msra.mxu0 %v1714
  %3199 = vmatmul.f32.gmra.mxu0 %v834
  %v3200 = vpop.f32.mrf.mxu0
  %v3201 = vadd.f32 %v3181, %v3200
  %3202 = vdwg.mxu0
  %3203 = vmatpush.msra.mxu0 %v1993
  %3204 = vmatpush.msra.mxu0 %v1984
  %3205 = vmatpush.msra.mxu0 %v1975
  %3206 = vmatpush.msra.mxu0 %v1966
  %3207 = vmatpush.msra.mxu0 %v1957
  %3208 = vmatpush.msra.mxu0 %v1948
  %3209 = vmatpush.msra.mxu0 %v1939
  %3210 = vmatpush.msra.mxu0 %v1930
  %3211 = vmatpush.msra.mxu0 %v1921
  %3212 = vmatpush.msra.mxu0 %v1912
  %3213 = vmatpush.msra.mxu0 %v1903
  %3214 = vmatpush.msra.mxu0 %v1894
  %3215 = vmatpush.msra.mxu0 %v1885
  %3216 = vmatpush.msra.mxu0 %v1876
  %3217 = vmatpush.msra.mxu0 %v1867
  %3218 = vmatpush.msra.mxu0 %v1858
  %3219 = vmatmul.f32.gmra.mxu0 %v838
  %v3220 = vpop.f32.mrf.mxu0
  %v3221 = vadd.f32 %v3201, %v3220
  %3222 = vdwg.mxu0
  %3223 = vmatpush.msra.mxu0 %v2137
  %3224 = vmatpush.msra.mxu0 %v2128
  %3225 = vmatpush.msra.mxu0 %v2119
  %3226 = vmatpush.msra.mxu0 %v2110
  %3227 = vmatpush.msra.mxu0 %v2101
  %3228 = vmatpush.msra.mxu0 %v2092
  %3229 = vmatpush.msra.mxu0 %v2083
  %3230 = vmatpush.msra.mxu0 %v2074
  %3231 = vmatpush.msra.mxu0 %v2065
  %3232 = vmatpush.msra.mxu0 %v2056
  %3233 = vmatpush.msra.mxu0 %v2047
  %3234 = vmatpush.msra.mxu0 %v2038
  %3235 = vmatpush.msra.mxu0 %v2029
  %3236 = vmatpush.msra.mxu0 %v2020
  %3237 = vmatpush.msra.mxu0 %v2011
  %3238 = vmatpush.msra.mxu0 %v2002
  %3239 = vmatmul.f32.gmra.mxu0 %v843
  %v3240 = vpop.f32.mrf.mxu0
  %v3241 = vadd.f32 %v3221, %v3240
  %3242 = vdwg.mxu0
  %3243 = vmatpush.msra.mxu0 %v986
  %3244 = vmatpush.msra.mxu0 %v977
  %3245 = vmatpush.msra.mxu0 %v968
  %3246 = vmatpush.msra.mxu0 %v959
  %3247 = vmatpush.msra.mxu0 %v950
  %3248 = vmatpush.msra.mxu0 %v941
  %3249 = vmatpush.msra.mxu0 %v932
  %3250 = vmatpush.msra.mxu0 %v923
  %3251 = vmatpush.msra.mxu0 %v914
  %3252 = vmatpush.msra.mxu0 %v905
  %3253 = vmatpush.msra.mxu0 %v896
  %3254 = vmatpush.msra.mxu0 %v887
  %3255 = vmatpush.msra.mxu0 %v878
  %3256 = vmatpush.msra.mxu0 %v869
  %3257 = vmatpush.msra.mxu0 %v860
  %3258 = vmatpush.msra.mxu0 %v851
  %3259 = vmatmul.f32.gmra.mxu0 %v805
  %v3260 = vpop.f32.mrf.mxu0
  %v3261 = vadd.f32 %v2151, %v3260
  %3262 = vdwg.mxu0
  %3263 = vmatpush.msra.mxu0 %v1130
  %3264 = vmatpush.msra.mxu0 %v1121
  %3265 = vmatpush.msra.mxu0 %v1112
  %3266 = vmatpush.msra.mxu0 %v1103
  %3267 = vmatpush.msra.mxu0 %v1094
  %3268 = vmatpush.msra.mxu0 %v1085
  %3269 = vmatpush.msra.mxu0 %v1076
  %3270 = vmatpush.msra.mxu0 %v1067
  %3271 = vmatpush.msra.mxu0 %v1058
  %3272 = vmatpush.msra.mxu0 %v1049
  %3273 = vmatpush.msra.mxu0 %v1040
  %3274 = vmatpush.msra.mxu0 %v1031
  %3275 = vmatpush.msra.mxu0 %v1022
  %3276 = vmatpush.msra.mxu0 %v1013
  %3277 = vmatpush.msra.mxu0 %v1004
  %3278 = vmatpush.msra.mxu0 %v995
  %3279 = vmatmul.f32.gmra.mxu0 %v809
  %v3280 = vpop.f32.mrf.mxu0
  %v3281 = vadd.f32 %v3261, %v3280
  %3282 = vdwg.mxu0
  %3283 = vmatpush.msra.mxu0 %v1274
  %3284 = vmatpush.msra.mxu0 %v1265
  %3285 = vmatpush.msra.mxu0 %v1256
  %3286 = vmatpush.msra.mxu0 %v1247
  %3287 = vmatpush.msra.mxu0 %v1238
  %3288 = vmatpush.msra.mxu0 %v1229
  %3289 = vmatpush.msra.mxu0 %v1220
  %3290 = vmatpush.msra.mxu0 %v1211
  %3291 = vmatpush.msra.mxu0 %v1202
  %3292 = vmatpush.msra.mxu0 %v1193
  %3293 = vmatpush.msra.mxu0 %v1184
  %3294 = vmatpush.msra.mxu0 %v1175
  %3295 = vmatpush.msra.mxu0 %v1166
  %3296 = vmatpush.msra.mxu0 %v1157
  %3297 = vmatpush.msra.mxu0 %v1148
  %3298 = vmatpush.msra.mxu0 %v1139
  %3299 = vmatmul.f32.gmra.mxu0 %v813
  %v3300 = vpop.f32.mrf.mxu0
  %v3301 = vadd.f32 %v3281, %v3300
  %3302 = vdwg.mxu0
  %3303 = vmatpush.msra.mxu0 %v1418
  %3304 = vmatpush.msra.mxu0 %v1409
  %3305 = vmatpush.msra.mxu0 %v1400
  %3306 = vmatpush.msra.mxu0 %v1391
  %3307 = vmatpush.msra.mxu0 %v1382
  %3308 = vmatpush.msra.mxu0 %v1373
  %3309 = vmatpush.msra.mxu0 %v1364
  %3310 = vmatpush.msra.mxu0 %v1355
  %3311 = vmatpush.msra.mxu0 %v1346
  %3312 = vmatpush.msra.mxu0 %v1337
  %3313 = vmatpush.msra.mxu0 %v1328
  %3314 = vmatpush.msra.mxu0 %v1319
  %3315 = vmatpush.msra.mxu0 %v1310
  %3316 = vmatpush.msra.mxu0 %v1301
  %3317 = vmatpush.msra.mxu0 %v1292
  %3318 = vmatpush.msra.mxu0 %v1283
  %3319 = vmatmul.f32.gmra.mxu0 %v819
  %v3320 = vpop.f32.mrf.mxu0
  %v3321 = vadd.f32 %v3301, %v3320
  %3322 = vdwg.mxu0
  %3323 = vmatpush.msra.mxu0 %v1562
  %3324 = vmatpush.msra.mxu0 %v1553
  %3325 = vmatpush.msra.mxu0 %v1544
  %3326 = vmatpush.msra.mxu0 %v1535
  %3327 = vmatpush.msra.mxu0 %v1526
  %3328 = vmatpush.msra.mxu0 %v1517
  %3329 = vmatpush.msra.mxu0 %v1508
  %3330 = vmatpush.msra.mxu0 %v1499
  %3331 = vmatpush.msra.mxu0 %v1490
  %3332 = vmatpush.msra.mxu0 %v1481
  %3333 = vmatpush.msra.mxu0 %v1472
  %3334 = vmatpush.msra.mxu0 %v1463
  %3335 = vmatpush.msra.mxu0 %v1454
  %3336 = vmatpush.msra.mxu0 %v1445
  %3337 = vmatpush.msra.mxu0 %v1436
  %3338 = vmatpush.msra.mxu0 %v1427
  %3339 = vmatmul.f32.gmra.mxu0 %v824
  %v3340 = vpop.f32.mrf.mxu0
  %v3341 = vadd.f32 %v3321, %v3340
  %3342 = vdwg.mxu0
  %3343 = vmatpush.msra.mxu0 %v1706
  %3344 = vmatpush.msra.mxu0 %v1697
  %3345 = vmatpush.msra.mxu0 %v1688
  %3346 = vmatpush.msra.mxu0 %v1679
  %3347 = vmatpush.msra.mxu0 %v1670
  %3348 = vmatpush.msra.mxu0 %v1661
  %3349 = vmatpush.msra.mxu0 %v1652
  %3350 = vmatpush.msra.mxu0 %v1643
  %3351 = vmatpush.msra.mxu0 %v1634
  %3352 = vmatpush.msra.mxu0 %v1625
  %3353 = vmatpush.msra.mxu0 %v1616
  %3354 = vmatpush.msra.mxu0 %v1607
  %3355 = vmatpush.msra.mxu0 %v1598
  %3356 = vmatpush.msra.mxu0 %v1589
  %3357 = vmatpush.msra.mxu0 %v1580
  %3358 = vmatpush.msra.mxu0 %v1571
  %3359 = vmatmul.f32.gmra.mxu0 %v828
  %v3360 = vpop.f32.mrf.mxu0
  %v3361 = vadd.f32 %v3341, %v3360
  %3362 = vdwg.mxu0
  %3363 = vmatpush.msra.mxu0 %v1850
  %3364 = vmatpush.msra.mxu0 %v1841
  %3365 = vmatpush.msra.mxu0 %v1832
  %3366 = vmatpush.msra.mxu0 %v1823
  %3367 = vmatpush.msra.mxu0 %v1814
  %3368 = vmatpush.msra.mxu0 %v1805
  %3369 = vmatpush.msra.mxu0 %v1796
  %3370 = vmatpush.msra.mxu0 %v1787
  %3371 = vmatpush.msra.mxu0 %v1778
  %3372 = vmatpush.msra.mxu0 %v1769
  %3373 = vmatpush.msra.mxu0 %v1760
  %3374 = vmatpush.msra.mxu0 %v1751
  %3375 = vmatpush.msra.mxu0 %v1742
  %3376 = vmatpush.msra.mxu0 %v1733
  %3377 = vmatpush.msra.mxu0 %v1724
  %3378 = vmatpush.msra.mxu0 %v1715
  %3379 = vmatmul.f32.gmra.mxu0 %v834
  %v3380 = vpop.f32.mrf.mxu0
  %v3381 = vadd.f32 %v3361, %v3380
  %3382 = vdwg.mxu0
  %3383 = vmatpush.msra.mxu0 %v1994
  %3384 = vmatpush.msra.mxu0 %v1985
  %3385 = vmatpush.msra.mxu0 %v1976
  %3386 = vmatpush.msra.mxu0 %v1967
  %3387 = vmatpush.msra.mxu0 %v1958
  %3388 = vmatpush.msra.mxu0 %v1949
  %3389 = vmatpush.msra.mxu0 %v1940
  %3390 = vmatpush.msra.mxu0 %v1931
  %3391 = vmatpush.msra.mxu0 %v1922
  %3392 = vmatpush.msra.mxu0 %v1913
  %3393 = vmatpush.msra.mxu0 %v1904
  %3394 = vmatpush.msra.mxu0 %v1895
  %3395 = vmatpush.msra.mxu0 %v1886
  %3396 = vmatpush.msra.mxu0 %v1877
  %3397 = vmatpush.msra.mxu0 %v1868
  %3398 = vmatpush.msra.mxu0 %v1859
  %3399 = vmatmul.f32.gmra.mxu0 %v838
  %v3400 = vpop.f32.mrf.mxu0
  %v3401 = vadd.f32 %v3381, %v3400
  %3402 = vdwg.mxu0
  %3403 = vmatpush.msra.mxu0 %v2138
  %3404 = vmatpush.msra.mxu0 %v2129
  %3405 = vmatpush.msra.mxu0 %v2120
  %3406 = vmatpush.msra.mxu0 %v2111
  %3407 = vmatpush.msra.mxu0 %v2102
  %3408 = vmatpush.msra.mxu0 %v2093
  %3409 = vmatpush.msra.mxu0 %v2084
  %3410 = vmatpush.msra.mxu0 %v2075
  %3411 = vmatpush.msra.mxu0 %v2066
  %3412 = vmatpush.msra.mxu0 %v2057
  %3413 = vmatpush.msra.mxu0 %v2048
  %3414 = vmatpush.msra.mxu0 %v2039
  %3415 = vmatpush.msra.mxu0 %v2030
  %3416 = vmatpush.msra.mxu0 %v2021
  %3417 = vmatpush.msra.mxu0 %v2012
  %3418 = vmatpush.msra.mxu0 %v2003
  %3419 = vmatmul.f32.gmra.mxu0 %v843
  %v3420 = vpop.f32.mrf.mxu0
  %v3421 = vadd.f32 %v3401, %v3420
  %3422 = vdwg.mxu0
  %3423 = vmatpush.msra.mxu0 %v987
  %3424 = vmatpush.msra.mxu0 %v978
  %3425 = vmatpush.msra.mxu0 %v969
  %3426 = vmatpush.msra.mxu0 %v960
  %3427 = vmatpush.msra.mxu0 %v951
  %3428 = vmatpush.msra.mxu0 %v942
  %3429 = vmatpush.msra.mxu0 %v933
  %3430 = vmatpush.msra.mxu0 %v924
  %3431 = vmatpush.msra.mxu0 %v915
  %3432 = vmatpush.msra.mxu0 %v906
  %3433 = vmatpush.msra.mxu0 %v897
  %3434 = vmatpush.msra.mxu0 %v888
  %3435 = vmatpush.msra.mxu0 %v879
  %3436 = vmatpush.msra.mxu0 %v870
  %3437 = vmatpush.msra.mxu0 %v861
  %3438 = vmatpush.msra.mxu0 %v852
  %3439 = vmatmul.f32.gmra.mxu0 %v805
  %v3440 = vpop.f32.mrf.mxu0
  %v3441 = vadd.f32 %v2152, %v3440
  %3442 = vdwg.mxu0
  %3443 = vmatpush.msra.mxu0 %v1131
  %3444 = vmatpush.msra.mxu0 %v1122
  %3445 = vmatpush.msra.mxu0 %v1113
  %3446 = vmatpush.msra.mxu0 %v1104
  %3447 = vmatpush.msra.mxu0 %v1095
  %3448 = vmatpush.msra.mxu0 %v1086
  %3449 = vmatpush.msra.mxu0 %v1077
  %3450 = vmatpush.msra.mxu0 %v1068
  %3451 = vmatpush.msra.mxu0 %v1059
  %3452 = vmatpush.msra.mxu0 %v1050
  %3453 = vmatpush.msra.mxu0 %v1041
  %3454 = vmatpush.msra.mxu0 %v1032
  %3455 = vmatpush.msra.mxu0 %v1023
  %3456 = vmatpush.msra.mxu0 %v1014
  %3457 = vmatpush.msra.mxu0 %v1005
  %3458 = vmatpush.msra.mxu0 %v996
  %3459 = vmatmul.f32.gmra.mxu0 %v809
  %v3460 = vpop.f32.mrf.mxu0
  %v3461 = vadd.f32 %v3441, %v3460
  %3462 = vdwg.mxu0
  %3463 = vmatpush.msra.mxu0 %v1275
  %3464 = vmatpush.msra.mxu0 %v1266
  %3465 = vmatpush.msra.mxu0 %v1257
  %3466 = vmatpush.msra.mxu0 %v1248
  %3467 = vmatpush.msra.mxu0 %v1239
  %3468 = vmatpush.msra.mxu0 %v1230
  %3469 = vmatpush.msra.mxu0 %v1221
  %3470 = vmatpush.msra.mxu0 %v1212
  %3471 = vmatpush.msra.mxu0 %v1203
  %3472 = vmatpush.msra.mxu0 %v1194
  %3473 = vmatpush.msra.mxu0 %v1185
  %3474 = vmatpush.msra.mxu0 %v1176
  %3475 = vmatpush.msra.mxu0 %v1167
  %3476 = vmatpush.msra.mxu0 %v1158
  %3477 = vmatpush.msra.mxu0 %v1149
  %3478 = vmatpush.msra.mxu0 %v1140
  %3479 = vmatmul.f32.gmra.mxu0 %v813
  %v3480 = vpop.f32.mrf.mxu0
  %v3481 = vadd.f32 %v3461, %v3480
  %3482 = vdwg.mxu0
  %3483 = vmatpush.msra.mxu0 %v1419
  %3484 = vmatpush.msra.mxu0 %v1410
  %3485 = vmatpush.msra.mxu0 %v1401
  %3486 = vmatpush.msra.mxu0 %v1392
  %3487 = vmatpush.msra.mxu0 %v1383
  %3488 = vmatpush.msra.mxu0 %v1374
  %3489 = vmatpush.msra.mxu0 %v1365
  %3490 = vmatpush.msra.mxu0 %v1356
  %3491 = vmatpush.msra.mxu0 %v1347
  %3492 = vmatpush.msra.mxu0 %v1338
  %3493 = vmatpush.msra.mxu0 %v1329
  %3494 = vmatpush.msra.mxu0 %v1320
  %3495 = vmatpush.msra.mxu0 %v1311
  %3496 = vmatpush.msra.mxu0 %v1302
  %3497 = vmatpush.msra.mxu0 %v1293
  %3498 = vmatpush.msra.mxu0 %v1284
  %3499 = vmatmul.f32.gmra.mxu0 %v819
  %v3500 = vpop.f32.mrf.mxu0
  %v3501 = vadd.f32 %v3481, %v3500
  %3502 = vdwg.mxu0
  %3503 = vmatpush.msra.mxu0 %v1563
  %3504 = vmatpush.msra.mxu0 %v1554
  %3505 = vmatpush.msra.mxu0 %v1545
  %3506 = vmatpush.msra.mxu0 %v1536
  %3507 = vmatpush.msra.mxu0 %v1527
  %3508 = vmatpush.msra.mxu0 %v1518
  %3509 = vmatpush.msra.mxu0 %v1509
  %3510 = vmatpush.msra.mxu0 %v1500
  %3511 = vmatpush.msra.mxu0 %v1491
  %3512 = vmatpush.msra.mxu0 %v1482
  %3513 = vmatpush.msra.mxu0 %v1473
  %3514 = vmatpush.msra.mxu0 %v1464
  %3515 = vmatpush.msra.mxu0 %v1455
  %3516 = vmatpush.msra.mxu0 %v1446
  %3517 = vmatpush.msra.mxu0 %v1437
  %3518 = vmatpush.msra.mxu0 %v1428
  %3519 = vmatmul.f32.gmra.mxu0 %v824
  %v3520 = vpop.f32.mrf.mxu0
  %v3521 = vadd.f32 %v3501, %v3520
  %3522 = vdwg.mxu0
  %3523 = vmatpush.msra.mxu0 %v1707
  %3524 = vmatpush.msra.mxu0 %v1698
  %3525 = vmatpush.msra.mxu0 %v1689
  %3526 = vmatpush.msra.mxu0 %v1680
  %3527 = vmatpush.msra.mxu0 %v1671
  %3528 = vmatpush.msra.mxu0 %v1662
  %3529 = vmatpush.msra.mxu0 %v1653
  %3530 = vmatpush.msra.mxu0 %v1644
  %3531 = vmatpush.msra.mxu0 %v1635
  %3532 = vmatpush.msra.mxu0 %v1626
  %3533 = vmatpush.msra.mxu0 %v1617
  %3534 = vmatpush.msra.mxu0 %v1608
  %3535 = vmatpush.msra.mxu0 %v1599
  %3536 = vmatpush.msra.mxu0 %v1590
  %3537 = vmatpush.msra.mxu0 %v1581
  %3538 = vmatpush.msra.mxu0 %v1572
  %3539 = vmatmul.f32.gmra.mxu0 %v828
  %v3540 = vpop.f32.mrf.mxu0
  %v3541 = vadd.f32 %v3521, %v3540
  %3542 = vdwg.mxu0
  %3543 = vmatpush.msra.mxu0 %v1851
  %3544 = vmatpush.msra.mxu0 %v1842
  %3545 = vmatpush.msra.mxu0 %v1833
  %3546 = vmatpush.msra.mxu0 %v1824
  %3547 = vmatpush.msra.mxu0 %v1815
  %3548 = vmatpush.msra.mxu0 %v1806
  %3549 = vmatpush.msra.mxu0 %v1797
  %3550 = vmatpush.msra.mxu0 %v1788
  %3551 = vmatpush.msra.mxu0 %v1779
  %3552 = vmatpush.msra.mxu0 %v1770
  %3553 = vmatpush.msra.mxu0 %v1761
  %3554 = vmatpush.msra.mxu0 %v1752
  %3555 = vmatpush.msra.mxu0 %v1743
  %3556 = vmatpush.msra.mxu0 %v1734
  %3557 = vmatpush.msra.mxu0 %v1725
  %3558 = vmatpush.msra.mxu0 %v1716
  %3559 = vmatmul.f32.gmra.mxu0 %v834
  %v3560 = vpop.f32.mrf.mxu0
  %v3561 = vadd.f32 %v3541, %v3560
  %3562 = vdwg.mxu0
  %3563 = vmatpush.msra.mxu0 %v1995
  %3564 = vmatpush.msra.mxu0 %v1986
  %3565 = vmatpush.msra.mxu0 %v1977
  %3566 = vmatpush.msra.mxu0 %v1968
  %3567 = vmatpush.msra.mxu0 %v1959
  %3568 = vmatpush.msra.mxu0 %v1950
  %3569 = vmatpush.msra.mxu0 %v1941
  %3570 = vmatpush.msra.mxu0 %v1932
  %3571 = vmatpush.msra.mxu0 %v1923
  %3572 = vmatpush.msra.mxu0 %v1914
  %3573 = vmatpush.msra.mxu0 %v1905
  %3574 = vmatpush.msra.mxu0 %v1896
  %3575 = vmatpush.msra.mxu0 %v1887
  %3576 = vmatpush.msra.mxu0 %v1878
  %3577 = vmatpush.msra.mxu0 %v1869
  %3578 = vmatpush.msra.mxu0 %v1860
  %3579 = vmatmul.f32.gmra.mxu0 %v838
  %v3580 = vpop.f32.mrf.mxu0
  %v3581 = vadd.f32 %v3561, %v3580
  %3582 = vdwg.mxu0
  %3583 = vmatpush.msra.mxu0 %v2139
  %3584 = vmatpush.msra.mxu0 %v2130
  %3585 = vmatpush.msra.mxu0 %v2121
  %3586 = vmatpush.msra.mxu0 %v2112
  %3587 = vmatpush.msra.mxu0 %v2103
  %3588 = vmatpush.msra.mxu0 %v2094
  %3589 = vmatpush.msra.mxu0 %v2085
  %3590 = vmatpush.msra.mxu0 %v2076
  %3591 = vmatpush.msra.mxu0 %v2067
  %3592 = vmatpush.msra.mxu0 %v2058
  %3593 = vmatpush.msra.mxu0 %v2049
  %3594 = vmatpush.msra.mxu0 %v2040
  %3595 = vmatpush.msra.mxu0 %v2031
  %3596 = vmatpush.msra.mxu0 %v2022
  %3597 = vmatpush.msra.mxu0 %v2013
  %3598 = vmatpush.msra.mxu0 %v2004
  %3599 = vmatmul.f32.gmra.mxu0 %v843
  %v3600 = vpop.f32.mrf.mxu0
  %v3601 = vadd.f32 %v3581, %v3600
  %3602 = vdwg.mxu0
  %3603 = vmatpush.msra.mxu0 %v988
  %3604 = vmatpush.msra.mxu0 %v979
  %3605 = vmatpush.msra.mxu0 %v970
  %3606 = vmatpush.msra.mxu0 %v961
  %3607 = vmatpush.msra.mxu0 %v952
  %3608 = vmatpush.msra.mxu0 %v943
  %3609 = vmatpush.msra.mxu0 %v934
  %3610 = vmatpush.msra.mxu0 %v925
  %3611 = vmatpush.msra.mxu0 %v916
  %3612 = vmatpush.msra.mxu0 %v907
  %3613 = vmatpush.msra.mxu0 %v898
  %3614 = vmatpush.msra.mxu0 %v889
  %3615 = vmatpush.msra.mxu0 %v880
  %3616 = vmatpush.msra.mxu0 %v871
  %3617 = vmatpush.msra.mxu0 %v862
  %3618 = vmatpush.msra.mxu0 %v853
  %3619 = vmatmul.f32.gmra.mxu0 %v805
  %v3620 = vpop.f32.mrf.mxu0
  %v3621 = vadd.f32 %v2153, %v3620
  %3622 = vdwg.mxu0
  %3623 = vmatpush.msra.mxu0 %v1132
  %3624 = vmatpush.msra.mxu0 %v1123
  %3625 = vmatpush.msra.mxu0 %v1114
  %3626 = vmatpush.msra.mxu0 %v1105
  %3627 = vmatpush.msra.mxu0 %v1096
  %3628 = vmatpush.msra.mxu0 %v1087
  %3629 = vmatpush.msra.mxu0 %v1078
  %3630 = vmatpush.msra.mxu0 %v1069
  %3631 = vmatpush.msra.mxu0 %v1060
  %3632 = vmatpush.msra.mxu0 %v1051
  %3633 = vmatpush.msra.mxu0 %v1042
  %3634 = vmatpush.msra.mxu0 %v1033
  %3635 = vmatpush.msra.mxu0 %v1024
  %3636 = vmatpush.msra.mxu0 %v1015
  %3637 = vmatpush.msra.mxu0 %v1006
  %3638 = vmatpush.msra.mxu0 %v997
  %3639 = vmatmul.f32.gmra.mxu0 %v809
  %v3640 = vpop.f32.mrf.mxu0
  %v3641 = vadd.f32 %v3621, %v3640
  %3642 = vdwg.mxu0
  %3643 = vmatpush.msra.mxu0 %v1276
  %3644 = vmatpush.msra.mxu0 %v1267
  %3645 = vmatpush.msra.mxu0 %v1258
  %3646 = vmatpush.msra.mxu0 %v1249
  %3647 = vmatpush.msra.mxu0 %v1240
  %3648 = vmatpush.msra.mxu0 %v1231
  %3649 = vmatpush.msra.mxu0 %v1222
  %3650 = vmatpush.msra.mxu0 %v1213
  %3651 = vmatpush.msra.mxu0 %v1204
  %3652 = vmatpush.msra.mxu0 %v1195
  %3653 = vmatpush.msra.mxu0 %v1186
  %3654 = vmatpush.msra.mxu0 %v1177
  %3655 = vmatpush.msra.mxu0 %v1168
  %3656 = vmatpush.msra.mxu0 %v1159
  %3657 = vmatpush.msra.mxu0 %v1150
  %3658 = vmatpush.msra.mxu0 %v1141
  %3659 = vmatmul.f32.gmra.mxu0 %v813
  %v3660 = vpop.f32.mrf.mxu0
  %v3661 = vadd.f32 %v3641, %v3660
  %3662 = vdwg.mxu0
  %3663 = vmatpush.msra.mxu0 %v1420
  %3664 = vmatpush.msra.mxu0 %v1411
  %3665 = vmatpush.msra.mxu0 %v1402
  %3666 = vmatpush.msra.mxu0 %v1393
  %3667 = vmatpush.msra.mxu0 %v1384
  %3668 = vmatpush.msra.mxu0 %v1375
  %3669 = vmatpush.msra.mxu0 %v1366
  %3670 = vmatpush.msra.mxu0 %v1357
  %3671 = vmatpush.msra.mxu0 %v1348
  %3672 = vmatpush.msra.mxu0 %v1339
  %3673 = vmatpush.msra.mxu0 %v1330
  %3674 = vmatpush.msra.mxu0 %v1321
  %3675 = vmatpush.msra.mxu0 %v1312
  %3676 = vmatpush.msra.mxu0 %v1303
  %3677 = vmatpush.msra.mxu0 %v1294
  %3678 = vmatpush.msra.mxu0 %v1285
  %3679 = vmatmul.f32.gmra.mxu0 %v819
  %v3680 = vpop.f32.mrf.mxu0
  %v3681 = vadd.f32 %v3661, %v3680
  %3682 = vdwg.mxu0
  %3683 = vmatpush.msra.mxu0 %v1564
  %3684 = vmatpush.msra.mxu0 %v1555
  %3685 = vmatpush.msra.mxu0 %v1546
  %3686 = vmatpush.msra.mxu0 %v1537
  %3687 = vmatpush.msra.mxu0 %v1528
  %3688 = vmatpush.msra.mxu0 %v1519
  %3689 = vmatpush.msra.mxu0 %v1510
  %3690 = vmatpush.msra.mxu0 %v1501
  %3691 = vmatpush.msra.mxu0 %v1492
  %3692 = vmatpush.msra.mxu0 %v1483
  %3693 = vmatpush.msra.mxu0 %v1474
  %3694 = vmatpush.msra.mxu0 %v1465
  %3695 = vmatpush.msra.mxu0 %v1456
  %3696 = vmatpush.msra.mxu0 %v1447
  %3697 = vmatpush.msra.mxu0 %v1438
  %3698 = vmatpush.msra.mxu0 %v1429
  %3699 = vmatmul.f32.gmra.mxu0 %v824
  %v3700 = vpop.f32.mrf.mxu0
  %v3701 = vadd.f32 %v3681, %v3700
  %3702 = vdwg.mxu0
  %3703 = vmatpush.msra.mxu0 %v1708
  %3704 = vmatpush.msra.mxu0 %v1699
  %3705 = vmatpush.msra.mxu0 %v1690
  %3706 = vmatpush.msra.mxu0 %v1681
  %3707 = vmatpush.msra.mxu0 %v1672
  %3708 = vmatpush.msra.mxu0 %v1663
  %3709 = vmatpush.msra.mxu0 %v1654
  %3710 = vmatpush.msra.mxu0 %v1645
  %3711 = vmatpush.msra.mxu0 %v1636
  %3712 = vmatpush.msra.mxu0 %v1627
  %3713 = vmatpush.msra.mxu0 %v1618
  %3714 = vmatpush.msra.mxu0 %v1609
  %3715 = vmatpush.msra.mxu0 %v1600
  %3716 = vmatpush.msra.mxu0 %v1591
  %3717 = vmatpush.msra.mxu0 %v1582
  %3718 = vmatpush.msra.mxu0 %v1573
  %3719 = vmatmul.f32.gmra.mxu0 %v828
  %v3720 = vpop.f32.mrf.mxu0
  %v3721 = vadd.f32 %v3701, %v3720
  %3722 = vdwg.mxu0
  %3723 = vmatpush.msra.mxu0 %v1852
  %3724 = vmatpush.msra.mxu0 %v1843
  %3725 = vmatpush.msra.mxu0 %v1834
  %3726 = vmatpush.msra.mxu0 %v1825
  %3727 = vmatpush.msra.mxu0 %v1816
  %3728 = vmatpush.msra.mxu0 %v1807
  %3729 = vmatpush.msra.mxu0 %v1798
  %3730 = vmatpush.msra.mxu0 %v1789
  %3731 = vmatpush.msra.mxu0 %v1780
  %3732 = vmatpush.msra.mxu0 %v1771
  %3733 = vmatpush.msra.mxu0 %v1762
  %3734 = vmatpush.msra.mxu0 %v1753
  %3735 = vmatpush.msra.mxu0 %v1744
  %3736 = vmatpush.msra.mxu0 %v1735
  %3737 = vmatpush.msra.mxu0 %v1726
  %3738 = vmatpush.msra.mxu0 %v1717
  %3739 = vmatmul.f32.gmra.mxu0 %v834
  %v3740 = vpop.f32.mrf.mxu0
  %v3741 = vadd.f32 %v3721, %v3740
  %3742 = vdwg.mxu0
  %3743 = vmatpush.msra.mxu0 %v1996
  %3744 = vmatpush.msra.mxu0 %v1987
  %3745 = vmatpush.msra.mxu0 %v1978
  %3746 = vmatpush.msra.mxu0 %v1969
  %3747 = vmatpush.msra.mxu0 %v1960
  %3748 = vmatpush.msra.mxu0 %v1951
  %3749 = vmatpush.msra.mxu0 %v1942
  %3750 = vmatpush.msra.mxu0 %v1933
  %3751 = vmatpush.msra.mxu0 %v1924
  %3752 = vmatpush.msra.mxu0 %v1915
  %3753 = vmatpush.msra.mxu0 %v1906
  %3754 = vmatpush.msra.mxu0 %v1897
  %3755 = vmatpush.msra.mxu0 %v1888
  %3756 = vmatpush.msra.mxu0 %v1879
  %3757 = vmatpush.msra.mxu0 %v1870
  %3758 = vmatpush.msra.mxu0 %v1861
  %3759 = vmatmul.f32.gmra.mxu0 %v838
  %v3760 = vpop.f32.mrf.mxu0
  %v3761 = vadd.f32 %v3741, %v3760
  %3762 = vdwg.mxu0
  %3763 = vmatpush.msra.mxu0 %v2140
  %3764 = vmatpush.msra.mxu0 %v2131
  %3765 = vmatpush.msra.mxu0 %v2122
  %3766 = vmatpush.msra.mxu0 %v2113
  %3767 = vmatpush.msra.mxu0 %v2104
  %3768 = vmatpush.msra.mxu0 %v2095
  %3769 = vmatpush.msra.mxu0 %v2086
  %3770 = vmatpush.msra.mxu0 %v2077
  %3771 = vmatpush.msra.mxu0 %v2068
  %3772 = vmatpush.msra.mxu0 %v2059
  %3773 = vmatpush.msra.mxu0 %v2050
  %3774 = vmatpush.msra.mxu0 %v2041
  %3775 = vmatpush.msra.mxu0 %v2032
  %3776 = vmatpush.msra.mxu0 %v2023
  %3777 = vmatpush.msra.mxu0 %v2014
  %3778 = vmatpush.msra.mxu0 %v2005
  %3779 = vmatmul.f32.gmra.mxu0 %v843
  %v3780 = vpop.f32.mrf.mxu0
  %v3781 = vadd.f32 %v3761, %v3780
  %3782 = vdwg.mxu0
  %v3783 = vmax.f32 %v2341, 0.0
  %v3784 = vmax.f32 %v2521, 0.0
  %v3785 = vmax.f32 %v2701, 0.0
  %v3786 = vmax.f32 %v2881, 0.0
  %v3787 = vmax.f32 %v3061, 0.0
  %v3788 = vmax.f32 %v3241, 0.0
  %v3789 = vmax.f32 %v3421, 0.0
  %v3790 = vmax.f32 %v3601, 0.0
  %v3791 = vmax.f32 %v3781, 0.0
  %v3800 = vrot.slane %v3784, 6
  %v3801 = vrot.slane %v3785, 4
  %v3802 = vrot.slane %v3786, 2
  %v3803 = vrot.slane %v3788, 6
  %v3804 = vrot.slane %v3789, 4
  %v3805 = vrot.slane %v3790, 2
  %v3806 = vsel %vm762, %v3783, %v3800
  %vm3807 = vcmask 1045508
  %v3808 = vsel %vm3807, %v3801, %v3802
  %vm3809 = vcmask 1043456
  %v3810 = vsel %vm3809, %v3806, %v3808
  %v3811 = vsel %vm762, %v3787, %v3803
  %v3812 = vsel %vm3807, %v3804, %v3805
  %v3813 = vsel %vm3809, %v3811, %v3812
  %3816 = vst [vmem:[%s5] sm:$0xff] %v3810
  %3817 = vst [vmem:[%s5 + $0x8] sm:$0xff] %v3813
  %3818 = vst [vmem:[%s5 + $0x10] sm:$0x3] %v3791
  // Predicated region
  $region22: #{alexnet1_forward.1} parent=0 // pred_check
    _
  $region23: #{alexnet1_forward.1} parent=0 // pred_check_branch
    %3820 = sbr.rel (0) target = $region25
  $region24: #{alexnet1_forward.1} parent=0 // pred_region
    _
  $region25: #{alexnet1_forward.1} parent=0 // pred_fallthru
    _
  // Predicated region
  $region26: #{alexnet1_forward.1} parent=0 // pred_check
    _
  $region27: #{alexnet1_forward.1} parent=0 // pred_check_branch
    %3822 = sbr.rel (0) target = $region29
  $region28: #{alexnet1_forward.1} parent=0 // pred_region
    _
  $region29: #{alexnet1_forward.1} parent=0 // pred_fallthru
    _

</llo_original>
